<compile_context>
chip_gen: v6e
topology: v6e:2x2x1
jax: 0.10.0
libtpu: 0.0.40
codegen_flags: <defaults>
</compile_context>

<pallas_src>
import math

import jax
import jax.numpy as jnp
from jax.experimental import pallas as pl
from jax.experimental.pallas import tpu as pltpu

INPUT_DIM = 2
H1, H2, H3 = 1024, 256, 32
NUM_CLASSES = 2

K_PAD = 8                    # layer-1 contraction dim padded 2 -> 8 (inert zeros)
H3_PAD = 128                 # lane-dense padding of the 32-wide hidden dim
OUT_PAD = 128                # lane-dense padding of the 2-wide output dim
LANE_DENSE_MAX_ROWS = 4096   # above this, emit a narrow (B, 2) output instead


def mlp_kernel(x_ref,
               w1_ref, b1_ref,
               w2_ref, b2_ref,
               w3_ref, b3_ref,
               w4_ref, b4_ref,
               o_ref):
    f32, bf16 = jnp.float32, jnp.bfloat16

    # Layer 1: (tb,8) @ (8,1024) bf16 on the MXU (K zero-padded 2->8).
    h1 = jnp.dot(x_ref[...], w1_ref[...], preferred_element_type=f32) + b1_ref[...]
    h1 = jnp.maximum(h1, 0.0)

    # Layer 2: (tb,1024) @ (1024,256) bf16 operands, f32 accumulation.
    h2 = jnp.dot(h1.astype(bf16), w2_ref[...], preferred_element_type=f32) + b2_ref[...]
    h2 = jnp.maximum(h2, 0.0)

    # Layer 3: (tb,256) @ (256,128-padded).
    h3 = jnp.dot(h2.astype(bf16), w3_ref[...], preferred_element_type=f32) + b3_ref[...]
    h3 = jnp.maximum(h3, 0.0)

    # Layer 4: (tb,128) @ (128,128-padded) -> logits (only first 2 lanes real).
    logits = jnp.dot(h3.astype(bf16), w4_ref[...], preferred_element_type=f32) + b4_ref[...]

    # Sigmoid via a single EUP op: sigmoid(z) = 0.5*tanh(z/2) + 0.5.
    probs = 0.5 * jnp.tanh(0.5 * logits) + 0.5

    out_w = o_ref.shape[-1]          # 128 (lane-dense) or 2 (narrow) - static
    o_ref[...] = probs[:, :out_w].astype(o_ref.dtype)


def _round_up(n, m):
    return ((n + m - 1) // m) * m


def _vmem_limit_bytes(tb, out_w):
    """Right-sized VMEM reservation computed from the real buffer sizes."""
    w_bytes = 2 * (K_PAD * H1 + H1 * H2 + H2 * H3_PAD + H3_PAD * OUT_PAD)  # bf16 weights
    b_bytes = 4 * (H1 + H2 + H3_PAD + OUT_PAD)                             # f32 biases
    io_bytes = 2 * tb * K_PAD + 4 * tb * out_w                             # x tile + out tile
    pipeline = 2 * (w_bytes + b_bytes + io_bytes)                          # double-buffered
    temps = 6 * tb * (H1 + H2 + H3_PAD + OUT_PAD)                          # f32 + bf16 activation temps
    return int(max(16 * 1024 * 1024, 2 * (pipeline + temps)))              # 2x headroom


def mlp_forward(x, params, *, tb=512):
    """x: (B, 2) float32 -> (B, 2) float32 sigmoid probabilities."""
    (w1, b1), (w2, b2), (w3, b3), (w4, b4) = params
    B = x.shape[0]

    # Parameter prep: bf16 MXU operands, zero-padded narrow dims (inert padding).
    w1p = jnp.pad(w1, ((0, K_PAD - INPUT_DIM), (0, 0))).astype(jnp.bfloat16)
    w2b = w2.astype(jnp.bfloat16)
    w3p = jnp.pad(w3, ((0, 0), (0, H3_PAD - H3))).astype(jnp.bfloat16)
    w4p = jnp.pad(w4, ((0, H3_PAD - H3), (0, OUT_PAD - NUM_CLASSES))).astype(jnp.bfloat16)
    b3p = jnp.pad(b3, ((0, 0), (0, H3_PAD - H3)))
    b4p = jnp.pad(b4, ((0, 0), (0, OUT_PAD - NUM_CLASSES)))

    # Batch-tile heuristic: big tiles to amortize per-step overhead, but
    # TC-aware so v7x's 2 TensorCores both get at least one "parallel" step.
    tb = max(8, min(tb, _round_up(B, 8)))
    if B <= 2 * tb:
        tb = max(8, _round_up(pl.cdiv(B, 2), 8))
    num_tiles = pl.cdiv(B, tb)
    b_pad = num_tiles * tb

    # Input prep: pad batch rows + K (2->8) with zeros, cast to bf16.
    xk = jnp.pad(x, ((0, b_pad - B), (0, K_PAD - INPUT_DIM))).astype(jnp.bfloat16)

    # Small batches: lane-dense 128-wide output (unmasked stores).
    # Large batches: narrow (b_pad, 2) output to avoid 64x HBM write amp.
    out_w = OUT_PAD if b_pad <= LANE_DENSE_MAX_ROWS else NUM_CLASSES

    resident = lambda a: pl.BlockSpec(a.shape, lambda i: (0, 0))  # VMEM-resident weights

    out = pl.pallas_call(
        mlp_kernel,
        out_shape=jax.ShapeDtypeStruct((b_pad, out_w), jnp.float32),
        grid_spec=pltpu.PrefetchScalarGridSpec(
            num_scalar_prefetch=0,
            grid=(num_tiles,),
            in_specs=[
                pl.BlockSpec((tb, K_PAD), lambda i: (i, 0)),   # x tile
                resident(w1p), resident(b1),
                resident(w2b), resident(b2),
                resident(w3p), resident(b3p),
                resident(w4p), resident(b4p),
            ],
            out_specs=pl.BlockSpec((tb, out_w), lambda i: (i, 0)),
        ),
        compiler_params=pltpu.CompilerParams(
            dimension_semantics=("parallel",),                 # shard batch tiles across TCs
            vmem_limit_bytes=_vmem_limit_bytes(tb, out_w),
        ),
    )(xk, w1p, b1, w2b, b2, w3p, b3p, w4p, b4p)

    if b_pad != B or out_w != NUM_CLASSES:
        out = out[:B, :NUM_CLASSES]
    return out


def init_linear(key, fan_in, fan_out):
    """Mimics torch.nn.Linear default init: U(-1/sqrt(fan_in), 1/sqrt(fan_in)).
    Weight returned as (in, out), bias as (1, out), both float32."""
    kw, kb = jax.random.split(key)
    bound = 1.0 / math.sqrt(fan_in)
    w = jax.random.uniform(kw, (fan_in, fan_out), jnp.float32, -bound, bound)
    b = jax.random.uniform(kb, (1, fan_out), jnp.float32, -bound, bound)
    return w, b


def init_params(key):
    k1, k2, k3, k4 = jax.random.split(key, 4)
    return (
        init_linear(k1, INPUT_DIM, H1),
        init_linear(k2, H1, H2),
        init_linear(k3, H2, H3),
        init_linear(k4, H3, NUM_CLASSES),
    )


def ref_forward(x, params):
    h = x
    for i, (w, b) in enumerate(params):
        h = h @ w + b
        if i < 3:
            h = jnp.maximum(h, 0.0)
    return jax.nn.sigmoid(h)


if __name__ == "__main__":
    key = jax.random.PRNGKey(0)
    kp, kx1, kx2 = jax.random.split(key, 3)

    params = init_params(kp)

    # Batch of 512 -> two parallel grid steps (tb heuristic picks 256).
    x = jax.random.normal(kx1, (512, INPUT_DIM), dtype=jnp.float32)
    y = jax.block_until_ready(mlp_forward(x, params))
    y_ref = ref_forward(x, params)
    assert y.shape == (512, NUM_CLASSES)
    # Tolerance loosened slightly vs pure-f32 since the MXU path is bf16.
    assert jnp.allclose(y, y_ref, atol=1e-2, rtol=0.0), "mismatch vs reference (batch=512)"

    # Ragged batch exercises pad-to-tile / slice-back and the TC-aware split.
    x2 = jax.random.normal(kx2, (120, INPUT_DIM), dtype=jnp.float32)
    y2 = jax.block_until_ready(mlp_forward(x2, params))
    y2_ref = ref_forward(x2, params)
    assert y2.shape == (120, NUM_CLASSES)
    assert jnp.allclose(y2, y2_ref, atol=1e-2, rtol=0.0), "mismatch vs reference (batch=120)"

    print("KERNEL_OK")
</pallas_src>

<mosaic_0001>
module attributes {stable_mosaic.version = 11 : i64} {
  func.func @mlp_kernel(%arg0: i32, %arg1: memref<256x8xbf16, #tpu.memory_space<vmem>>, %arg2: memref<8x1024xbf16, #tpu.memory_space<vmem>>, %arg3: memref<1x1024xf32, #tpu.memory_space<vmem>>, %arg4: memref<1024x256xbf16, #tpu.memory_space<vmem>>, %arg5: memref<1x256xf32, #tpu.memory_space<vmem>>, %arg6: memref<256x128xbf16, #tpu.memory_space<vmem>>, %arg7: memref<1x128xf32, #tpu.memory_space<vmem>>, %arg8: memref<128x128xbf16, #tpu.memory_space<vmem>>, %arg9: memref<1x128xf32, #tpu.memory_space<vmem>>, %arg10: memref<256x128xf32, #tpu.memory_space<vmem>>) attributes {dimension_semantics = [#tpu.dimension_semantics<parallel>], iteration_bounds = array<i64: 2>, scalar_prefetch = 0 : i64, scratch_operands = 0 : i64, tpu.core_type = #tpu.core_type<tc>, window_params = [{transform_indices = @transform_0, window_bounds = array<i64: 256, 8>}, {pipeline_mode = #tpu.pipeline_mode<synchronous>, transform_indices = @transform_1, window_bounds = array<i64: 8, 1024>}, {pipeline_mode = #tpu.pipeline_mode<synchronous>, transform_indices = @transform_2, window_bounds = array<i64: 1, 1024>}, {pipeline_mode = #tpu.pipeline_mode<synchronous>, transform_indices = @transform_3, window_bounds = array<i64: 1024, 256>}, {pipeline_mode = #tpu.pipeline_mode<synchronous>, transform_indices = @transform_4, window_bounds = array<i64: 1, 256>}, {pipeline_mode = #tpu.pipeline_mode<synchronous>, transform_indices = @transform_5, window_bounds = array<i64: 256, 128>}, {pipeline_mode = #tpu.pipeline_mode<synchronous>, transform_indices = @transform_6, window_bounds = array<i64: 1, 128>}, {pipeline_mode = #tpu.pipeline_mode<synchronous>, transform_indices = @transform_7, window_bounds = array<i64: 128, 128>}, {pipeline_mode = #tpu.pipeline_mode<synchronous>, transform_indices = @transform_8, window_bounds = array<i64: 1, 128>}, {transform_indices = @transform_9, window_bounds = array<i64: 256, 128>}]} {
    %c0 = arith.constant 0 : index
    %c0_0 = arith.constant 0 : index
    %0 = vector.load %arg1[%c0, %c0_0] : memref<256x8xbf16, #tpu.memory_space<vmem>>, vector<256x8xbf16>
    %c0_1 = arith.constant 0 : index
    %c0_2 = arith.constant 0 : index
    %1 = vector.load %arg2[%c0_1, %c0_2] : memref<8x1024xbf16, #tpu.memory_space<vmem>>, vector<8x1024xbf16>
    %cst = arith.constant dense<0.000000e+00> : vector<256x1024xf32>
    %2 = tpu.matmul %0, %1, %cst {dimension_numbers = #tpu.dot_dimension_numbers<[1], [0], [0], [1], [0, 0, 1, 1], [], []>} : vector<256x8xbf16>, vector<8x1024xbf16>, vector<256x1024xf32> -> vector<256x1024xf32>
    %c0_3 = arith.constant 0 : index
    %c0_4 = arith.constant 0 : index
    %3 = vector.load %arg3[%c0_3, %c0_4] : memref<1x1024xf32, #tpu.memory_space<vmem>>, vector<1x1024xf32>
    %4 = vector.broadcast %3 : vector<1x1024xf32> to vector<256x1024xf32>
    %5 = arith.addf %2, %4 : vector<256x1024xf32>
    %cst_5 = arith.constant 0.000000e+00 : f32
    %6 = vector.broadcast %cst_5 : f32 to vector<256x1024xf32>
    %7 = arith.maximumf %5, %6 : vector<256x1024xf32>
    %8 = arith.truncf %7 : vector<256x1024xf32> to vector<256x1024xbf16>
    %c0_6 = arith.constant 0 : index
    %c0_7 = arith.constant 0 : index
    %9 = vector.load %arg4[%c0_6, %c0_7] : memref<1024x256xbf16, #tpu.memory_space<vmem>>, vector<1024x256xbf16>
    %cst_8 = arith.constant dense<0.000000e+00> : vector<256x256xf32>
    %10 = tpu.matmul %8, %9, %cst_8 {dimension_numbers = #tpu.dot_dimension_numbers<[1], [0], [0], [1], [0, 0, 1, 1], [], []>} : vector<256x1024xbf16>, vector<1024x256xbf16>, vector<256x256xf32> -> vector<256x256xf32>
    %c0_9 = arith.constant 0 : index
    %c0_10 = arith.constant 0 : index
    %11 = vector.load %arg5[%c0_9, %c0_10] : memref<1x256xf32, #tpu.memory_space<vmem>>, vector<1x256xf32>
    %12 = vector.broadcast %11 : vector<1x256xf32> to vector<256x256xf32>
    %13 = arith.addf %10, %12 : vector<256x256xf32>
    %cst_11 = arith.constant 0.000000e+00 : f32
    %14 = vector.broadcast %cst_11 : f32 to vector<256x256xf32>
    %15 = arith.maximumf %13, %14 : vector<256x256xf32>
    %16 = arith.truncf %15 : vector<256x256xf32> to vector<256x256xbf16>
    %c0_12 = arith.constant 0 : index
    %c0_13 = arith.constant 0 : index
    %17 = vector.load %arg6[%c0_12, %c0_13] : memref<256x128xbf16, #tpu.memory_space<vmem>>, vector<256x128xbf16>
    %cst_14 = arith.constant dense<0.000000e+00> : vector<256x128xf32>
    %18 = tpu.matmul %16, %17, %cst_14 {dimension_numbers = #tpu.dot_dimension_numbers<[1], [0], [0], [1], [0, 0, 1, 1], [], []>} : vector<256x256xbf16>, vector<256x128xbf16>, vector<256x128xf32> -> vector<256x128xf32>
    %c0_15 = arith.constant 0 : index
    %c0_16 = arith.constant 0 : index
    %19 = vector.load %arg7[%c0_15, %c0_16] : memref<1x128xf32, #tpu.memory_space<vmem>>, vector<1x128xf32>
    %20 = vector.broadcast %19 : vector<1x128xf32> to vector<256x128xf32>
    %21 = arith.addf %18, %20 : vector<256x128xf32>
    %cst_17 = arith.constant 0.000000e+00 : f32
    %22 = vector.broadcast %cst_17 : f32 to vector<256x128xf32>
    %23 = arith.maximumf %21, %22 : vector<256x128xf32>
    %24 = arith.truncf %23 : vector<256x128xf32> to vector<256x128xbf16>
    %c0_18 = arith.constant 0 : index
    %c0_19 = arith.constant 0 : index
    %25 = vector.load %arg8[%c0_18, %c0_19] : memref<128x128xbf16, #tpu.memory_space<vmem>>, vector<128x128xbf16>
    %cst_20 = arith.constant dense<0.000000e+00> : vector<256x128xf32>
    %26 = tpu.matmul %24, %25, %cst_20 {dimension_numbers = #tpu.dot_dimension_numbers<[1], [0], [0], [1], [0, 0, 1, 1], [], []>} : vector<256x128xbf16>, vector<128x128xbf16>, vector<256x128xf32> -> vector<256x128xf32>
    %c0_21 = arith.constant 0 : index
    %c0_22 = arith.constant 0 : index
    %27 = vector.load %arg9[%c0_21, %c0_22] : memref<1x128xf32, #tpu.memory_space<vmem>>, vector<1x128xf32>
    %28 = vector.broadcast %27 : vector<1x128xf32> to vector<256x128xf32>
    %29 = arith.addf %26, %28 : vector<256x128xf32>
    %cst_23 = arith.constant 5.000000e-01 : f32
    %30 = vector.broadcast %cst_23 : f32 to vector<256x128xf32>
    %31 = arith.mulf %30, %29 : vector<256x128xf32>
    %32 = math.tanh %31 : vector<256x128xf32>
    %cst_24 = arith.constant 5.000000e-01 : f32
    %33 = vector.broadcast %cst_24 : f32 to vector<256x128xf32>
    %34 = arith.mulf %33, %32 : vector<256x128xf32>
    %cst_25 = arith.constant 5.000000e-01 : f32
    %35 = vector.broadcast %cst_25 : f32 to vector<256x128xf32>
    %36 = arith.addf %34, %35 : vector<256x128xf32>
    %c0_26 = arith.constant 0 : index
    %c0_27 = arith.constant 0 : index
    %37 = vector.load %arg10[%c0_26, %c0_27] : memref<256x128xf32, #tpu.memory_space<vmem>>, vector<256x128xf32>
    tpu.vector_store %arg10[%c0_26, %c0_27], %36 {strides = array<i32>} : memref<256x128xf32, #tpu.memory_space<vmem>>, vector<256x128xf32>,
    return
  }
  func.func @transform_0(%arg0: i32) -> (i32, i32) {
    %c0_i32 = arith.constant 0 : i32
    %c0_i32_0 = arith.constant 0 : i32
    return %arg0, %c0_i32 : i32, i32
  }
  func.func @transform_1(%arg0: i32) -> (i32, i32) {
    %c0_i32 = arith.constant 0 : i32
    %c0_i32_0 = arith.constant 0 : i32
    %c0_i32_1 = arith.constant 0 : i32
    return %c0_i32, %c0_i32_0 : i32, i32
  }
  func.func @transform_2(%arg0: i32) -> (i32, i32) {
    %c0_i32 = arith.constant 0 : i32
    %c0_i32_0 = arith.constant 0 : i32
    %c0_i32_1 = arith.constant 0 : i32
    return %c0_i32, %c0_i32_0 : i32, i32
  }
  func.func @transform_3(%arg0: i32) -> (i32, i32) {
    %c0_i32 = arith.constant 0 : i32
    %c0_i32_0 = arith.constant 0 : i32
    %c0_i32_1 = arith.constant 0 : i32
    return %c0_i32, %c0_i32_0 : i32, i32
  }
  func.func @transform_4(%arg0: i32) -> (i32, i32) {
    %c0_i32 = arith.constant 0 : i32
    %c0_i32_0 = arith.constant 0 : i32
    %c0_i32_1 = arith.constant 0 : i32
    return %c0_i32, %c0_i32_0 : i32, i32
  }
  func.func @transform_5(%arg0: i32) -> (i32, i32) {
    %c0_i32 = arith.constant 0 : i32
    %c0_i32_0 = arith.constant 0 : i32
    %c0_i32_1 = arith.constant 0 : i32
    return %c0_i32, %c0_i32_0 : i32, i32
  }
  func.func @transform_6(%arg0: i32) -> (i32, i32) {
    %c0_i32 = arith.constant 0 : i32
    %c0_i32_0 = arith.constant 0 : i32
    %c0_i32_1 = arith.constant 0 : i32
    return %c0_i32, %c0_i32_0 : i32, i32
  }
  func.func @transform_7(%arg0: i32) -> (i32, i32) {
    %c0_i32 = arith.constant 0 : i32
    %c0_i32_0 = arith.constant 0 : i32
    %c0_i32_1 = arith.constant 0 : i32
    return %c0_i32, %c0_i32_0 : i32, i32
  }
  func.func @transform_8(%arg0: i32) -> (i32, i32) {
    %c0_i32 = arith.constant 0 : i32
    %c0_i32_0 = arith.constant 0 : i32
    %c0_i32_1 = arith.constant 0 : i32
    return %c0_i32, %c0_i32_0 : i32, i32
  }
  func.func @transform_9(%arg0: i32) -> (i32, i32) {
    %c0_i32 = arith.constant 0 : i32
    %c0_i32_0 = arith.constant 0 : i32
    return %arg0, %c0_i32 : i32, i32
  }
}

</mosaic_0001>

<llo_original>
// kernel: tpu_custom_call.1
$region0: #{tpu_custom_call.1}
  #allocation0 [shape = 'u32[]', space=smem, size = 0x4, offset = 0x4, fixed_abs, tag = 'smem constant byte address 0x4 - core index']
  #allocation1 [shape = 'u32[144,128]{1,0:T(1,128)}', space=vmem, size = 0x12000, scoped, tag = 'internal scratch']
  %s0 = inlined_call_operand.vmem [shape: bf16[512,8], index: 0, kind: input, shape index: {}]
  %s1 = inlined_call_operand.vmem [shape: bf16[8,1024], index: 1, kind: input, shape index: {}]
  %s2 = inlined_call_operand.vmem [shape: f32[1,1024], index: 2, kind: input, shape index: {}]
  %s3 = inlined_call_operand.hbm [shape: bf16[1024,256], index: 3, kind: input, shape index: {}]
  %s4 = inlined_call_operand.vmem [shape: f32[1,256], index: 4, kind: input, shape index: {}]
  %s5 = inlined_call_operand.vmem [shape: bf16[256,128], index: 5, kind: input, shape index: {}]
  %s6 = inlined_call_operand.vmem [shape: f32[1,128], index: 6, kind: input, shape index: {}]
  %s7 = inlined_call_operand.vmem [shape: bf16[128,128], index: 7, kind: input, shape index: {}]
  %s8 = inlined_call_operand.vmem [shape: f32[1,128], index: 8, kind: input, shape index: {}]
  %s9 = inlined_call_operand.hbm [shape: f32[512,128], index: 9, kind: output, shape index: {}]
  %s10 = sld [smem:[#allocation0]]
  $region73: #{tpu_custom_call.1} parent=0
    _
  %s12 = ssub.s32 1, %s10
  %s13 = scalar_select 0, %s12, %s10
  $region1: #{tpu_custom_call.1} parent=0
    #allocation2 [shape = 'u8[524288]{0}', space=vmem, size = 0x80000, scoped, tag = 'input window, operand 3, single buffered']
    #allocation3 [shape = 's32[2]{0}', space=sflag, size = 0x8, scoped, tag = 'scoped memory for tpu_custom_call.1']
    #allocation4 [shape = 's32[2]{0}', space=sflag, size = 0x8, scoped, tag = 'scoped memory for tpu_custom_call.1']
    #allocation5 [shape = 'u8[262144]{0}', space=vmem, size = 0x40000, scoped, tag = 'output window, operand 0']
    %14 = vsyncpa [#allocation3], 0
    %15 = vsyncpa [#allocation4], 0
    %s16 = scalar_lea.sflag [#allocation4], 1
    %17 = vsyncpa %s16, 0
    loop: start=0, step=1, limit=4
    $region2: #{tpu_custom_call.1} parent=1 // loop_pre_header
      _
    $region3: #{tpu_custom_call.1} parent=1 // loop_header
      %s19 = sphi 0, %s23
      %p20 = scmp.ge.s32.totalorder %s19, 4
      %s29 = sphi 0, %s31
      %s32 = sphi 0, %s29
      %s33 = sphi 0, %s32
      %s49 = sphi 0, %s33
      %s53 = sphi 0, %s53
      %s55 = sphi 0, %s53
      %s56 = sphi 0, %s55
      %s70 = sphi 0, %s56
      %s74 = sphi 0, %s74
      %s76 = sphi 0, %s74
      %s77 = sphi 0, %s76
      %s91 = sphi 0, %s77
      %s95 = sphi 0, %s95
      %s97 = sphi 0, %s95
      %s98 = sphi 0, %s97
      %s112 = sphi 0, %s98
      %s116 = sphi 0, %s116
      %s118 = sphi 0, %s116
      %s119 = sphi 0, %s118
      %s133 = sphi 0, %s119
      %s137 = sphi 0, %s137
      %s139 = sphi 0, %s137
      %s140 = sphi 0, %s139
      %s154 = sphi 0, %s140
      %s158 = sphi 0, %s158
      %s160 = sphi 0, %s158
      %s161 = sphi 0, %s160
      %s175 = sphi 0, %s161
      %s179 = sphi 0, %s179
      %s181 = sphi 0, %s179
      %s182 = sphi 0, %s181
      %s196 = sphi 0, %s182
      %s200 = sphi 0, %s200
      %s202 = sphi 0, %s200
      %s203 = sphi 0, %s202
      %s217 = sphi 0, %s203
      %s223 = sphi 0, %s225
      %s226 = sphi 0, %s223
      %s227 = sphi 0, %s226
      %s243 = sphi 0, %s227
    $region4: #{tpu_custom_call.1} parent=1 // loop_header_branch
      %22 = sbr.rel (%p20) target = $region8
    $region5: #{tpu_custom_call.1} parent=1 // loop_body
      %s24 = ssub.s32 %s19, 1
      %s25 = ssub.s32 %s19, 2
      %s26 = sadd.s32 %s19, 1
      %s27 = ssub.s32 %s19, %s26
      %p28 = scmp.eq.s32.totalorder %s27, 0
      %s30 = sadd.s32 %s29, 1
      %s31 = scalar_select %p28, %s29, %s30
      %p34 = pneg %p28
      %p35 = scmp.eq.s32.totalorder %s19, 1
      %p36 = por %p34, %p35
      %p37 = scmp.ne.s32.totalorder %s29, %s32
      %p38 = scmp.eq.s32.totalorder %s19, 0
      %p39 = por %p37, %p38
      %p40 = scmp.ne.s32.totalorder %s29, %s32
      %p41 = scmp.eq.s32.totalorder %s24, 1
      %p42 = por %p40, %p41
      %p43 = scmp.ne.s32.totalorder %s32, %s33
      %p44 = scmp.eq.s32.totalorder %s24, 0
      %p45 = por %p43, %p44
      %p46 = scmp.ne.s32.totalorder %s32, %s33
      %p47 = scmp.eq.s32.totalorder %s25, 1
      %p48 = por %p46, %p47
      %p50 = scmp.ne.s32.totalorder %s33, %s49
      %p51 = scmp.eq.s32.totalorder %s25, 0
      %p52 = por %p50, %p51
      %s54 = sadd.s32 %s53, 1
      %p57 = scmp.eq.s32.totalorder %s19, 1
      %p58 = scmp.ne.s32.totalorder %s53, %s55
      %p59 = scmp.eq.s32.totalorder %s19, 0
      %p60 = por %p58, %p59
      %p61 = scmp.ne.s32.totalorder %s53, %s55
      %p62 = scmp.eq.s32.totalorder %s24, 1
      %p63 = por %p61, %p62
      %p64 = scmp.ne.s32.totalorder %s55, %s56
      %p65 = scmp.eq.s32.totalorder %s24, 0
      %p66 = por %p64, %p65
      %p67 = scmp.ne.s32.totalorder %s55, %s56
      %p68 = scmp.eq.s32.totalorder %s25, 1
      %p69 = por %p67, %p68
      %p71 = scmp.ne.s32.totalorder %s56, %s70
      %p72 = scmp.eq.s32.totalorder %s25, 0
      %p73 = por %p71, %p72
      %s75 = sadd.s32 %s74, 1
      %p78 = scmp.eq.s32.totalorder %s19, 1
      %p79 = scmp.ne.s32.totalorder %s74, %s76
      %p80 = scmp.eq.s32.totalorder %s19, 0
      %p81 = por %p79, %p80
      %p82 = scmp.ne.s32.totalorder %s74, %s76
      %p83 = scmp.eq.s32.totalorder %s24, 1
      %p84 = por %p82, %p83
      %p85 = scmp.ne.s32.totalorder %s76, %s77
      %p86 = scmp.eq.s32.totalorder %s24, 0
      %p87 = por %p85, %p86
      %p88 = scmp.ne.s32.totalorder %s76, %s77
      %p89 = scmp.eq.s32.totalorder %s25, 1
      %p90 = por %p88, %p89
      %p92 = scmp.ne.s32.totalorder %s77, %s91
      %p93 = scmp.eq.s32.totalorder %s25, 0
      %p94 = por %p92, %p93
      %s96 = sadd.s32 %s95, 1
      %p99 = scmp.eq.s32.totalorder %s19, 1
      %p100 = scmp.ne.s32.totalorder %s95, %s97
      %p101 = scmp.eq.s32.totalorder %s19, 0
      %p102 = por %p100, %p101
      %p103 = scmp.ne.s32.totalorder %s95, %s97
      %p104 = scmp.eq.s32.totalorder %s24, 1
      %p105 = por %p103, %p104
      %p106 = scmp.ne.s32.totalorder %s97, %s98
      %p107 = scmp.eq.s32.totalorder %s24, 0
      %p108 = por %p106, %p107
      %p109 = scmp.ne.s32.totalorder %s97, %s98
      %p110 = scmp.eq.s32.totalorder %s25, 1
      %p111 = por %p109, %p110
      %p113 = scmp.ne.s32.totalorder %s98, %s112
      %p114 = scmp.eq.s32.totalorder %s25, 0
      %p115 = por %p113, %p114
      %s117 = sadd.s32 %s116, 1
      %p120 = scmp.eq.s32.totalorder %s19, 1
      %p121 = scmp.ne.s32.totalorder %s116, %s118
      %p122 = scmp.eq.s32.totalorder %s19, 0
      %p123 = por %p121, %p122
      %p124 = scmp.ne.s32.totalorder %s116, %s118
      %p125 = scmp.eq.s32.totalorder %s24, 1
      %p126 = por %p124, %p125
      %p127 = scmp.ne.s32.totalorder %s118, %s119
      %p128 = scmp.eq.s32.totalorder %s24, 0
      %p129 = por %p127, %p128
      %p130 = scmp.ne.s32.totalorder %s118, %s119
      %p131 = scmp.eq.s32.totalorder %s25, 1
      %p132 = por %p130, %p131
      %p134 = scmp.ne.s32.totalorder %s119, %s133
      %p135 = scmp.eq.s32.totalorder %s25, 0
      %p136 = por %p134, %p135
      %s138 = sadd.s32 %s137, 1
      %p141 = scmp.eq.s32.totalorder %s19, 1
      %p142 = scmp.ne.s32.totalorder %s137, %s139
      %p143 = scmp.eq.s32.totalorder %s19, 0
      %p144 = por %p142, %p143
      %p145 = scmp.ne.s32.totalorder %s137, %s139
      %p146 = scmp.eq.s32.totalorder %s24, 1
      %p147 = por %p145, %p146
      %p148 = scmp.ne.s32.totalorder %s139, %s140
      %p149 = scmp.eq.s32.totalorder %s24, 0
      %p150 = por %p148, %p149
      %p151 = scmp.ne.s32.totalorder %s139, %s140
      %p152 = scmp.eq.s32.totalorder %s25, 1
      %p153 = por %p151, %p152
      %p155 = scmp.ne.s32.totalorder %s140, %s154
      %p156 = scmp.eq.s32.totalorder %s25, 0
      %p157 = por %p155, %p156
      %s159 = sadd.s32 %s158, 1
      %p162 = scmp.eq.s32.totalorder %s19, 1
      %p163 = scmp.ne.s32.totalorder %s158, %s160
      %p164 = scmp.eq.s32.totalorder %s19, 0
      %p165 = por %p163, %p164
      %p166 = scmp.ne.s32.totalorder %s158, %s160
      %p167 = scmp.eq.s32.totalorder %s24, 1
      %p168 = por %p166, %p167
      %p169 = scmp.ne.s32.totalorder %s160, %s161
      %p170 = scmp.eq.s32.totalorder %s24, 0
      %p171 = por %p169, %p170
      %p172 = scmp.ne.s32.totalorder %s160, %s161
      %p173 = scmp.eq.s32.totalorder %s25, 1
      %p174 = por %p172, %p173
      %p176 = scmp.ne.s32.totalorder %s161, %s175
      %p177 = scmp.eq.s32.totalorder %s25, 0
      %p178 = por %p176, %p177
      %s180 = sadd.s32 %s179, 1
      %p183 = scmp.eq.s32.totalorder %s19, 1
      %p184 = scmp.ne.s32.totalorder %s179, %s181
      %p185 = scmp.eq.s32.totalorder %s19, 0
      %p186 = por %p184, %p185
      %p187 = scmp.ne.s32.totalorder %s179, %s181
      %p188 = scmp.eq.s32.totalorder %s24, 1
      %p189 = por %p187, %p188
      %p190 = scmp.ne.s32.totalorder %s181, %s182
      %p191 = scmp.eq.s32.totalorder %s24, 0
      %p192 = por %p190, %p191
      %p193 = scmp.ne.s32.totalorder %s181, %s182
      %p194 = scmp.eq.s32.totalorder %s25, 1
      %p195 = por %p193, %p194
      %p197 = scmp.ne.s32.totalorder %s182, %s196
      %p198 = scmp.eq.s32.totalorder %s25, 0
      %p199 = por %p197, %p198
      %s201 = sadd.s32 %s200, 1
      %p204 = scmp.eq.s32.totalorder %s19, 1
      %p205 = scmp.ne.s32.totalorder %s200, %s202
      %p206 = scmp.eq.s32.totalorder %s19, 0
      %p207 = por %p205, %p206
      %p208 = scmp.ne.s32.totalorder %s200, %s202
      %p209 = scmp.eq.s32.totalorder %s24, 1
      %p210 = por %p208, %p209
      %p211 = scmp.ne.s32.totalorder %s202, %s203
      %p212 = scmp.eq.s32.totalorder %s24, 0
      %p213 = por %p211, %p212
      %p214 = scmp.ne.s32.totalorder %s202, %s203
      %p215 = scmp.eq.s32.totalorder %s25, 1
      %p216 = por %p214, %p215
      %p218 = scmp.ne.s32.totalorder %s203, %s217
      %p219 = scmp.eq.s32.totalorder %s25, 0
      %p220 = por %p218, %p219
      %s221 = ssub.s32 %s19, %s26
      %p222 = scmp.eq.s32.totalorder %s221, 0
      %s224 = sadd.s32 %s223, 1
      %s225 = scalar_select %p222, %s223, %s224
      %p228 = pneg %p222
      %p229 = scmp.eq.s32.totalorder %s19, 1
      %p230 = por %p228, %p229
      %p231 = scmp.ne.s32.totalorder %s223, %s226
      %p232 = scmp.eq.s32.totalorder %s19, 0
      %p233 = por %p231, %p232
      %p234 = scmp.ne.s32.totalorder %s223, %s226
      %p235 = scmp.eq.s32.totalorder %s24, 1
      %p236 = por %p234, %p235
      %p237 = scmp.ne.s32.totalorder %s226, %s227
      %p238 = scmp.eq.s32.totalorder %s24, 0
      %p239 = por %p237, %p238
      %p240 = scmp.ne.s32.totalorder %s226, %s227
      %p241 = scmp.eq.s32.totalorder %s25, 1
      %p242 = por %p240, %p241
      %p244 = scmp.ne.s32.totalorder %s227, %s243
      %p245 = scmp.eq.s32.totalorder %s25, 0
      %p246 = por %p244, %p245
      %p247 = scmp.le.s32.totalorder 1, %s19
      %p248 = scmp.lt.s32.totalorder %s19, 3
      %p249 = pnand %p247, %p248
      %p250 = pneg %p249
      // Predicated region
      $region9: #{tpu_custom_call.1} parent=5 // pred_check
        _
      $region10: #{tpu_custom_call.1} parent=5 // pred_check_branch
        %252 = sbr.rel (%p249) target = $region12
      $region11: #{tpu_custom_call.1} parent=5 // pred_region
        %s253 = ssub.s32 %s19, 1
        // Predicated region
        $region13: #{tpu_custom_call.1} parent=11 // pred_check
          %p254 = pneg %p66
        $region14: #{tpu_custom_call.1} parent=11 // pred_check_branch
          %256 = sbr.rel (%p254) target = $region16
        $region15: #{tpu_custom_call.1} parent=11 // pred_region
          _
        $region16: #{tpu_custom_call.1} parent=11 // pred_fallthru
          _
        // Predicated region
        $region17: #{tpu_custom_call.1} parent=11 // pred_check
          %p257 = pneg %p87
        $region18: #{tpu_custom_call.1} parent=11 // pred_check_branch
          %259 = sbr.rel (%p257) target = $region20
        $region19: #{tpu_custom_call.1} parent=11 // pred_region
          _
        $region20: #{tpu_custom_call.1} parent=11 // pred_fallthru
          _
        // Predicated region
        $region21: #{tpu_custom_call.1} parent=11 // pred_check
          %p260 = pneg %p108
        $region22: #{tpu_custom_call.1} parent=11 // pred_check_branch
          %262 = sbr.rel (%p260) target = $region24
        $region23: #{tpu_custom_call.1} parent=11 // pred_region
          %s264 = ssub.s32 16384, 16384
          %265 = vsyncadd [#allocation3], %s264
          %s266 = sshll.u32 [#allocation2], 4
          %s267 = int_to_ptr.vmem [resolvable:$true] %s266
          %272 = dma.hbm_to_vmem [thread:$0]  %s3, 16384, %s267, [#allocation3], 128, 128, 8
        $region24: #{tpu_custom_call.1} parent=11 // pred_fallthru
          _
        // Predicated region
        $region25: #{tpu_custom_call.1} parent=11 // pred_check
          %p273 = pneg %p129
        $region26: #{tpu_custom_call.1} parent=11 // pred_check_branch
          %275 = sbr.rel (%p273) target = $region28
        $region27: #{tpu_custom_call.1} parent=11 // pred_region
          _
        $region28: #{tpu_custom_call.1} parent=11 // pred_fallthru
          _
        // Predicated region
        $region29: #{tpu_custom_call.1} parent=11 // pred_check
          %p276 = pneg %p150
        $region30: #{tpu_custom_call.1} parent=11 // pred_check_branch
          %278 = sbr.rel (%p276) target = $region32
        $region31: #{tpu_custom_call.1} parent=11 // pred_region
          _
        $region32: #{tpu_custom_call.1} parent=11 // pred_fallthru
          _
        // Predicated region
        $region33: #{tpu_custom_call.1} parent=11 // pred_check
          %p279 = pneg %p171
        $region34: #{tpu_custom_call.1} parent=11 // pred_check_branch
          %281 = sbr.rel (%p279) target = $region36
        $region35: #{tpu_custom_call.1} parent=11 // pred_region
          _
        $region36: #{tpu_custom_call.1} parent=11 // pred_fallthru
          _
        // Predicated region
        $region37: #{tpu_custom_call.1} parent=11 // pred_check
          %p282 = pneg %p192
        $region38: #{tpu_custom_call.1} parent=11 // pred_check_branch
          %284 = sbr.rel (%p282) target = $region40
        $region39: #{tpu_custom_call.1} parent=11 // pred_region
          _
        $region40: #{tpu_custom_call.1} parent=11 // pred_fallthru
          _
        // Predicated region
        $region41: #{tpu_custom_call.1} parent=11 // pred_check
          %p285 = pneg %p213
        $region42: #{tpu_custom_call.1} parent=11 // pred_check_branch
          %287 = sbr.rel (%p285) target = $region44
        $region43: #{tpu_custom_call.1} parent=11 // pred_region
          _
        $region44: #{tpu_custom_call.1} parent=11 // pred_fallthru
          _
      $region12: #{tpu_custom_call.1} parent=5 // pred_fallthru
        _
      %p288 = scmp.lt.s32.totalorder %s19, 2
      // Predicated region
      $region45: #{tpu_custom_call.1} parent=5 // pred_check
        %p289 = pneg %p288
      $region46: #{tpu_custom_call.1} parent=5 // pred_check_branch
        %291 = sbr.rel (%p289) target = $region48
      $region47: #{tpu_custom_call.1} parent=5 // pred_region
        // Predicated region
        $region49: #{tpu_custom_call.1} parent=47 // pred_check
          %p292 = pneg %p39
        $region50: #{tpu_custom_call.1} parent=47 // pred_check_branch
          %294 = sbr.rel (%p292) target = $region52
        $region51: #{tpu_custom_call.1} parent=47 // pred_region
          %s295 = smul.u32 32, %s19
          %p296 = scmp.lt.s32.totalorder %s295, 63
          %s297 = scalar_select %p296, %s295, 63
          %s298 = smul.addr %s297, 4
          %s299 = scalar_lea.vmem %s0, %s298
          %s300 = smul.u32 32, %s19
        $region52: #{tpu_custom_call.1} parent=47 // pred_fallthru
          _
      $region48: #{tpu_custom_call.1} parent=5 // pred_fallthru
        _
      %p301 = scmp.le.s32.totalorder 1, %s19
      %p302 = scmp.lt.s32.totalorder %s19, 3
      %p303 = pnand %p301, %p302
      %p304 = pneg %p303
      // Predicated region
      $region53: #{tpu_custom_call.1} parent=5 // pred_check
        _
      $region54: #{tpu_custom_call.1} parent=5 // pred_check_branch
        %306 = sbr.rel (%p303) target = $region56
      $region55: #{tpu_custom_call.1} parent=5 // pred_region
        %s307 = ssub.s32 %s19, 1
        // Predicated region
        $region57: #{tpu_custom_call.1} parent=55 // pred_check
          %p308 = pneg %p108
        $region58: #{tpu_custom_call.1} parent=55 // pred_check_branch
          %310 = sbr.rel (%p308) target = $region60
        $region59: #{tpu_custom_call.1} parent=55 // pred_region
          %311 = dma.done [#allocation3], 16384
        $region60: #{tpu_custom_call.1} parent=55 // pred_fallthru
          _
        %s312 = smul.u32 32, %s24
        %p313 = scmp.lt.s32.totalorder %s312, 63
        %s314 = scalar_select %p313, %s312, 63
        %s315 = smul.addr %s314, 4
        %s316 = scalar_lea.vmem %s0, %s315
        %p317 = pneg %p45
        %p318 = pneg %p42
        %p319 = pneg %p66
        %p320 = pneg %p63
        %p321 = pneg %p87
        %p322 = pneg %p84
        %p323 = pneg %p108
        %p324 = pneg %p105
        %p325 = pneg %p129
        %p326 = pneg %p126
        %p327 = pneg %p150
        %p328 = pneg %p147
        %p329 = pneg %p171
        %p330 = pneg %p168
        %p331 = pneg %p192
        %p332 = pneg %p189
        %p333 = pneg %p213
        %p334 = pneg %p210
        %p335 = pneg %p239
        %p336 = pneg %p236
        %s337 = sand.u32 %s226, 1
        %s338 = scalar_lea.sflag [#allocation4], %s337
        %s339 = sand.u32 %s226, 1
        %s340 = smul.addr %s339, 256
        %s341 = scalar_lea.vmem [#allocation5], %s340
        %s342 = smul.u32 32, %s24
        %p343 = scmp.lt.s32.totalorder %s342, 63
        %s344 = scalar_select %p343, %s342, 63
        %s345 = smul.addr %s344, 4
        %s346 = scalar_lea.vmem %s0, %s345
        %s347 = smul.u32 32, %s24
        %s348 = smul.u32 32, %s24
        %v350 = vld [vmem:[%s346] sm:$0xf]
        %v351 = vld [vmem:[%s346 + $0x4] sm:$0xf]
        %v352 = vld [vmem:[%s346 + $0x8] sm:$0xf]
        %v353 = vld [vmem:[%s346 + $0xc] sm:$0xf]
        %v354 = vld [vmem:[%s346 + $0x10] sm:$0xf]
        %v355 = vld [vmem:[%s346 + $0x14] sm:$0xf]
        %v356 = vld [vmem:[%s346 + $0x18] sm:$0xf]
        %v357 = vld [vmem:[%s346 + $0x1c] sm:$0xf]
        %v358 = vld [vmem:[%s346 + $0x20] sm:$0xf]
        %v359 = vld [vmem:[%s346 + $0x24] sm:$0xf]
        %v360 = vld [vmem:[%s346 + $0x28] sm:$0xf]
        %v361 = vld [vmem:[%s346 + $0x2c] sm:$0xf]
        %v362 = vld [vmem:[%s346 + $0x30] sm:$0xf]
        %v363 = vld [vmem:[%s346 + $0x34] sm:$0xf]
        %v364 = vld [vmem:[%s346 + $0x38] sm:$0xf]
        %v365 = vld [vmem:[%s346 + $0x3c] sm:$0xf]
        %v366 = vld [vmem:[%s346 + $0x40] sm:$0xf]
        %v367 = vld [vmem:[%s346 + $0x44] sm:$0xf]
        %v368 = vld [vmem:[%s346 + $0x48] sm:$0xf]
        %v369 = vld [vmem:[%s346 + $0x4c] sm:$0xf]
        %v370 = vld [vmem:[%s346 + $0x50] sm:$0xf]
        %v371 = vld [vmem:[%s346 + $0x54] sm:$0xf]
        %v372 = vld [vmem:[%s346 + $0x58] sm:$0xf]
        %v373 = vld [vmem:[%s346 + $0x5c] sm:$0xf]
        %v374 = vld [vmem:[%s346 + $0x60] sm:$0xf]
        %v375 = vld [vmem:[%s346 + $0x64] sm:$0xf]
        %v376 = vld [vmem:[%s346 + $0x68] sm:$0xf]
        %v377 = vld [vmem:[%s346 + $0x6c] sm:$0xf]
        %v378 = vld [vmem:[%s346 + $0x70] sm:$0xf]
        %v379 = vld [vmem:[%s346 + $0x74] sm:$0xf]
        %v380 = vld [vmem:[%s346 + $0x78] sm:$0xf]
        %v381 = vld [vmem:[%s346 + $0x7c] sm:$0xf]
        %v382 = vld [vmem:[%s1] sm:$0xff]
        %v383 = vld [vmem:[%s1 + $0x8] sm:$0xff]
        %v384 = vld [vmem:[%s1 + $0x10] sm:$0xff]
        %v385 = vld [vmem:[%s1 + $0x18] sm:$0xff]
        %v386 = vld [vmem:[%s2] sm:$0xff]
        %v388 = vlaneseq
        %v389 = vshrl.u32 %v388, 7
        %v390 = vsub.s32 0, %v389
        %v391 = vrot.slane %v386, %v390
        %v392 = vlaneseq
        %v393 = vshrl.u32 %v392, 7
        %v394 = vsub.s32 1, %v393
        %v395 = vrot.slane %v386, %v394
        %v396 = vlaneseq
        %v397 = vshrl.u32 %v396, 7
        %v398 = vsub.s32 2, %v397
        %v399 = vrot.slane %v386, %v398
        %v400 = vlaneseq
        %v401 = vshrl.u32 %v400, 7
        %v402 = vsub.s32 3, %v401
        %v403 = vrot.slane %v386, %v402
        %v404 = vlaneseq
        %v405 = vshrl.u32 %v404, 7
        %v406 = vsub.s32 4, %v405
        %v407 = vrot.slane %v386, %v406
        %v408 = vlaneseq
        %v409 = vshrl.u32 %v408, 7
        %v410 = vsub.s32 5, %v409
        %v411 = vrot.slane %v386, %v410
        %v412 = vlaneseq
        %v413 = vshrl.u32 %v412, 7
        %v414 = vsub.s32 6, %v413
        %v415 = vrot.slane %v386, %v414
        %v416 = vlaneseq
        %v417 = vshrl.u32 %v416, 7
        %v418 = vsub.s32 7, %v417
        %v419 = vrot.slane %v386, %v418
        %v460 = vunpack.c.l.b16 %v350
        %v461 = vunpack.c.l.b16 %v351
        %v462 = vunpack.c.l.b16 %v352
        %v463 = vunpack.c.l.b16 %v353
        %v464 = vunpack.c.l.b16 %v354
        %v465 = vunpack.c.l.b16 %v355
        %v466 = vunpack.c.l.b16 %v356
        %v467 = vunpack.c.l.b16 %v357
        %v468 = vunpack.c.l.b16 %v358
        %v469 = vunpack.c.l.b16 %v359
        %v470 = vunpack.c.l.b16 %v360
        %v471 = vunpack.c.l.b16 %v361
        %v472 = vunpack.c.l.b16 %v362
        %v473 = vunpack.c.l.b16 %v363
        %v474 = vunpack.c.l.b16 %v364
        %v475 = vunpack.c.l.b16 %v365
        %v476 = vunpack.c.l.b16 %v366
        %v477 = vunpack.c.l.b16 %v367
        %v478 = vunpack.c.l.b16 %v368
        %v479 = vunpack.c.l.b16 %v369
        %v480 = vunpack.c.l.b16 %v370
        %v481 = vunpack.c.l.b16 %v371
        %v482 = vunpack.c.l.b16 %v372
        %v483 = vunpack.c.l.b16 %v373
        %v484 = vunpack.c.l.b16 %v374
        %v485 = vunpack.c.l.b16 %v375
        %v486 = vunpack.c.l.b16 %v376
        %v487 = vunpack.c.l.b16 %v377
        %v488 = vunpack.c.l.b16 %v378
        %v489 = vunpack.c.l.b16 %v379
        %v490 = vunpack.c.l.b16 %v380
        %v491 = vunpack.c.l.b16 %v381
        %v492 = vpack.c.b16 %v461, %v460
        %v493 = vpack.c.b16 %v463, %v462
        %v494 = vpack.c.b16 %v465, %v464
        %v495 = vpack.c.b16 %v467, %v466
        %v496 = vpack.c.b16 %v469, %v468
        %v497 = vpack.c.b16 %v471, %v470
        %v498 = vpack.c.b16 %v473, %v472
        %v499 = vpack.c.b16 %v475, %v474
        %v500 = vpack.c.b16 %v477, %v476
        %v501 = vpack.c.b16 %v479, %v478
        %v502 = vpack.c.b16 %v481, %v480
        %v503 = vpack.c.b16 %v483, %v482
        %v504 = vpack.c.b16 %v485, %v484
        %v505 = vpack.c.b16 %v487, %v486
        %v506 = vpack.c.b16 %v489, %v488
        %v507 = vpack.c.b16 %v491, %v490
        %v512 = vunpack.c.l.b16 %v382
        %v513 = vunpack.c.h.b16 %v382
        %v514 = vunpack.c.l.b16 %v383
        %v515 = vunpack.c.h.b16 %v383
        %v516 = vunpack.c.l.b16 %v384
        %v517 = vunpack.c.h.b16 %v384
        %v518 = vunpack.c.l.b16 %v385
        %v519 = vunpack.c.h.b16 %v385
        %v520 = vpack.c.b16 %v512, %v512
        %v521 = vpack.c.b16 %v513, %v513
        %v522 = vpack.c.b16 %v514, %v514
        %v523 = vpack.c.b16 %v515, %v515
        %v524 = vpack.c.b16 %v516, %v516
        %v525 = vpack.c.b16 %v517, %v517
        %v526 = vpack.c.b16 %v518, %v518
        %v527 = vpack.c.b16 %v519, %v519
        %vm528 = vcmask 64512
        %v530 = vsel %vm528, %v492, 0
        %v533 = vsel %vm528, %v493, 0
        %v536 = vsel %vm528, %v494, 0
        %v539 = vsel %vm528, %v495, 0
        %v542 = vsel %vm528, %v496, 0
        %v545 = vsel %vm528, %v497, 0
        %v548 = vsel %vm528, %v498, 0
        %v551 = vsel %vm528, %v499, 0
        %v554 = vsel %vm528, %v500, 0
        %v557 = vsel %vm528, %v501, 0
        %v560 = vsel %vm528, %v502, 0
        %v563 = vsel %vm528, %v503, 0
        %v566 = vsel %vm528, %v504, 0
        %v569 = vsel %vm528, %v505, 0
        %v572 = vsel %vm528, %v506, 0
        %v575 = vsel %vm528, %v507, 0
        %vm577 = vcmask 1043456
        %v579 = vsel %vm577, %v520, 0
        %v582 = vsel %vm577, %v521, 0
        %v585 = vsel %vm577, %v522, 0
        %v588 = vsel %vm577, %v523, 0
        %v591 = vsel %vm577, %v524, 0
        %v594 = vsel %vm577, %v525, 0
        %v597 = vsel %vm577, %v526, 0
        %v600 = vsel %vm577, %v527, 0
        %602 = vmatprep.subr.bf16.mxu0 0
        %603 = vmatpush1.bf16.msra.mxu0 0
        %604 = vmatprep.subr.bf16.mxu0 0
        %605 = vmatpush1.bf16.msra.mxu0 0
        %606 = vmatprep.subr.bf16.mxu0 0
        %607 = vmatpush1.bf16.msra.mxu0 0
        %608 = vmatprep.subr.bf16.mxu0 0
        %609 = vmatpush1.bf16.msra.mxu0 0
        %610 = vmatprep.subr.bf16.mxu0 0
        %611 = vmatpush1.bf16.msra.mxu0 0
        %612 = vmatprep.subr.bf16.mxu0 0
        %613 = vmatpush1.bf16.msra.mxu0 0
        %614 = vmatprep.subr.bf16.mxu0 0
        %615 = vmatpush1.bf16.msra.mxu0 0
        %616 = vmatprep.subr.bf16.mxu0 %v582
        %617 = vmatpush1.bf16.msra.mxu0 %v579
        %618 = vmatprep.subr.bf16.mxu0 0
        %619 = vmatpush2.bf16.msra.mxu0 0
        %620 = vmatprep.subr.bf16.mxu0 0
        %621 = vmatpush2.bf16.msra.mxu0 0
        %622 = vmatprep.subr.bf16.mxu0 0
        %623 = vmatpush2.bf16.msra.mxu0 0
        %624 = vmatprep.subr.bf16.mxu0 0
        %625 = vmatpush2.bf16.msra.mxu0 0
        %626 = vmatprep.subr.bf16.mxu0 0
        %627 = vmatpush2.bf16.msra.mxu0 0
        %628 = vmatprep.subr.bf16.mxu0 0
        %629 = vmatpush2.bf16.msra.mxu0 0
        %630 = vmatprep.subr.bf16.mxu0 0
        %631 = vmatpush2.bf16.msra.mxu0 0
        %632 = vmatprep.subr.bf16.mxu0 0
        %633 = vmatpush2.bf16.msra.mxu0 0
        %634 = vmatprep.mubr.bf16.mxu0 0
        %635 = vmatmul.mubr.bf16.gmra.mxu0 %v530
        %v636 = vpop.f32.mrf.mxu0
        %v637 = vadd.f32 %v391, %v636
        %v638 = vpop.f32.mrf.mxu0
        %v639 = vadd.f32 %v395, %v638
        %v640 = vpop.f32.mrf.mxu0
        %v641 = vadd.f32 %v391, %v640
        %v642 = vpop.f32.mrf.mxu0
        %v643 = vadd.f32 %v395, %v642
        %644 = vmatprep.mubr.bf16.mxu0 0
        %645 = vmatmul.mubr.bf16.gmra.mxu0 %v533
        %v646 = vpop.f32.mrf.mxu0
        %v647 = vadd.f32 %v391, %v646
        %v648 = vpop.f32.mrf.mxu0
        %v649 = vadd.f32 %v395, %v648
        %v650 = vpop.f32.mrf.mxu0
        %v651 = vadd.f32 %v391, %v650
        %v652 = vpop.f32.mrf.mxu0
        %v653 = vadd.f32 %v395, %v652
        %654 = vmatprep.mubr.bf16.mxu0 0
        %655 = vmatmul.mubr.bf16.gmra.mxu0 %v536
        %v656 = vpop.f32.mrf.mxu0
        %v657 = vadd.f32 %v391, %v656
        %v658 = vpop.f32.mrf.mxu0
        %v659 = vadd.f32 %v395, %v658
        %v660 = vpop.f32.mrf.mxu0
        %v661 = vadd.f32 %v391, %v660
        %v662 = vpop.f32.mrf.mxu0
        %v663 = vadd.f32 %v395, %v662
        %664 = vmatprep.mubr.bf16.mxu0 0
        %665 = vmatmul.mubr.bf16.gmra.mxu0 %v539
        %v666 = vpop.f32.mrf.mxu0
        %v667 = vadd.f32 %v391, %v666
        %v668 = vpop.f32.mrf.mxu0
        %v669 = vadd.f32 %v395, %v668
        %v670 = vpop.f32.mrf.mxu0
        %v671 = vadd.f32 %v391, %v670
        %v672 = vpop.f32.mrf.mxu0
        %v673 = vadd.f32 %v395, %v672
        %674 = vmatprep.mubr.bf16.mxu0 0
        %675 = vmatmul.mubr.bf16.gmra.mxu0 %v542
        %v676 = vpop.f32.mrf.mxu0
        %v677 = vadd.f32 %v391, %v676
        %v678 = vpop.f32.mrf.mxu0
        %v679 = vadd.f32 %v395, %v678
        %v680 = vpop.f32.mrf.mxu0
        %v681 = vadd.f32 %v391, %v680
        %v682 = vpop.f32.mrf.mxu0
        %v683 = vadd.f32 %v395, %v682
        %684 = vmatprep.mubr.bf16.mxu0 0
        %685 = vmatmul.mubr.bf16.gmra.mxu0 %v545
        %v686 = vpop.f32.mrf.mxu0
        %v687 = vadd.f32 %v391, %v686
        %v688 = vpop.f32.mrf.mxu0
        %v689 = vadd.f32 %v395, %v688
        %v690 = vpop.f32.mrf.mxu0
        %v691 = vadd.f32 %v391, %v690
        %v692 = vpop.f32.mrf.mxu0
        %v693 = vadd.f32 %v395, %v692
        %694 = vmatprep.mubr.bf16.mxu0 0
        %695 = vmatmul.mubr.bf16.gmra.mxu0 %v548
        %v696 = vpop.f32.mrf.mxu0
        %v697 = vadd.f32 %v391, %v696
        %v698 = vpop.f32.mrf.mxu0
        %v699 = vadd.f32 %v395, %v698
        %v700 = vpop.f32.mrf.mxu0
        %v701 = vadd.f32 %v391, %v700
        %v702 = vpop.f32.mrf.mxu0
        %v703 = vadd.f32 %v395, %v702
        %704 = vmatprep.mubr.bf16.mxu0 0
        %705 = vmatmul.mubr.bf16.gmra.mxu0 %v551
        %v706 = vpop.f32.mrf.mxu0
        %v707 = vadd.f32 %v391, %v706
        %v708 = vpop.f32.mrf.mxu0
        %v709 = vadd.f32 %v395, %v708
        %v710 = vpop.f32.mrf.mxu0
        %v711 = vadd.f32 %v391, %v710
        %v712 = vpop.f32.mrf.mxu0
        %v713 = vadd.f32 %v395, %v712
        %714 = vmatprep.mubr.bf16.mxu0 0
        %715 = vmatmul.mubr.bf16.gmra.mxu0 %v554
        %v716 = vpop.f32.mrf.mxu0
        %v717 = vadd.f32 %v391, %v716
        %v718 = vpop.f32.mrf.mxu0
        %v719 = vadd.f32 %v395, %v718
        %v720 = vpop.f32.mrf.mxu0
        %v721 = vadd.f32 %v391, %v720
        %v722 = vpop.f32.mrf.mxu0
        %v723 = vadd.f32 %v395, %v722
        %724 = vmatprep.mubr.bf16.mxu0 0
        %725 = vmatmul.mubr.bf16.gmra.mxu0 %v557
        %v726 = vpop.f32.mrf.mxu0
        %v727 = vadd.f32 %v391, %v726
        %v728 = vpop.f32.mrf.mxu0
        %v729 = vadd.f32 %v395, %v728
        %v730 = vpop.f32.mrf.mxu0
        %v731 = vadd.f32 %v391, %v730
        %v732 = vpop.f32.mrf.mxu0
        %v733 = vadd.f32 %v395, %v732
        %734 = vmatprep.mubr.bf16.mxu0 0
        %735 = vmatmul.mubr.bf16.gmra.mxu0 %v560
        %v736 = vpop.f32.mrf.mxu0
        %v737 = vadd.f32 %v391, %v736
        %v738 = vpop.f32.mrf.mxu0
        %v739 = vadd.f32 %v395, %v738
        %v740 = vpop.f32.mrf.mxu0
        %v741 = vadd.f32 %v391, %v740
        %v742 = vpop.f32.mrf.mxu0
        %v743 = vadd.f32 %v395, %v742
        %744 = vmatprep.mubr.bf16.mxu0 0
        %745 = vmatmul.mubr.bf16.gmra.mxu0 %v563
        %v746 = vpop.f32.mrf.mxu0
        %v747 = vadd.f32 %v391, %v746
        %v748 = vpop.f32.mrf.mxu0
        %v749 = vadd.f32 %v395, %v748
        %v750 = vpop.f32.mrf.mxu0
        %v751 = vadd.f32 %v391, %v750
        %v752 = vpop.f32.mrf.mxu0
        %v753 = vadd.f32 %v395, %v752
        %754 = vmatprep.mubr.bf16.mxu0 0
        %755 = vmatmul.mubr.bf16.gmra.mxu0 %v566
        %v756 = vpop.f32.mrf.mxu0
        %v757 = vadd.f32 %v391, %v756
        %v758 = vpop.f32.mrf.mxu0
        %v759 = vadd.f32 %v395, %v758
        %v760 = vpop.f32.mrf.mxu0
        %v761 = vadd.f32 %v391, %v760
        %v762 = vpop.f32.mrf.mxu0
        %v763 = vadd.f32 %v395, %v762
        %764 = vmatprep.mubr.bf16.mxu0 0
        %765 = vmatmul.mubr.bf16.gmra.mxu0 %v569
        %v766 = vpop.f32.mrf.mxu0
        %v767 = vadd.f32 %v391, %v766
        %v768 = vpop.f32.mrf.mxu0
        %v769 = vadd.f32 %v395, %v768
        %v770 = vpop.f32.mrf.mxu0
        %v771 = vadd.f32 %v391, %v770
        %v772 = vpop.f32.mrf.mxu0
        %v773 = vadd.f32 %v395, %v772
        %774 = vmatprep.mubr.bf16.mxu0 0
        %775 = vmatmul.mubr.bf16.gmra.mxu0 %v572
        %v776 = vpop.f32.mrf.mxu0
        %v777 = vadd.f32 %v391, %v776
        %v778 = vpop.f32.mrf.mxu0
        %v779 = vadd.f32 %v395, %v778
        %v780 = vpop.f32.mrf.mxu0
        %v781 = vadd.f32 %v391, %v780
        %v782 = vpop.f32.mrf.mxu0
        %v783 = vadd.f32 %v395, %v782
        %784 = vmatprep.mubr.bf16.mxu0 0
        %785 = vmatmul.mubr.bf16.gmra.mxu0 %v575
        %v786 = vpop.f32.mrf.mxu0
        %v787 = vadd.f32 %v391, %v786
        %v788 = vpop.f32.mrf.mxu0
        %v789 = vadd.f32 %v395, %v788
        %v790 = vpop.f32.mrf.mxu0
        %v791 = vadd.f32 %v391, %v790
        %v792 = vpop.f32.mrf.mxu0
        %v793 = vadd.f32 %v395, %v792
        %794 = vdwg.mxu0
        %795 = vmatprep.subr.bf16.mxu0 0
        %796 = vmatpush1.bf16.msra.mxu0 0
        %797 = vmatprep.subr.bf16.mxu0 0
        %798 = vmatpush1.bf16.msra.mxu0 0
        %799 = vmatprep.subr.bf16.mxu0 0
        %800 = vmatpush1.bf16.msra.mxu0 0
        %801 = vmatprep.subr.bf16.mxu0 0
        %802 = vmatpush1.bf16.msra.mxu0 0
        %803 = vmatprep.subr.bf16.mxu0 0
        %804 = vmatpush1.bf16.msra.mxu0 0
        %805 = vmatprep.subr.bf16.mxu0 0
        %806 = vmatpush1.bf16.msra.mxu0 0
        %807 = vmatprep.subr.bf16.mxu0 0
        %808 = vmatpush1.bf16.msra.mxu0 0
        %809 = vmatprep.subr.bf16.mxu0 %v588
        %810 = vmatpush1.bf16.msra.mxu0 %v585
        %811 = vmatprep.subr.bf16.mxu0 0
        %812 = vmatpush2.bf16.msra.mxu0 0
        %813 = vmatprep.subr.bf16.mxu0 0
        %814 = vmatpush2.bf16.msra.mxu0 0
        %815 = vmatprep.subr.bf16.mxu0 0
        %816 = vmatpush2.bf16.msra.mxu0 0
        %817 = vmatprep.subr.bf16.mxu0 0
        %818 = vmatpush2.bf16.msra.mxu0 0
        %819 = vmatprep.subr.bf16.mxu0 0
        %820 = vmatpush2.bf16.msra.mxu0 0
        %821 = vmatprep.subr.bf16.mxu0 0
        %822 = vmatpush2.bf16.msra.mxu0 0
        %823 = vmatprep.subr.bf16.mxu0 0
        %824 = vmatpush2.bf16.msra.mxu0 0
        %825 = vmatprep.subr.bf16.mxu0 0
        %826 = vmatpush2.bf16.msra.mxu0 0
        %827 = vmatprep.mubr.bf16.mxu0 0
        %828 = vmatmul.mubr.bf16.gmra.mxu0 %v530
        %v829 = vpop.f32.mrf.mxu0
        %v830 = vadd.f32 %v399, %v829
        %v831 = vpop.f32.mrf.mxu0
        %v832 = vadd.f32 %v403, %v831
        %v833 = vpop.f32.mrf.mxu0
        %v834 = vadd.f32 %v399, %v833
        %v835 = vpop.f32.mrf.mxu0
        %v836 = vadd.f32 %v403, %v835
        %837 = vmatprep.mubr.bf16.mxu0 0
        %838 = vmatmul.mubr.bf16.gmra.mxu0 %v533
        %v839 = vpop.f32.mrf.mxu0
        %v840 = vadd.f32 %v399, %v839
        %v841 = vpop.f32.mrf.mxu0
        %v842 = vadd.f32 %v403, %v841
        %v843 = vpop.f32.mrf.mxu0
        %v844 = vadd.f32 %v399, %v843
        %v845 = vpop.f32.mrf.mxu0
        %v846 = vadd.f32 %v403, %v845
        %847 = vmatprep.mubr.bf16.mxu0 0
        %848 = vmatmul.mubr.bf16.gmra.mxu0 %v536
        %v849 = vpop.f32.mrf.mxu0
        %v850 = vadd.f32 %v399, %v849
        %v851 = vpop.f32.mrf.mxu0
        %v852 = vadd.f32 %v403, %v851
        %v853 = vpop.f32.mrf.mxu0
        %v854 = vadd.f32 %v399, %v853
        %v855 = vpop.f32.mrf.mxu0
        %v856 = vadd.f32 %v403, %v855
        %857 = vmatprep.mubr.bf16.mxu0 0
        %858 = vmatmul.mubr.bf16.gmra.mxu0 %v539
        %v859 = vpop.f32.mrf.mxu0
        %v860 = vadd.f32 %v399, %v859
        %v861 = vpop.f32.mrf.mxu0
        %v862 = vadd.f32 %v403, %v861
        %v863 = vpop.f32.mrf.mxu0
        %v864 = vadd.f32 %v399, %v863
        %v865 = vpop.f32.mrf.mxu0
        %v866 = vadd.f32 %v403, %v865
        %867 = vmatprep.mubr.bf16.mxu0 0
        %868 = vmatmul.mubr.bf16.gmra.mxu0 %v542
        %v869 = vpop.f32.mrf.mxu0
        %v870 = vadd.f32 %v399, %v869
        %v871 = vpop.f32.mrf.mxu0
        %v872 = vadd.f32 %v403, %v871
        %v873 = vpop.f32.mrf.mxu0
        %v874 = vadd.f32 %v399, %v873
        %v875 = vpop.f32.mrf.mxu0
        %v876 = vadd.f32 %v403, %v875
        %877 = vmatprep.mubr.bf16.mxu0 0
        %878 = vmatmul.mubr.bf16.gmra.mxu0 %v545
        %v879 = vpop.f32.mrf.mxu0
        %v880 = vadd.f32 %v399, %v879
        %v881 = vpop.f32.mrf.mxu0
        %v882 = vadd.f32 %v403, %v881
        %v883 = vpop.f32.mrf.mxu0
        %v884 = vadd.f32 %v399, %v883
        %v885 = vpop.f32.mrf.mxu0
        %v886 = vadd.f32 %v403, %v885
        %887 = vmatprep.mubr.bf16.mxu0 0
        %888 = vmatmul.mubr.bf16.gmra.mxu0 %v548
        %v889 = vpop.f32.mrf.mxu0
        %v890 = vadd.f32 %v399, %v889
        %v891 = vpop.f32.mrf.mxu0
        %v892 = vadd.f32 %v403, %v891
        %v893 = vpop.f32.mrf.mxu0
        %v894 = vadd.f32 %v399, %v893
        %v895 = vpop.f32.mrf.mxu0
        %v896 = vadd.f32 %v403, %v895
        %897 = vmatprep.mubr.bf16.mxu0 0
        %898 = vmatmul.mubr.bf16.gmra.mxu0 %v551
        %v899 = vpop.f32.mrf.mxu0
        %v900 = vadd.f32 %v399, %v899
        %v901 = vpop.f32.mrf.mxu0
        %v902 = vadd.f32 %v403, %v901
        %v903 = vpop.f32.mrf.mxu0
        %v904 = vadd.f32 %v399, %v903
        %v905 = vpop.f32.mrf.mxu0
        %v906 = vadd.f32 %v403, %v905
        %907 = vmatprep.mubr.bf16.mxu0 0
        %908 = vmatmul.mubr.bf16.gmra.mxu0 %v554
        %v909 = vpop.f32.mrf.mxu0
        %v910 = vadd.f32 %v399, %v909
        %v911 = vpop.f32.mrf.mxu0
        %v912 = vadd.f32 %v403, %v911
        %v913 = vpop.f32.mrf.mxu0
        %v914 = vadd.f32 %v399, %v913
        %v915 = vpop.f32.mrf.mxu0
        %v916 = vadd.f32 %v403, %v915
        %917 = vmatprep.mubr.bf16.mxu0 0
        %918 = vmatmul.mubr.bf16.gmra.mxu0 %v557
        %v919 = vpop.f32.mrf.mxu0
        %v920 = vadd.f32 %v399, %v919
        %v921 = vpop.f32.mrf.mxu0
        %v922 = vadd.f32 %v403, %v921
        %v923 = vpop.f32.mrf.mxu0
        %v924 = vadd.f32 %v399, %v923
        %v925 = vpop.f32.mrf.mxu0
        %v926 = vadd.f32 %v403, %v925
        %927 = vmatprep.mubr.bf16.mxu0 0
        %928 = vmatmul.mubr.bf16.gmra.mxu0 %v560
        %v929 = vpop.f32.mrf.mxu0
        %v930 = vadd.f32 %v399, %v929
        %v931 = vpop.f32.mrf.mxu0
        %v932 = vadd.f32 %v403, %v931
        %v933 = vpop.f32.mrf.mxu0
        %v934 = vadd.f32 %v399, %v933
        %v935 = vpop.f32.mrf.mxu0
        %v936 = vadd.f32 %v403, %v935
        %937 = vmatprep.mubr.bf16.mxu0 0
        %938 = vmatmul.mubr.bf16.gmra.mxu0 %v563
        %v939 = vpop.f32.mrf.mxu0
        %v940 = vadd.f32 %v399, %v939
        %v941 = vpop.f32.mrf.mxu0
        %v942 = vadd.f32 %v403, %v941
        %v943 = vpop.f32.mrf.mxu0
        %v944 = vadd.f32 %v399, %v943
        %v945 = vpop.f32.mrf.mxu0
        %v946 = vadd.f32 %v403, %v945
        %947 = vmatprep.mubr.bf16.mxu0 0
        %948 = vmatmul.mubr.bf16.gmra.mxu0 %v566
        %v949 = vpop.f32.mrf.mxu0
        %v950 = vadd.f32 %v399, %v949
        %v951 = vpop.f32.mrf.mxu0
        %v952 = vadd.f32 %v403, %v951
        %v953 = vpop.f32.mrf.mxu0
        %v954 = vadd.f32 %v399, %v953
        %v955 = vpop.f32.mrf.mxu0
        %v956 = vadd.f32 %v403, %v955
        %957 = vmatprep.mubr.bf16.mxu0 0
        %958 = vmatmul.mubr.bf16.gmra.mxu0 %v569
        %v959 = vpop.f32.mrf.mxu0
        %v960 = vadd.f32 %v399, %v959
        %v961 = vpop.f32.mrf.mxu0
        %v962 = vadd.f32 %v403, %v961
        %v963 = vpop.f32.mrf.mxu0
        %v964 = vadd.f32 %v399, %v963
        %v965 = vpop.f32.mrf.mxu0
        %v966 = vadd.f32 %v403, %v965
        %967 = vmatprep.mubr.bf16.mxu0 0
        %968 = vmatmul.mubr.bf16.gmra.mxu0 %v572
        %v969 = vpop.f32.mrf.mxu0
        %v970 = vadd.f32 %v399, %v969
        %v971 = vpop.f32.mrf.mxu0
        %v972 = vadd.f32 %v403, %v971
        %v973 = vpop.f32.mrf.mxu0
        %v974 = vadd.f32 %v399, %v973
        %v975 = vpop.f32.mrf.mxu0
        %v976 = vadd.f32 %v403, %v975
        %977 = vmatprep.mubr.bf16.mxu0 0
        %978 = vmatmul.mubr.bf16.gmra.mxu0 %v575
        %v979 = vpop.f32.mrf.mxu0
        %v980 = vadd.f32 %v399, %v979
        %v981 = vpop.f32.mrf.mxu0
        %v982 = vadd.f32 %v403, %v981
        %v983 = vpop.f32.mrf.mxu0
        %v984 = vadd.f32 %v399, %v983
        %v985 = vpop.f32.mrf.mxu0
        %v986 = vadd.f32 %v403, %v985
        %987 = vdwg.mxu0
        %988 = vmatprep.subr.bf16.mxu0 0
        %989 = vmatpush1.bf16.msra.mxu0 0
        %990 = vmatprep.subr.bf16.mxu0 0
        %991 = vmatpush1.bf16.msra.mxu0 0
        %992 = vmatprep.subr.bf16.mxu0 0
        %993 = vmatpush1.bf16.msra.mxu0 0
        %994 = vmatprep.subr.bf16.mxu0 0
        %995 = vmatpush1.bf16.msra.mxu0 0
        %996 = vmatprep.subr.bf16.mxu0 0
        %997 = vmatpush1.bf16.msra.mxu0 0
        %998 = vmatprep.subr.bf16.mxu0 0
        %999 = vmatpush1.bf16.msra.mxu0 0
        %1000 = vmatprep.subr.bf16.mxu0 0
        %1001 = vmatpush1.bf16.msra.mxu0 0
        %1002 = vmatprep.subr.bf16.mxu0 %v594
        %1003 = vmatpush1.bf16.msra.mxu0 %v591
        %1004 = vmatprep.subr.bf16.mxu0 0
        %1005 = vmatpush2.bf16.msra.mxu0 0
        %1006 = vmatprep.subr.bf16.mxu0 0
        %1007 = vmatpush2.bf16.msra.mxu0 0
        %1008 = vmatprep.subr.bf16.mxu0 0
        %1009 = vmatpush2.bf16.msra.mxu0 0
        %1010 = vmatprep.subr.bf16.mxu0 0
        %1011 = vmatpush2.bf16.msra.mxu0 0
        %1012 = vmatprep.subr.bf16.mxu0 0
        %1013 = vmatpush2.bf16.msra.mxu0 0
        %1014 = vmatprep.subr.bf16.mxu0 0
        %1015 = vmatpush2.bf16.msra.mxu0 0
        %1016 = vmatprep.subr.bf16.mxu0 0
        %1017 = vmatpush2.bf16.msra.mxu0 0
        %1018 = vmatprep.subr.bf16.mxu0 0
        %1019 = vmatpush2.bf16.msra.mxu0 0
        %1020 = vmatprep.mubr.bf16.mxu0 0
        %1021 = vmatmul.mubr.bf16.gmra.mxu0 %v530
        %v1022 = vpop.f32.mrf.mxu0
        %v1023 = vadd.f32 %v407, %v1022
        %v1024 = vpop.f32.mrf.mxu0
        %v1025 = vadd.f32 %v411, %v1024
        %v1026 = vpop.f32.mrf.mxu0
        %v1027 = vadd.f32 %v407, %v1026
        %v1028 = vpop.f32.mrf.mxu0
        %v1029 = vadd.f32 %v411, %v1028
        %1030 = vmatprep.mubr.bf16.mxu0 0
        %1031 = vmatmul.mubr.bf16.gmra.mxu0 %v533
        %v1032 = vpop.f32.mrf.mxu0
        %v1033 = vadd.f32 %v407, %v1032
        %v1034 = vpop.f32.mrf.mxu0
        %v1035 = vadd.f32 %v411, %v1034
        %v1036 = vpop.f32.mrf.mxu0
        %v1037 = vadd.f32 %v407, %v1036
        %v1038 = vpop.f32.mrf.mxu0
        %v1039 = vadd.f32 %v411, %v1038
        %1040 = vmatprep.mubr.bf16.mxu0 0
        %1041 = vmatmul.mubr.bf16.gmra.mxu0 %v536
        %v1042 = vpop.f32.mrf.mxu0
        %v1043 = vadd.f32 %v407, %v1042
        %v1044 = vpop.f32.mrf.mxu0
        %v1045 = vadd.f32 %v411, %v1044
        %v1046 = vpop.f32.mrf.mxu0
        %v1047 = vadd.f32 %v407, %v1046
        %v1048 = vpop.f32.mrf.mxu0
        %v1049 = vadd.f32 %v411, %v1048
        %1050 = vmatprep.mubr.bf16.mxu0 0
        %1051 = vmatmul.mubr.bf16.gmra.mxu0 %v539
        %v1052 = vpop.f32.mrf.mxu0
        %v1053 = vadd.f32 %v407, %v1052
        %v1054 = vpop.f32.mrf.mxu0
        %v1055 = vadd.f32 %v411, %v1054
        %v1056 = vpop.f32.mrf.mxu0
        %v1057 = vadd.f32 %v407, %v1056
        %v1058 = vpop.f32.mrf.mxu0
        %v1059 = vadd.f32 %v411, %v1058
        %1060 = vmatprep.mubr.bf16.mxu0 0
        %1061 = vmatmul.mubr.bf16.gmra.mxu0 %v542
        %v1062 = vpop.f32.mrf.mxu0
        %v1063 = vadd.f32 %v407, %v1062
        %v1064 = vpop.f32.mrf.mxu0
        %v1065 = vadd.f32 %v411, %v1064
        %v1066 = vpop.f32.mrf.mxu0
        %v1067 = vadd.f32 %v407, %v1066
        %v1068 = vpop.f32.mrf.mxu0
        %v1069 = vadd.f32 %v411, %v1068
        %1070 = vmatprep.mubr.bf16.mxu0 0
        %1071 = vmatmul.mubr.bf16.gmra.mxu0 %v545
        %v1072 = vpop.f32.mrf.mxu0
        %v1073 = vadd.f32 %v407, %v1072
        %v1074 = vpop.f32.mrf.mxu0
        %v1075 = vadd.f32 %v411, %v1074
        %v1076 = vpop.f32.mrf.mxu0
        %v1077 = vadd.f32 %v407, %v1076
        %v1078 = vpop.f32.mrf.mxu0
        %v1079 = vadd.f32 %v411, %v1078
        %1080 = vmatprep.mubr.bf16.mxu0 0
        %1081 = vmatmul.mubr.bf16.gmra.mxu0 %v548
        %v1082 = vpop.f32.mrf.mxu0
        %v1083 = vadd.f32 %v407, %v1082
        %v1084 = vpop.f32.mrf.mxu0
        %v1085 = vadd.f32 %v411, %v1084
        %v1086 = vpop.f32.mrf.mxu0
        %v1087 = vadd.f32 %v407, %v1086
        %v1088 = vpop.f32.mrf.mxu0
        %v1089 = vadd.f32 %v411, %v1088
        %1090 = vmatprep.mubr.bf16.mxu0 0
        %1091 = vmatmul.mubr.bf16.gmra.mxu0 %v551
        %v1092 = vpop.f32.mrf.mxu0
        %v1093 = vadd.f32 %v407, %v1092
        %v1094 = vpop.f32.mrf.mxu0
        %v1095 = vadd.f32 %v411, %v1094
        %v1096 = vpop.f32.mrf.mxu0
        %v1097 = vadd.f32 %v407, %v1096
        %v1098 = vpop.f32.mrf.mxu0
        %v1099 = vadd.f32 %v411, %v1098
        %1100 = vmatprep.mubr.bf16.mxu0 0
        %1101 = vmatmul.mubr.bf16.gmra.mxu0 %v554
        %v1102 = vpop.f32.mrf.mxu0
        %v1103 = vadd.f32 %v407, %v1102
        %v1104 = vpop.f32.mrf.mxu0
        %v1105 = vadd.f32 %v411, %v1104
        %v1106 = vpop.f32.mrf.mxu0
        %v1107 = vadd.f32 %v407, %v1106
        %v1108 = vpop.f32.mrf.mxu0
        %v1109 = vadd.f32 %v411, %v1108
        %1110 = vmatprep.mubr.bf16.mxu0 0
        %1111 = vmatmul.mubr.bf16.gmra.mxu0 %v557
        %v1112 = vpop.f32.mrf.mxu0
        %v1113 = vadd.f32 %v407, %v1112
        %v1114 = vpop.f32.mrf.mxu0
        %v1115 = vadd.f32 %v411, %v1114
        %v1116 = vpop.f32.mrf.mxu0
        %v1117 = vadd.f32 %v407, %v1116
        %v1118 = vpop.f32.mrf.mxu0
        %v1119 = vadd.f32 %v411, %v1118
        %1120 = vmatprep.mubr.bf16.mxu0 0
        %1121 = vmatmul.mubr.bf16.gmra.mxu0 %v560
        %v1122 = vpop.f32.mrf.mxu0
        %v1123 = vadd.f32 %v407, %v1122
        %v1124 = vpop.f32.mrf.mxu0
        %v1125 = vadd.f32 %v411, %v1124
        %v1126 = vpop.f32.mrf.mxu0
        %v1127 = vadd.f32 %v407, %v1126
        %v1128 = vpop.f32.mrf.mxu0
        %v1129 = vadd.f32 %v411, %v1128
        %1130 = vmatprep.mubr.bf16.mxu0 0
        %1131 = vmatmul.mubr.bf16.gmra.mxu0 %v563
        %v1132 = vpop.f32.mrf.mxu0
        %v1133 = vadd.f32 %v407, %v1132
        %v1134 = vpop.f32.mrf.mxu0
        %v1135 = vadd.f32 %v411, %v1134
        %v1136 = vpop.f32.mrf.mxu0
        %v1137 = vadd.f32 %v407, %v1136
        %v1138 = vpop.f32.mrf.mxu0
        %v1139 = vadd.f32 %v411, %v1138
        %1140 = vmatprep.mubr.bf16.mxu0 0
        %1141 = vmatmul.mubr.bf16.gmra.mxu0 %v566
        %v1142 = vpop.f32.mrf.mxu0
        %v1143 = vadd.f32 %v407, %v1142
        %v1144 = vpop.f32.mrf.mxu0
        %v1145 = vadd.f32 %v411, %v1144
        %v1146 = vpop.f32.mrf.mxu0
        %v1147 = vadd.f32 %v407, %v1146
        %v1148 = vpop.f32.mrf.mxu0
        %v1149 = vadd.f32 %v411, %v1148
        %1150 = vmatprep.mubr.bf16.mxu0 0
        %1151 = vmatmul.mubr.bf16.gmra.mxu0 %v569
        %v1152 = vpop.f32.mrf.mxu0
        %v1153 = vadd.f32 %v407, %v1152
        %v1154 = vpop.f32.mrf.mxu0
        %v1155 = vadd.f32 %v411, %v1154
        %v1156 = vpop.f32.mrf.mxu0
        %v1157 = vadd.f32 %v407, %v1156
        %v1158 = vpop.f32.mrf.mxu0
        %v1159 = vadd.f32 %v411, %v1158
        %1160 = vmatprep.mubr.bf16.mxu0 0
        %1161 = vmatmul.mubr.bf16.gmra.mxu0 %v572
        %v1162 = vpop.f32.mrf.mxu0
        %v1163 = vadd.f32 %v407, %v1162
        %v1164 = vpop.f32.mrf.mxu0
        %v1165 = vadd.f32 %v411, %v1164
        %v1166 = vpop.f32.mrf.mxu0
        %v1167 = vadd.f32 %v407, %v1166
        %v1168 = vpop.f32.mrf.mxu0
        %v1169 = vadd.f32 %v411, %v1168
        %1170 = vmatprep.mubr.bf16.mxu0 0
        %1171 = vmatmul.mubr.bf16.gmra.mxu0 %v575
        %v1172 = vpop.f32.mrf.mxu0
        %v1173 = vadd.f32 %v407, %v1172
        %v1174 = vpop.f32.mrf.mxu0
        %v1175 = vadd.f32 %v411, %v1174
        %v1176 = vpop.f32.mrf.mxu0
        %v1177 = vadd.f32 %v407, %v1176
        %v1178 = vpop.f32.mrf.mxu0
        %v1179 = vadd.f32 %v411, %v1178
        %1180 = vdwg.mxu0
        %1181 = vmatprep.subr.bf16.mxu0 0
        %1182 = vmatpush1.bf16.msra.mxu0 0
        %1183 = vmatprep.subr.bf16.mxu0 0
        %1184 = vmatpush1.bf16.msra.mxu0 0
        %1185 = vmatprep.subr.bf16.mxu0 0
        %1186 = vmatpush1.bf16.msra.mxu0 0
        %1187 = vmatprep.subr.bf16.mxu0 0
        %1188 = vmatpush1.bf16.msra.mxu0 0
        %1189 = vmatprep.subr.bf16.mxu0 0
        %1190 = vmatpush1.bf16.msra.mxu0 0
        %1191 = vmatprep.subr.bf16.mxu0 0
        %1192 = vmatpush1.bf16.msra.mxu0 0
        %1193 = vmatprep.subr.bf16.mxu0 0
        %1194 = vmatpush1.bf16.msra.mxu0 0
        %1195 = vmatprep.subr.bf16.mxu0 %v600
        %1196 = vmatpush1.bf16.msra.mxu0 %v597
        %1197 = vmatprep.subr.bf16.mxu0 0
        %1198 = vmatpush2.bf16.msra.mxu0 0
        %1199 = vmatprep.subr.bf16.mxu0 0
        %1200 = vmatpush2.bf16.msra.mxu0 0
        %1201 = vmatprep.subr.bf16.mxu0 0
        %1202 = vmatpush2.bf16.msra.mxu0 0
        %1203 = vmatprep.subr.bf16.mxu0 0
        %1204 = vmatpush2.bf16.msra.mxu0 0
        %1205 = vmatprep.subr.bf16.mxu0 0
        %1206 = vmatpush2.bf16.msra.mxu0 0
        %1207 = vmatprep.subr.bf16.mxu0 0
        %1208 = vmatpush2.bf16.msra.mxu0 0
        %1209 = vmatprep.subr.bf16.mxu0 0
        %1210 = vmatpush2.bf16.msra.mxu0 0
        %1211 = vmatprep.subr.bf16.mxu0 0
        %1212 = vmatpush2.bf16.msra.mxu0 0
        %1213 = vmatprep.mubr.bf16.mxu0 0
        %1214 = vmatmul.mubr.bf16.gmra.mxu0 %v530
        %v1215 = vpop.f32.mrf.mxu0
        %v1216 = vadd.f32 %v415, %v1215
        %v1217 = vpop.f32.mrf.mxu0
        %v1218 = vadd.f32 %v419, %v1217
        %v1219 = vpop.f32.mrf.mxu0
        %v1220 = vadd.f32 %v415, %v1219
        %v1221 = vpop.f32.mrf.mxu0
        %v1222 = vadd.f32 %v419, %v1221
        %1223 = vmatprep.mubr.bf16.mxu0 0
        %1224 = vmatmul.mubr.bf16.gmra.mxu0 %v533
        %v1225 = vpop.f32.mrf.mxu0
        %v1226 = vadd.f32 %v415, %v1225
        %v1227 = vpop.f32.mrf.mxu0
        %v1228 = vadd.f32 %v419, %v1227
        %v1229 = vpop.f32.mrf.mxu0
        %v1230 = vadd.f32 %v415, %v1229
        %v1231 = vpop.f32.mrf.mxu0
        %v1232 = vadd.f32 %v419, %v1231
        %1233 = vmatprep.mubr.bf16.mxu0 0
        %1234 = vmatmul.mubr.bf16.gmra.mxu0 %v536
        %v1235 = vpop.f32.mrf.mxu0
        %v1236 = vadd.f32 %v415, %v1235
        %v1237 = vpop.f32.mrf.mxu0
        %v1238 = vadd.f32 %v419, %v1237
        %v1239 = vpop.f32.mrf.mxu0
        %v1240 = vadd.f32 %v415, %v1239
        %v1241 = vpop.f32.mrf.mxu0
        %v1242 = vadd.f32 %v419, %v1241
        %1243 = vmatprep.mubr.bf16.mxu0 0
        %1244 = vmatmul.mubr.bf16.gmra.mxu0 %v539
        %v1245 = vpop.f32.mrf.mxu0
        %v1246 = vadd.f32 %v415, %v1245
        %v1247 = vpop.f32.mrf.mxu0
        %v1248 = vadd.f32 %v419, %v1247
        %v1249 = vpop.f32.mrf.mxu0
        %v1250 = vadd.f32 %v415, %v1249
        %v1251 = vpop.f32.mrf.mxu0
        %v1252 = vadd.f32 %v419, %v1251
        %1253 = vmatprep.mubr.bf16.mxu0 0
        %1254 = vmatmul.mubr.bf16.gmra.mxu0 %v542
        %v1255 = vpop.f32.mrf.mxu0
        %v1256 = vadd.f32 %v415, %v1255
        %v1257 = vpop.f32.mrf.mxu0
        %v1258 = vadd.f32 %v419, %v1257
        %v1259 = vpop.f32.mrf.mxu0
        %v1260 = vadd.f32 %v415, %v1259
        %v1261 = vpop.f32.mrf.mxu0
        %v1262 = vadd.f32 %v419, %v1261
        %1263 = vmatprep.mubr.bf16.mxu0 0
        %1264 = vmatmul.mubr.bf16.gmra.mxu0 %v545
        %v1265 = vpop.f32.mrf.mxu0
        %v1266 = vadd.f32 %v415, %v1265
        %v1267 = vpop.f32.mrf.mxu0
        %v1268 = vadd.f32 %v419, %v1267
        %v1269 = vpop.f32.mrf.mxu0
        %v1270 = vadd.f32 %v415, %v1269
        %v1271 = vpop.f32.mrf.mxu0
        %v1272 = vadd.f32 %v419, %v1271
        %1273 = vmatprep.mubr.bf16.mxu0 0
        %1274 = vmatmul.mubr.bf16.gmra.mxu0 %v548
        %v1275 = vpop.f32.mrf.mxu0
        %v1276 = vadd.f32 %v415, %v1275
        %v1277 = vpop.f32.mrf.mxu0
        %v1278 = vadd.f32 %v419, %v1277
        %v1279 = vpop.f32.mrf.mxu0
        %v1280 = vadd.f32 %v415, %v1279
        %v1281 = vpop.f32.mrf.mxu0
        %v1282 = vadd.f32 %v419, %v1281
        %1283 = vmatprep.mubr.bf16.mxu0 0
        %1284 = vmatmul.mubr.bf16.gmra.mxu0 %v551
        %v1285 = vpop.f32.mrf.mxu0
        %v1286 = vadd.f32 %v415, %v1285
        %v1287 = vpop.f32.mrf.mxu0
        %v1288 = vadd.f32 %v419, %v1287
        %v1289 = vpop.f32.mrf.mxu0
        %v1290 = vadd.f32 %v415, %v1289
        %v1291 = vpop.f32.mrf.mxu0
        %v1292 = vadd.f32 %v419, %v1291
        %1293 = vmatprep.mubr.bf16.mxu0 0
        %1294 = vmatmul.mubr.bf16.gmra.mxu0 %v554
        %v1295 = vpop.f32.mrf.mxu0
        %v1296 = vadd.f32 %v415, %v1295
        %v1297 = vpop.f32.mrf.mxu0
        %v1298 = vadd.f32 %v419, %v1297
        %v1299 = vpop.f32.mrf.mxu0
        %v1300 = vadd.f32 %v415, %v1299
        %v1301 = vpop.f32.mrf.mxu0
        %v1302 = vadd.f32 %v419, %v1301
        %1303 = vmatprep.mubr.bf16.mxu0 0
        %1304 = vmatmul.mubr.bf16.gmra.mxu0 %v557
        %v1305 = vpop.f32.mrf.mxu0
        %v1306 = vadd.f32 %v415, %v1305
        %v1307 = vpop.f32.mrf.mxu0
        %v1308 = vadd.f32 %v419, %v1307
        %v1309 = vpop.f32.mrf.mxu0
        %v1310 = vadd.f32 %v415, %v1309
        %v1311 = vpop.f32.mrf.mxu0
        %v1312 = vadd.f32 %v419, %v1311
        %1313 = vmatprep.mubr.bf16.mxu0 0
        %1314 = vmatmul.mubr.bf16.gmra.mxu0 %v560
        %v1315 = vpop.f32.mrf.mxu0
        %v1316 = vadd.f32 %v415, %v1315
        %v1317 = vpop.f32.mrf.mxu0
        %v1318 = vadd.f32 %v419, %v1317
        %v1319 = vpop.f32.mrf.mxu0
        %v1320 = vadd.f32 %v415, %v1319
        %v1321 = vpop.f32.mrf.mxu0
        %v1322 = vadd.f32 %v419, %v1321
        %1323 = vmatprep.mubr.bf16.mxu0 0
        %1324 = vmatmul.mubr.bf16.gmra.mxu0 %v563
        %v1325 = vpop.f32.mrf.mxu0
        %v1326 = vadd.f32 %v415, %v1325
        %v1327 = vpop.f32.mrf.mxu0
        %v1328 = vadd.f32 %v419, %v1327
        %v1329 = vpop.f32.mrf.mxu0
        %v1330 = vadd.f32 %v415, %v1329
        %v1331 = vpop.f32.mrf.mxu0
        %v1332 = vadd.f32 %v419, %v1331
        %1333 = vmatprep.mubr.bf16.mxu0 0
        %1334 = vmatmul.mubr.bf16.gmra.mxu0 %v566
        %v1335 = vpop.f32.mrf.mxu0
        %v1336 = vadd.f32 %v415, %v1335
        %v1337 = vpop.f32.mrf.mxu0
        %v1338 = vadd.f32 %v419, %v1337
        %v1339 = vpop.f32.mrf.mxu0
        %v1340 = vadd.f32 %v415, %v1339
        %v1341 = vpop.f32.mrf.mxu0
        %v1342 = vadd.f32 %v419, %v1341
        %1343 = vmatprep.mubr.bf16.mxu0 0
        %1344 = vmatmul.mubr.bf16.gmra.mxu0 %v569
        %v1345 = vpop.f32.mrf.mxu0
        %v1346 = vadd.f32 %v415, %v1345
        %v1347 = vpop.f32.mrf.mxu0
        %v1348 = vadd.f32 %v419, %v1347
        %v1349 = vpop.f32.mrf.mxu0
        %v1350 = vadd.f32 %v415, %v1349
        %v1351 = vpop.f32.mrf.mxu0
        %v1352 = vadd.f32 %v419, %v1351
        %1353 = vmatprep.mubr.bf16.mxu0 0
        %1354 = vmatmul.mubr.bf16.gmra.mxu0 %v572
        %v1355 = vpop.f32.mrf.mxu0
        %v1356 = vadd.f32 %v415, %v1355
        %v1357 = vpop.f32.mrf.mxu0
        %v1358 = vadd.f32 %v419, %v1357
        %v1359 = vpop.f32.mrf.mxu0
        %v1360 = vadd.f32 %v415, %v1359
        %v1361 = vpop.f32.mrf.mxu0
        %v1362 = vadd.f32 %v419, %v1361
        %1363 = vmatprep.mubr.bf16.mxu0 0
        %1364 = vmatmul.mubr.bf16.gmra.mxu0 %v575
        %v1365 = vpop.f32.mrf.mxu0
        %v1366 = vadd.f32 %v415, %v1365
        %v1367 = vpop.f32.mrf.mxu0
        %v1368 = vadd.f32 %v419, %v1367
        %v1369 = vpop.f32.mrf.mxu0
        %v1370 = vadd.f32 %v415, %v1369
        %v1371 = vpop.f32.mrf.mxu0
        %v1372 = vadd.f32 %v419, %v1371
        %1373 = vdwg.mxu0
        %v1374 = vmax.f32 %v637, 0.0
        %v1375 = vmax.f32 %v639, 0.0
        %v1376 = vmax.f32 %v830, 0.0
        %v1377 = vmax.f32 %v832, 0.0
        %v1378 = vmax.f32 %v1023, 0.0
        %v1379 = vmax.f32 %v1025, 0.0
        %v1380 = vmax.f32 %v1216, 0.0
        %v1381 = vmax.f32 %v1218, 0.0
        %v1382 = vmax.f32 %v641, 0.0
        %v1383 = vmax.f32 %v643, 0.0
        %v1384 = vmax.f32 %v834, 0.0
        %v1385 = vmax.f32 %v836, 0.0
        %v1386 = vmax.f32 %v1027, 0.0
        %v1387 = vmax.f32 %v1029, 0.0
        %v1388 = vmax.f32 %v1220, 0.0
        %v1389 = vmax.f32 %v1222, 0.0
        %v1390 = vmax.f32 %v647, 0.0
        %v1391 = vmax.f32 %v649, 0.0
        %v1392 = vmax.f32 %v840, 0.0
        %v1393 = vmax.f32 %v842, 0.0
        %v1394 = vmax.f32 %v1033, 0.0
        %v1395 = vmax.f32 %v1035, 0.0
        %v1396 = vmax.f32 %v1226, 0.0
        %v1397 = vmax.f32 %v1228, 0.0
        %v1398 = vmax.f32 %v651, 0.0
        %v1399 = vmax.f32 %v653, 0.0
        %v1400 = vmax.f32 %v844, 0.0
        %v1401 = vmax.f32 %v846, 0.0
        %v1402 = vmax.f32 %v1037, 0.0
        %v1403 = vmax.f32 %v1039, 0.0
        %v1404 = vmax.f32 %v1230, 0.0
        %v1405 = vmax.f32 %v1232, 0.0
        %v1406 = vmax.f32 %v657, 0.0
        %v1407 = vmax.f32 %v659, 0.0
        %v1408 = vmax.f32 %v850, 0.0
        %v1409 = vmax.f32 %v852, 0.0
        %v1410 = vmax.f32 %v1043, 0.0
        %v1411 = vmax.f32 %v1045, 0.0
        %v1412 = vmax.f32 %v1236, 0.0
        %v1413 = vmax.f32 %v1238, 0.0
        %v1414 = vmax.f32 %v661, 0.0
        %v1415 = vmax.f32 %v663, 0.0
        %v1416 = vmax.f32 %v854, 0.0
        %v1417 = vmax.f32 %v856, 0.0
        %v1418 = vmax.f32 %v1047, 0.0
        %v1419 = vmax.f32 %v1049, 0.0
        %v1420 = vmax.f32 %v1240, 0.0
        %v1421 = vmax.f32 %v1242, 0.0
        %v1422 = vmax.f32 %v667, 0.0
        %v1423 = vmax.f32 %v669, 0.0
        %v1424 = vmax.f32 %v860, 0.0
        %v1425 = vmax.f32 %v862, 0.0
        %v1426 = vmax.f32 %v1053, 0.0
        %v1427 = vmax.f32 %v1055, 0.0
        %v1428 = vmax.f32 %v1246, 0.0
        %v1429 = vmax.f32 %v1248, 0.0
        %v1430 = vmax.f32 %v671, 0.0
        %v1431 = vmax.f32 %v673, 0.0
        %v1432 = vmax.f32 %v864, 0.0
        %v1433 = vmax.f32 %v866, 0.0
        %v1434 = vmax.f32 %v1057, 0.0
        %v1435 = vmax.f32 %v1059, 0.0
        %v1436 = vmax.f32 %v1250, 0.0
        %v1437 = vmax.f32 %v1252, 0.0
        %v1438 = vmax.f32 %v677, 0.0
        %v1439 = vmax.f32 %v679, 0.0
        %v1440 = vmax.f32 %v870, 0.0
        %v1441 = vmax.f32 %v872, 0.0
        %v1442 = vmax.f32 %v1063, 0.0
        %v1443 = vmax.f32 %v1065, 0.0
        %v1444 = vmax.f32 %v1256, 0.0
        %v1445 = vmax.f32 %v1258, 0.0
        %v1446 = vmax.f32 %v681, 0.0
        %v1447 = vmax.f32 %v683, 0.0
        %v1448 = vmax.f32 %v874, 0.0
        %v1449 = vmax.f32 %v876, 0.0
        %v1450 = vmax.f32 %v1067, 0.0
        %v1451 = vmax.f32 %v1069, 0.0
        %v1452 = vmax.f32 %v1260, 0.0
        %v1453 = vmax.f32 %v1262, 0.0
        %v1454 = vmax.f32 %v687, 0.0
        %v1455 = vmax.f32 %v689, 0.0
        %v1456 = vmax.f32 %v880, 0.0
        %v1457 = vmax.f32 %v882, 0.0
        %v1458 = vmax.f32 %v1073, 0.0
        %v1459 = vmax.f32 %v1075, 0.0
        %v1460 = vmax.f32 %v1266, 0.0
        %v1461 = vmax.f32 %v1268, 0.0
        %v1462 = vmax.f32 %v691, 0.0
        %v1463 = vmax.f32 %v693, 0.0
        %v1464 = vmax.f32 %v884, 0.0
        %v1465 = vmax.f32 %v886, 0.0
        %v1466 = vmax.f32 %v1077, 0.0
        %v1467 = vmax.f32 %v1079, 0.0
        %v1468 = vmax.f32 %v1270, 0.0
        %v1469 = vmax.f32 %v1272, 0.0
        %v1470 = vmax.f32 %v697, 0.0
        %v1471 = vmax.f32 %v699, 0.0
        %v1472 = vmax.f32 %v890, 0.0
        %v1473 = vmax.f32 %v892, 0.0
        %v1474 = vmax.f32 %v1083, 0.0
        %v1475 = vmax.f32 %v1085, 0.0
        %v1476 = vmax.f32 %v1276, 0.0
        %v1477 = vmax.f32 %v1278, 0.0
        %v1478 = vmax.f32 %v701, 0.0
        %v1479 = vmax.f32 %v703, 0.0
        %v1480 = vmax.f32 %v894, 0.0
        %v1481 = vmax.f32 %v896, 0.0
        %v1482 = vmax.f32 %v1087, 0.0
        %v1483 = vmax.f32 %v1089, 0.0
        %v1484 = vmax.f32 %v1280, 0.0
        %v1485 = vmax.f32 %v1282, 0.0
        %v1486 = vmax.f32 %v707, 0.0
        %v1487 = vmax.f32 %v709, 0.0
        %v1488 = vmax.f32 %v900, 0.0
        %v1489 = vmax.f32 %v902, 0.0
        %v1490 = vmax.f32 %v1093, 0.0
        %v1491 = vmax.f32 %v1095, 0.0
        %v1492 = vmax.f32 %v1286, 0.0
        %v1493 = vmax.f32 %v1288, 0.0
        %v1494 = vmax.f32 %v711, 0.0
        %v1495 = vmax.f32 %v713, 0.0
        %v1496 = vmax.f32 %v904, 0.0
        %v1497 = vmax.f32 %v906, 0.0
        %v1498 = vmax.f32 %v1097, 0.0
        %v1499 = vmax.f32 %v1099, 0.0
        %v1500 = vmax.f32 %v1290, 0.0
        %v1501 = vmax.f32 %v1292, 0.0
        %v1502 = vmax.f32 %v717, 0.0
        %v1503 = vmax.f32 %v719, 0.0
        %v1504 = vmax.f32 %v910, 0.0
        %v1505 = vmax.f32 %v912, 0.0
        %v1506 = vmax.f32 %v1103, 0.0
        %v1507 = vmax.f32 %v1105, 0.0
        %v1508 = vmax.f32 %v1296, 0.0
        %v1509 = vmax.f32 %v1298, 0.0
        %v1510 = vmax.f32 %v721, 0.0
        %v1511 = vmax.f32 %v723, 0.0
        %v1512 = vmax.f32 %v914, 0.0
        %v1513 = vmax.f32 %v916, 0.0
        %v1514 = vmax.f32 %v1107, 0.0
        %v1515 = vmax.f32 %v1109, 0.0
        %v1516 = vmax.f32 %v1300, 0.0
        %v1517 = vmax.f32 %v1302, 0.0
        %v1518 = vmax.f32 %v727, 0.0
        %v1519 = vmax.f32 %v729, 0.0
        %v1520 = vmax.f32 %v920, 0.0
        %v1521 = vmax.f32 %v922, 0.0
        %v1522 = vmax.f32 %v1113, 0.0
        %v1523 = vmax.f32 %v1115, 0.0
        %v1524 = vmax.f32 %v1306, 0.0
        %v1525 = vmax.f32 %v1308, 0.0
        %v1526 = vmax.f32 %v731, 0.0
        %v1527 = vmax.f32 %v733, 0.0
        %v1528 = vmax.f32 %v924, 0.0
        %v1529 = vmax.f32 %v926, 0.0
        %v1530 = vmax.f32 %v1117, 0.0
        %v1531 = vmax.f32 %v1119, 0.0
        %v1532 = vmax.f32 %v1310, 0.0
        %v1533 = vmax.f32 %v1312, 0.0
        %v1534 = vmax.f32 %v737, 0.0
        %v1535 = vmax.f32 %v739, 0.0
        %v1536 = vmax.f32 %v930, 0.0
        %v1537 = vmax.f32 %v932, 0.0
        %v1538 = vmax.f32 %v1123, 0.0
        %v1539 = vmax.f32 %v1125, 0.0
        %v1540 = vmax.f32 %v1316, 0.0
        %v1541 = vmax.f32 %v1318, 0.0
        %v1542 = vmax.f32 %v741, 0.0
        %v1543 = vmax.f32 %v743, 0.0
        %v1544 = vmax.f32 %v934, 0.0
        %v1545 = vmax.f32 %v936, 0.0
        %v1546 = vmax.f32 %v1127, 0.0
        %v1547 = vmax.f32 %v1129, 0.0
        %v1548 = vmax.f32 %v1320, 0.0
        %v1549 = vmax.f32 %v1322, 0.0
        %v1550 = vmax.f32 %v747, 0.0
        %v1551 = vmax.f32 %v749, 0.0
        %v1552 = vmax.f32 %v940, 0.0
        %v1553 = vmax.f32 %v942, 0.0
        %v1554 = vmax.f32 %v1133, 0.0
        %v1555 = vmax.f32 %v1135, 0.0
        %v1556 = vmax.f32 %v1326, 0.0
        %v1557 = vmax.f32 %v1328, 0.0
        %v1558 = vmax.f32 %v751, 0.0
        %v1559 = vmax.f32 %v753, 0.0
        %v1560 = vmax.f32 %v944, 0.0
        %v1561 = vmax.f32 %v946, 0.0
        %v1562 = vmax.f32 %v1137, 0.0
        %v1563 = vmax.f32 %v1139, 0.0
        %v1564 = vmax.f32 %v1330, 0.0
        %v1565 = vmax.f32 %v1332, 0.0
        %v1566 = vmax.f32 %v757, 0.0
        %v1567 = vmax.f32 %v759, 0.0
        %v1568 = vmax.f32 %v950, 0.0
        %v1569 = vmax.f32 %v952, 0.0
        %v1570 = vmax.f32 %v1143, 0.0
        %v1571 = vmax.f32 %v1145, 0.0
        %v1572 = vmax.f32 %v1336, 0.0
        %v1573 = vmax.f32 %v1338, 0.0
        %v1574 = vmax.f32 %v761, 0.0
        %v1575 = vmax.f32 %v763, 0.0
        %v1576 = vmax.f32 %v954, 0.0
        %v1577 = vmax.f32 %v956, 0.0
        %v1578 = vmax.f32 %v1147, 0.0
        %v1579 = vmax.f32 %v1149, 0.0
        %v1580 = vmax.f32 %v1340, 0.0
        %v1581 = vmax.f32 %v1342, 0.0
        %v1582 = vmax.f32 %v767, 0.0
        %v1583 = vmax.f32 %v769, 0.0
        %v1584 = vmax.f32 %v960, 0.0
        %v1585 = vmax.f32 %v962, 0.0
        %v1586 = vmax.f32 %v1153, 0.0
        %v1587 = vmax.f32 %v1155, 0.0
        %v1588 = vmax.f32 %v1346, 0.0
        %v1589 = vmax.f32 %v1348, 0.0
        %v1590 = vmax.f32 %v771, 0.0
        %v1591 = vmax.f32 %v773, 0.0
        %v1592 = vmax.f32 %v964, 0.0
        %v1593 = vmax.f32 %v966, 0.0
        %v1594 = vmax.f32 %v1157, 0.0
        %v1595 = vmax.f32 %v1159, 0.0
        %v1596 = vmax.f32 %v1350, 0.0
        %v1597 = vmax.f32 %v1352, 0.0
        %v1598 = vmax.f32 %v777, 0.0
        %v1599 = vmax.f32 %v779, 0.0
        %v1600 = vmax.f32 %v970, 0.0
        %v1601 = vmax.f32 %v972, 0.0
        %v1602 = vmax.f32 %v1163, 0.0
        %v1603 = vmax.f32 %v1165, 0.0
        %v1604 = vmax.f32 %v1356, 0.0
        %v1605 = vmax.f32 %v1358, 0.0
        %v1606 = vmax.f32 %v781, 0.0
        %v1607 = vmax.f32 %v783, 0.0
        %v1608 = vmax.f32 %v974, 0.0
        %v1609 = vmax.f32 %v976, 0.0
        %v1610 = vmax.f32 %v1167, 0.0
        %v1611 = vmax.f32 %v1169, 0.0
        %v1612 = vmax.f32 %v1360, 0.0
        %v1613 = vmax.f32 %v1362, 0.0
        %v1614 = vmax.f32 %v787, 0.0
        %v1615 = vmax.f32 %v789, 0.0
        %v1616 = vmax.f32 %v980, 0.0
        %v1617 = vmax.f32 %v982, 0.0
        %v1618 = vmax.f32 %v1173, 0.0
        %v1619 = vmax.f32 %v1175, 0.0
        %v1620 = vmax.f32 %v1366, 0.0
        %v1621 = vmax.f32 %v1368, 0.0
        %v1622 = vmax.f32 %v791, 0.0
        %v1623 = vmax.f32 %v793, 0.0
        %v1624 = vmax.f32 %v984, 0.0
        %v1625 = vmax.f32 %v986, 0.0
        %v1626 = vmax.f32 %v1177, 0.0
        %v1627 = vmax.f32 %v1179, 0.0
        %v1628 = vmax.f32 %v1370, 0.0
        %v1629 = vmax.f32 %v1372, 0.0
        %v1630 = vpack.c.bf16 %v1382, %v1374
        %v1631 = vpack.c.bf16 %v1383, %v1375
        %v1632 = vpack.c.bf16 %v1384, %v1376
        %v1633 = vpack.c.bf16 %v1385, %v1377
        %v1634 = vpack.c.bf16 %v1386, %v1378
        %v1635 = vpack.c.bf16 %v1387, %v1379
        %v1636 = vpack.c.bf16 %v1388, %v1380
        %v1637 = vpack.c.bf16 %v1389, %v1381
        %v1638 = vpack.c.bf16 %v1398, %v1390
        %v1639 = vpack.c.bf16 %v1399, %v1391
        %v1640 = vpack.c.bf16 %v1400, %v1392
        %v1641 = vpack.c.bf16 %v1401, %v1393
        %v1642 = vpack.c.bf16 %v1402, %v1394
        %v1643 = vpack.c.bf16 %v1403, %v1395
        %v1644 = vpack.c.bf16 %v1404, %v1396
        %v1645 = vpack.c.bf16 %v1405, %v1397
        %v1646 = vpack.c.bf16 %v1414, %v1406
        %v1647 = vpack.c.bf16 %v1415, %v1407
        %v1648 = vpack.c.bf16 %v1416, %v1408
        %v1649 = vpack.c.bf16 %v1417, %v1409
        %v1650 = vpack.c.bf16 %v1418, %v1410
        %v1651 = vpack.c.bf16 %v1419, %v1411
        %v1652 = vpack.c.bf16 %v1420, %v1412
        %v1653 = vpack.c.bf16 %v1421, %v1413
        %v1654 = vpack.c.bf16 %v1430, %v1422
        %v1655 = vpack.c.bf16 %v1431, %v1423
        %v1656 = vpack.c.bf16 %v1432, %v1424
        %v1657 = vpack.c.bf16 %v1433, %v1425
        %v1658 = vpack.c.bf16 %v1434, %v1426
        %v1659 = vpack.c.bf16 %v1435, %v1427
        %v1660 = vpack.c.bf16 %v1436, %v1428
        %v1661 = vpack.c.bf16 %v1437, %v1429
        %v1662 = vpack.c.bf16 %v1446, %v1438
        %v1663 = vpack.c.bf16 %v1447, %v1439
        %v1664 = vpack.c.bf16 %v1448, %v1440
        %v1665 = vpack.c.bf16 %v1449, %v1441
        %v1666 = vpack.c.bf16 %v1450, %v1442
        %v1667 = vpack.c.bf16 %v1451, %v1443
        %v1668 = vpack.c.bf16 %v1452, %v1444
        %v1669 = vpack.c.bf16 %v1453, %v1445
        %v1670 = vpack.c.bf16 %v1462, %v1454
        %v1671 = vpack.c.bf16 %v1463, %v1455
        %v1672 = vpack.c.bf16 %v1464, %v1456
        %v1673 = vpack.c.bf16 %v1465, %v1457
        %v1674 = vpack.c.bf16 %v1466, %v1458
        %v1675 = vpack.c.bf16 %v1467, %v1459
        %v1676 = vpack.c.bf16 %v1468, %v1460
        %v1677 = vpack.c.bf16 %v1469, %v1461
        %v1678 = vpack.c.bf16 %v1478, %v1470
        %v1679 = vpack.c.bf16 %v1479, %v1471
        %v1680 = vpack.c.bf16 %v1480, %v1472
        %v1681 = vpack.c.bf16 %v1481, %v1473
        %v1682 = vpack.c.bf16 %v1482, %v1474
        %v1683 = vpack.c.bf16 %v1483, %v1475
        %v1684 = vpack.c.bf16 %v1484, %v1476
        %v1685 = vpack.c.bf16 %v1485, %v1477
        %v1686 = vpack.c.bf16 %v1494, %v1486
        %v1687 = vpack.c.bf16 %v1495, %v1487
        %v1688 = vpack.c.bf16 %v1496, %v1488
        %v1689 = vpack.c.bf16 %v1497, %v1489
        %v1690 = vpack.c.bf16 %v1498, %v1490
        %v1691 = vpack.c.bf16 %v1499, %v1491
        %v1692 = vpack.c.bf16 %v1500, %v1492
        %v1693 = vpack.c.bf16 %v1501, %v1493
        %v1694 = vpack.c.bf16 %v1510, %v1502
        %v1695 = vpack.c.bf16 %v1511, %v1503
        %v1696 = vpack.c.bf16 %v1512, %v1504
        %v1697 = vpack.c.bf16 %v1513, %v1505
        %v1698 = vpack.c.bf16 %v1514, %v1506
        %v1699 = vpack.c.bf16 %v1515, %v1507
        %v1700 = vpack.c.bf16 %v1516, %v1508
        %v1701 = vpack.c.bf16 %v1517, %v1509
        %v1702 = vpack.c.bf16 %v1526, %v1518
        %v1703 = vpack.c.bf16 %v1527, %v1519
        %v1704 = vpack.c.bf16 %v1528, %v1520
        %v1705 = vpack.c.bf16 %v1529, %v1521
        %v1706 = vpack.c.bf16 %v1530, %v1522
        %v1707 = vpack.c.bf16 %v1531, %v1523
        %v1708 = vpack.c.bf16 %v1532, %v1524
        %v1709 = vpack.c.bf16 %v1533, %v1525
        %v1710 = vpack.c.bf16 %v1542, %v1534
        %v1711 = vpack.c.bf16 %v1543, %v1535
        %v1712 = vpack.c.bf16 %v1544, %v1536
        %v1713 = vpack.c.bf16 %v1545, %v1537
        %v1714 = vpack.c.bf16 %v1546, %v1538
        %v1715 = vpack.c.bf16 %v1547, %v1539
        %v1716 = vpack.c.bf16 %v1548, %v1540
        %v1717 = vpack.c.bf16 %v1549, %v1541
        %v1718 = vpack.c.bf16 %v1558, %v1550
        %v1719 = vpack.c.bf16 %v1559, %v1551
        %v1720 = vpack.c.bf16 %v1560, %v1552
        %v1721 = vpack.c.bf16 %v1561, %v1553
        %v1722 = vpack.c.bf16 %v1562, %v1554
        %v1723 = vpack.c.bf16 %v1563, %v1555
        %v1724 = vpack.c.bf16 %v1564, %v1556
        %v1725 = vpack.c.bf16 %v1565, %v1557
        %v1726 = vpack.c.bf16 %v1574, %v1566
        %v1727 = vpack.c.bf16 %v1575, %v1567
        %v1728 = vpack.c.bf16 %v1576, %v1568
        %v1729 = vpack.c.bf16 %v1577, %v1569
        %v1730 = vpack.c.bf16 %v1578, %v1570
        %v1731 = vpack.c.bf16 %v1579, %v1571
        %v1732 = vpack.c.bf16 %v1580, %v1572
        %v1733 = vpack.c.bf16 %v1581, %v1573
        %v1734 = vpack.c.bf16 %v1590, %v1582
        %v1735 = vpack.c.bf16 %v1591, %v1583
        %v1736 = vpack.c.bf16 %v1592, %v1584
        %v1737 = vpack.c.bf16 %v1593, %v1585
        %v1738 = vpack.c.bf16 %v1594, %v1586
        %v1739 = vpack.c.bf16 %v1595, %v1587
        %v1740 = vpack.c.bf16 %v1596, %v1588
        %v1741 = vpack.c.bf16 %v1597, %v1589
        %v1742 = vpack.c.bf16 %v1606, %v1598
        %v1743 = vpack.c.bf16 %v1607, %v1599
        %v1744 = vpack.c.bf16 %v1608, %v1600
        %v1745 = vpack.c.bf16 %v1609, %v1601
        %v1746 = vpack.c.bf16 %v1610, %v1602
        %v1747 = vpack.c.bf16 %v1611, %v1603
        %v1748 = vpack.c.bf16 %v1612, %v1604
        %v1749 = vpack.c.bf16 %v1613, %v1605
        %v1750 = vpack.c.bf16 %v1622, %v1614
        %v1751 = vpack.c.bf16 %v1623, %v1615
        %v1752 = vpack.c.bf16 %v1624, %v1616
        %v1753 = vpack.c.bf16 %v1625, %v1617
        %v1754 = vpack.c.bf16 %v1626, %v1618
        %v1755 = vpack.c.bf16 %v1627, %v1619
        %v1756 = vpack.c.bf16 %v1628, %v1620
        %v1757 = vpack.c.bf16 %v1629, %v1621
        %v1758 = vld [vmem:[#allocation2] sm:$0xff]
        %v1759 = vld [vmem:[#allocation2 + $0x8] sm:$0xff]
        %v1760 = vld [vmem:[#allocation2 + $0x10] sm:$0xff]
        %v1761 = vld [vmem:[#allocation2 + $0x18] sm:$0xff]
        %v1762 = vld [vmem:[#allocation2 + $0x20] sm:$0xff]
        %v1763 = vld [vmem:[#allocation2 + $0x28] sm:$0xff]
        %v1764 = vld [vmem:[#allocation2 + $0x30] sm:$0xff]
        %v1765 = vld [vmem:[#allocation2 + $0x38] sm:$0xff]
        %v1766 = vld [vmem:[#allocation2 + $0x40] sm:$0xff]
        %v1767 = vld [vmem:[#allocation2 + $0x48] sm:$0xff]
        %v1768 = vld [vmem:[#allocation2 + $0x50] sm:$0xff]
        %v1769 = vld [vmem:[#allocation2 + $0x58] sm:$0xff]
        %v1770 = vld [vmem:[#allocation2 + $0x60] sm:$0xff]
        %v1771 = vld [vmem:[#allocation2 + $0x68] sm:$0xff]
        %v1772 = vld [vmem:[#allocation2 + $0x70] sm:$0xff]
        %v1773 = vld [vmem:[#allocation2 + $0x78] sm:$0xff]
        %v1774 = vld [vmem:[#allocation2 + $0x80] sm:$0xff]
        %v1775 = vld [vmem:[#allocation2 + $0x88] sm:$0xff]
        %v1776 = vld [vmem:[#allocation2 + $0x90] sm:$0xff]
        %v1777 = vld [vmem:[#allocation2 + $0x98] sm:$0xff]
        %v1778 = vld [vmem:[#allocation2 + $0xa0] sm:$0xff]
        %v1779 = vld [vmem:[#allocation2 + $0xa8] sm:$0xff]
        %v1780 = vld [vmem:[#allocation2 + $0xb0] sm:$0xff]
        %v1781 = vld [vmem:[#allocation2 + $0xb8] sm:$0xff]
        %v1782 = vld [vmem:[#allocation2 + $0xc0] sm:$0xff]
        %v1783 = vld [vmem:[#allocation2 + $0xc8] sm:$0xff]
        %v1784 = vld [vmem:[#allocation2 + $0xd0] sm:$0xff]
        %v1785 = vld [vmem:[#allocation2 + $0xd8] sm:$0xff]
        %v1786 = vld [vmem:[#allocation2 + $0xe0] sm:$0xff]
        %v1787 = vld [vmem:[#allocation2 + $0xe8] sm:$0xff]
        %v1788 = vld [vmem:[#allocation2 + $0xf0] sm:$0xff]
        %v1789 = vld [vmem:[#allocation2 + $0xf8] sm:$0xff]
        %v1790 = vld [vmem:[#allocation2 + $0x100] sm:$0xff]
        %v1791 = vld [vmem:[#allocation2 + $0x108] sm:$0xff]
        %v1792 = vld [vmem:[#allocation2 + $0x110] sm:$0xff]
        %v1793 = vld [vmem:[#allocation2 + $0x118] sm:$0xff]
        %v1794 = vld [vmem:[#allocation2 + $0x120] sm:$0xff]
        %v1795 = vld [vmem:[#allocation2 + $0x128] sm:$0xff]
        %v1796 = vld [vmem:[#allocation2 + $0x130] sm:$0xff]
        %v1797 = vld [vmem:[#allocation2 + $0x138] sm:$0xff]
        %v1798 = vld [vmem:[#allocation2 + $0x140] sm:$0xff]
        %v1799 = vld [vmem:[#allocation2 + $0x148] sm:$0xff]
        %v1800 = vld [vmem:[#allocation2 + $0x150] sm:$0xff]
        %v1801 = vld [vmem:[#allocation2 + $0x158] sm:$0xff]
        %v1802 = vld [vmem:[#allocation2 + $0x160] sm:$0xff]
        %v1803 = vld [vmem:[#allocation2 + $0x168] sm:$0xff]
        %v1804 = vld [vmem:[#allocation2 + $0x170] sm:$0xff]
        %v1805 = vld [vmem:[#allocation2 + $0x178] sm:$0xff]
        %v1806 = vld [vmem:[#allocation2 + $0x180] sm:$0xff]
        %v1807 = vld [vmem:[#allocation2 + $0x188] sm:$0xff]
        %v1808 = vld [vmem:[#allocation2 + $0x190] sm:$0xff]
        %v1809 = vld [vmem:[#allocation2 + $0x198] sm:$0xff]
        %v1810 = vld [vmem:[#allocation2 + $0x1a0] sm:$0xff]
        %v1811 = vld [vmem:[#allocation2 + $0x1a8] sm:$0xff]
        %v1812 = vld [vmem:[#allocation2 + $0x1b0] sm:$0xff]
        %v1813 = vld [vmem:[#allocation2 + $0x1b8] sm:$0xff]
        %v1814 = vld [vmem:[#allocation2 + $0x1c0] sm:$0xff]
        %v1815 = vld [vmem:[#allocation2 + $0x1c8] sm:$0xff]
        %v1816 = vld [vmem:[#allocation2 + $0x1d0] sm:$0xff]
        %v1817 = vld [vmem:[#allocation2 + $0x1d8] sm:$0xff]
        %v1818 = vld [vmem:[#allocation2 + $0x1e0] sm:$0xff]
        %v1819 = vld [vmem:[#allocation2 + $0x1e8] sm:$0xff]
        %v1820 = vld [vmem:[#allocation2 + $0x1f0] sm:$0xff]
        %v1821 = vld [vmem:[#allocation2 + $0x1f8] sm:$0xff]
        %v1822 = vld [vmem:[#allocation2 + $0x200] sm:$0xff]
        %v1823 = vld [vmem:[#allocation2 + $0x208] sm:$0xff]
        %v1824 = vld [vmem:[#allocation2 + $0x210] sm:$0xff]
        %v1825 = vld [vmem:[#allocation2 + $0x218] sm:$0xff]
        %v1826 = vld [vmem:[#allocation2 + $0x220] sm:$0xff]
        %v1827 = vld [vmem:[#allocation2 + $0x228] sm:$0xff]
        %v1828 = vld [vmem:[#allocation2 + $0x230] sm:$0xff]
        %v1829 = vld [vmem:[#allocation2 + $0x238] sm:$0xff]
        %v1830 = vld [vmem:[#allocation2 + $0x240] sm:$0xff]
        %v1831 = vld [vmem:[#allocation2 + $0x248] sm:$0xff]
        %v1832 = vld [vmem:[#allocation2 + $0x250] sm:$0xff]
        %v1833 = vld [vmem:[#allocation2 + $0x258] sm:$0xff]
        %v1834 = vld [vmem:[#allocation2 + $0x260] sm:$0xff]
        %v1835 = vld [vmem:[#allocation2 + $0x268] sm:$0xff]
        %v1836 = vld [vmem:[#allocation2 + $0x270] sm:$0xff]
        %v1837 = vld [vmem:[#allocation2 + $0x278] sm:$0xff]
        %v1838 = vld [vmem:[#allocation2 + $0x280] sm:$0xff]
        %v1839 = vld [vmem:[#allocation2 + $0x288] sm:$0xff]
        %v1840 = vld [vmem:[#allocation2 + $0x290] sm:$0xff]
        %v1841 = vld [vmem:[#allocation2 + $0x298] sm:$0xff]
        %v1842 = vld [vmem:[#allocation2 + $0x2a0] sm:$0xff]
        %v1843 = vld [vmem:[#allocation2 + $0x2a8] sm:$0xff]
        %v1844 = vld [vmem:[#allocation2 + $0x2b0] sm:$0xff]
        %v1845 = vld [vmem:[#allocation2 + $0x2b8] sm:$0xff]
        %v1846 = vld [vmem:[#allocation2 + $0x2c0] sm:$0xff]
        %v1847 = vld [vmem:[#allocation2 + $0x2c8] sm:$0xff]
        %v1848 = vld [vmem:[#allocation2 + $0x2d0] sm:$0xff]
        %v1849 = vld [vmem:[#allocation2 + $0x2d8] sm:$0xff]
        %v1850 = vld [vmem:[#allocation2 + $0x2e0] sm:$0xff]
        %v1851 = vld [vmem:[#allocation2 + $0x2e8] sm:$0xff]
        %v1852 = vld [vmem:[#allocation2 + $0x2f0] sm:$0xff]
        %v1853 = vld [vmem:[#allocation2 + $0x2f8] sm:$0xff]
        %v1854 = vld [vmem:[#allocation2 + $0x300] sm:$0xff]
        %v1855 = vld [vmem:[#allocation2 + $0x308] sm:$0xff]
        %v1856 = vld [vmem:[#allocation2 + $0x310] sm:$0xff]
        %v1857 = vld [vmem:[#allocation2 + $0x318] sm:$0xff]
        %v1858 = vld [vmem:[#allocation2 + $0x320] sm:$0xff]
        %v1859 = vld [vmem:[#allocation2 + $0x328] sm:$0xff]
        %v1860 = vld [vmem:[#allocation2 + $0x330] sm:$0xff]
        %v1861 = vld [vmem:[#allocation2 + $0x338] sm:$0xff]
        %v1862 = vld [vmem:[#allocation2 + $0x340] sm:$0xff]
        %v1863 = vld [vmem:[#allocation2 + $0x348] sm:$0xff]
        %v1864 = vld [vmem:[#allocation2 + $0x350] sm:$0xff]
        %v1865 = vld [vmem:[#allocation2 + $0x358] sm:$0xff]
        %v1866 = vld [vmem:[#allocation2 + $0x360] sm:$0xff]
        %v1867 = vld [vmem:[#allocation2 + $0x368] sm:$0xff]
        %v1868 = vld [vmem:[#allocation2 + $0x370] sm:$0xff]
        %v1869 = vld [vmem:[#allocation2 + $0x378] sm:$0xff]
        %v1870 = vld [vmem:[#allocation2 + $0x380] sm:$0xff]
        %v1871 = vld [vmem:[#allocation2 + $0x388] sm:$0xff]
        %v1872 = vld [vmem:[#allocation2 + $0x390] sm:$0xff]
        %v1873 = vld [vmem:[#allocation2 + $0x398] sm:$0xff]
        %v1874 = vld [vmem:[#allocation2 + $0x3a0] sm:$0xff]
        %v1875 = vld [vmem:[#allocation2 + $0x3a8] sm:$0xff]
        %v1876 = vld [vmem:[#allocation2 + $0x3b0] sm:$0xff]
        %v1877 = vld [vmem:[#allocation2 + $0x3b8] sm:$0xff]
        %v1878 = vld [vmem:[#allocation2 + $0x3c0] sm:$0xff]
        %v1879 = vld [vmem:[#allocation2 + $0x3c8] sm:$0xff]
        %v1880 = vld [vmem:[#allocation2 + $0x3d0] sm:$0xff]
        %v1881 = vld [vmem:[#allocation2 + $0x3d8] sm:$0xff]
        %v1882 = vld [vmem:[#allocation2 + $0x3e0] sm:$0xff]
        %v1883 = vld [vmem:[#allocation2 + $0x3e8] sm:$0xff]
        %v1884 = vld [vmem:[#allocation2 + $0x3f0] sm:$0xff]
        %v1885 = vld [vmem:[#allocation2 + $0x3f8] sm:$0xff]
        %v1886 = vld [vmem:[%s4] sm:$0x3]
        %v1888 = vlaneseq
        %v1889 = vshrl.u32 %v1888, 7
        %v1890 = vsub.s32 0, %v1889
        %v1891 = vrot.slane %v1886, %v1890
        %v1892 = vlaneseq
        %v1893 = vshrl.u32 %v1892, 7
        %v1894 = vsub.s32 1, %v1893
        %v1895 = vrot.slane %v1886, %v1894
        %v2026 = vunpack.c.l.b16 %v1758
        %v2027 = vunpack.c.h.b16 %v1758
        %v2028 = vunpack.c.l.b16 %v1759
        %v2029 = vunpack.c.h.b16 %v1759
        %v2030 = vunpack.c.l.b16 %v1760
        %v2031 = vunpack.c.h.b16 %v1760
        %v2032 = vunpack.c.l.b16 %v1761
        %v2033 = vunpack.c.h.b16 %v1761
        %v2034 = vunpack.c.l.b16 %v1762
        %v2035 = vunpack.c.h.b16 %v1762
        %v2036 = vunpack.c.l.b16 %v1763
        %v2037 = vunpack.c.h.b16 %v1763
        %v2038 = vunpack.c.l.b16 %v1764
        %v2039 = vunpack.c.h.b16 %v1764
        %v2040 = vunpack.c.l.b16 %v1765
        %v2041 = vunpack.c.h.b16 %v1765
        %v2042 = vunpack.c.l.b16 %v1766
        %v2043 = vunpack.c.h.b16 %v1766
        %v2044 = vunpack.c.l.b16 %v1767
        %v2045 = vunpack.c.h.b16 %v1767
        %v2046 = vunpack.c.l.b16 %v1768
        %v2047 = vunpack.c.h.b16 %v1768
        %v2048 = vunpack.c.l.b16 %v1769
        %v2049 = vunpack.c.h.b16 %v1769
        %v2050 = vunpack.c.l.b16 %v1770
        %v2051 = vunpack.c.h.b16 %v1770
        %v2052 = vunpack.c.l.b16 %v1771
        %v2053 = vunpack.c.h.b16 %v1771
        %v2054 = vunpack.c.l.b16 %v1772
        %v2055 = vunpack.c.h.b16 %v1772
        %v2056 = vunpack.c.l.b16 %v1773
        %v2057 = vunpack.c.h.b16 %v1773
        %v2058 = vunpack.c.l.b16 %v1774
        %v2059 = vunpack.c.h.b16 %v1774
        %v2060 = vunpack.c.l.b16 %v1775
        %v2061 = vunpack.c.h.b16 %v1775
        %v2062 = vunpack.c.l.b16 %v1776
        %v2063 = vunpack.c.h.b16 %v1776
        %v2064 = vunpack.c.l.b16 %v1777
        %v2065 = vunpack.c.h.b16 %v1777
        %v2066 = vunpack.c.l.b16 %v1778
        %v2067 = vunpack.c.h.b16 %v1778
        %v2068 = vunpack.c.l.b16 %v1779
        %v2069 = vunpack.c.h.b16 %v1779
        %v2070 = vunpack.c.l.b16 %v1780
        %v2071 = vunpack.c.h.b16 %v1780
        %v2072 = vunpack.c.l.b16 %v1781
        %v2073 = vunpack.c.h.b16 %v1781
        %v2074 = vunpack.c.l.b16 %v1782
        %v2075 = vunpack.c.h.b16 %v1782
        %v2076 = vunpack.c.l.b16 %v1783
        %v2077 = vunpack.c.h.b16 %v1783
        %v2078 = vunpack.c.l.b16 %v1784
        %v2079 = vunpack.c.h.b16 %v1784
        %v2080 = vunpack.c.l.b16 %v1785
        %v2081 = vunpack.c.h.b16 %v1785
        %v2082 = vunpack.c.l.b16 %v1786
        %v2083 = vunpack.c.h.b16 %v1786
        %v2084 = vunpack.c.l.b16 %v1787
        %v2085 = vunpack.c.h.b16 %v1787
        %v2086 = vunpack.c.l.b16 %v1788
        %v2087 = vunpack.c.h.b16 %v1788
        %v2088 = vunpack.c.l.b16 %v1789
        %v2089 = vunpack.c.h.b16 %v1789
        %v2090 = vunpack.c.l.b16 %v1790
        %v2091 = vunpack.c.h.b16 %v1790
        %v2092 = vunpack.c.l.b16 %v1791
        %v2093 = vunpack.c.h.b16 %v1791
        %v2094 = vunpack.c.l.b16 %v1792
        %v2095 = vunpack.c.h.b16 %v1792
        %v2096 = vunpack.c.l.b16 %v1793
        %v2097 = vunpack.c.h.b16 %v1793
        %v2098 = vunpack.c.l.b16 %v1794
        %v2099 = vunpack.c.h.b16 %v1794
        %v2100 = vunpack.c.l.b16 %v1795
        %v2101 = vunpack.c.h.b16 %v1795
        %v2102 = vunpack.c.l.b16 %v1796
        %v2103 = vunpack.c.h.b16 %v1796
        %v2104 = vunpack.c.l.b16 %v1797
        %v2105 = vunpack.c.h.b16 %v1797
        %v2106 = vunpack.c.l.b16 %v1798
        %v2107 = vunpack.c.h.b16 %v1798
        %v2108 = vunpack.c.l.b16 %v1799
        %v2109 = vunpack.c.h.b16 %v1799
        %v2110 = vunpack.c.l.b16 %v1800
        %v2111 = vunpack.c.h.b16 %v1800
        %v2112 = vunpack.c.l.b16 %v1801
        %v2113 = vunpack.c.h.b16 %v1801
        %v2114 = vunpack.c.l.b16 %v1802
        %v2115 = vunpack.c.h.b16 %v1802
        %v2116 = vunpack.c.l.b16 %v1803
        %v2117 = vunpack.c.h.b16 %v1803
        %v2118 = vunpack.c.l.b16 %v1804
        %v2119 = vunpack.c.h.b16 %v1804
        %v2120 = vunpack.c.l.b16 %v1805
        %v2121 = vunpack.c.h.b16 %v1805
        %v2122 = vunpack.c.l.b16 %v1806
        %v2123 = vunpack.c.h.b16 %v1806
        %v2124 = vunpack.c.l.b16 %v1807
        %v2125 = vunpack.c.h.b16 %v1807
        %v2126 = vunpack.c.l.b16 %v1808
        %v2127 = vunpack.c.h.b16 %v1808
        %v2128 = vunpack.c.l.b16 %v1809
        %v2129 = vunpack.c.h.b16 %v1809
        %v2130 = vunpack.c.l.b16 %v1810
        %v2131 = vunpack.c.h.b16 %v1810
        %v2132 = vunpack.c.l.b16 %v1811
        %v2133 = vunpack.c.h.b16 %v1811
        %v2134 = vunpack.c.l.b16 %v1812
        %v2135 = vunpack.c.h.b16 %v1812
        %v2136 = vunpack.c.l.b16 %v1813
        %v2137 = vunpack.c.h.b16 %v1813
        %v2138 = vunpack.c.l.b16 %v1814
        %v2139 = vunpack.c.h.b16 %v1814
        %v2140 = vunpack.c.l.b16 %v1815
        %v2141 = vunpack.c.h.b16 %v1815
        %v2142 = vunpack.c.l.b16 %v1816
        %v2143 = vunpack.c.h.b16 %v1816
        %v2144 = vunpack.c.l.b16 %v1817
        %v2145 = vunpack.c.h.b16 %v1817
        %v2146 = vunpack.c.l.b16 %v1818
        %v2147 = vunpack.c.h.b16 %v1818
        %v2148 = vunpack.c.l.b16 %v1819
        %v2149 = vunpack.c.h.b16 %v1819
        %v2150 = vunpack.c.l.b16 %v1820
        %v2151 = vunpack.c.h.b16 %v1820
        %v2152 = vunpack.c.l.b16 %v1821
        %v2153 = vunpack.c.h.b16 %v1821
        %v2154 = vunpack.c.l.b16 %v1822
        %v2155 = vunpack.c.h.b16 %v1822
        %v2156 = vunpack.c.l.b16 %v1823
        %v2157 = vunpack.c.h.b16 %v1823
        %v2158 = vunpack.c.l.b16 %v1824
        %v2159 = vunpack.c.h.b16 %v1824
        %v2160 = vunpack.c.l.b16 %v1825
        %v2161 = vunpack.c.h.b16 %v1825
        %v2162 = vunpack.c.l.b16 %v1826
        %v2163 = vunpack.c.h.b16 %v1826
        %v2164 = vunpack.c.l.b16 %v1827
        %v2165 = vunpack.c.h.b16 %v1827
        %v2166 = vunpack.c.l.b16 %v1828
        %v2167 = vunpack.c.h.b16 %v1828
        %v2168 = vunpack.c.l.b16 %v1829
        %v2169 = vunpack.c.h.b16 %v1829
        %v2170 = vunpack.c.l.b16 %v1830
        %v2171 = vunpack.c.h.b16 %v1830
        %v2172 = vunpack.c.l.b16 %v1831
        %v2173 = vunpack.c.h.b16 %v1831
        %v2174 = vunpack.c.l.b16 %v1832
        %v2175 = vunpack.c.h.b16 %v1832
        %v2176 = vunpack.c.l.b16 %v1833
        %v2177 = vunpack.c.h.b16 %v1833
        %v2178 = vunpack.c.l.b16 %v1834
        %v2179 = vunpack.c.h.b16 %v1834
        %v2180 = vunpack.c.l.b16 %v1835
        %v2181 = vunpack.c.h.b16 %v1835
        %v2182 = vunpack.c.l.b16 %v1836
        %v2183 = vunpack.c.h.b16 %v1836
        %v2184 = vunpack.c.l.b16 %v1837
        %v2185 = vunpack.c.h.b16 %v1837
        %v2186 = vunpack.c.l.b16 %v1838
        %v2187 = vunpack.c.h.b16 %v1838
        %v2188 = vunpack.c.l.b16 %v1839
        %v2189 = vunpack.c.h.b16 %v1839
        %v2190 = vunpack.c.l.b16 %v1840
        %v2191 = vunpack.c.h.b16 %v1840
        %v2192 = vunpack.c.l.b16 %v1841
        %v2193 = vunpack.c.h.b16 %v1841
        %v2194 = vunpack.c.l.b16 %v1842
        %v2195 = vunpack.c.h.b16 %v1842
        %v2196 = vunpack.c.l.b16 %v1843
        %v2197 = vunpack.c.h.b16 %v1843
        %v2198 = vunpack.c.l.b16 %v1844
        %v2199 = vunpack.c.h.b16 %v1844
        %v2200 = vunpack.c.l.b16 %v1845
        %v2201 = vunpack.c.h.b16 %v1845
        %v2202 = vunpack.c.l.b16 %v1846
        %v2203 = vunpack.c.h.b16 %v1846
        %v2204 = vunpack.c.l.b16 %v1847
        %v2205 = vunpack.c.h.b16 %v1847
        %v2206 = vunpack.c.l.b16 %v1848
        %v2207 = vunpack.c.h.b16 %v1848
        %v2208 = vunpack.c.l.b16 %v1849
        %v2209 = vunpack.c.h.b16 %v1849
        %v2210 = vunpack.c.l.b16 %v1850
        %v2211 = vunpack.c.h.b16 %v1850
        %v2212 = vunpack.c.l.b16 %v1851
        %v2213 = vunpack.c.h.b16 %v1851
        %v2214 = vunpack.c.l.b16 %v1852
        %v2215 = vunpack.c.h.b16 %v1852
        %v2216 = vunpack.c.l.b16 %v1853
        %v2217 = vunpack.c.h.b16 %v1853
        %v2218 = vunpack.c.l.b16 %v1854
        %v2219 = vunpack.c.h.b16 %v1854
        %v2220 = vunpack.c.l.b16 %v1855
        %v2221 = vunpack.c.h.b16 %v1855
        %v2222 = vunpack.c.l.b16 %v1856
        %v2223 = vunpack.c.h.b16 %v1856
        %v2224 = vunpack.c.l.b16 %v1857
        %v2225 = vunpack.c.h.b16 %v1857
        %v2226 = vunpack.c.l.b16 %v1858
        %v2227 = vunpack.c.h.b16 %v1858
        %v2228 = vunpack.c.l.b16 %v1859
        %v2229 = vunpack.c.h.b16 %v1859
        %v2230 = vunpack.c.l.b16 %v1860
        %v2231 = vunpack.c.h.b16 %v1860
        %v2232 = vunpack.c.l.b16 %v1861
        %v2233 = vunpack.c.h.b16 %v1861
        %v2234 = vunpack.c.l.b16 %v1862
        %v2235 = vunpack.c.h.b16 %v1862
        %v2236 = vunpack.c.l.b16 %v1863
        %v2237 = vunpack.c.h.b16 %v1863
        %v2238 = vunpack.c.l.b16 %v1864
        %v2239 = vunpack.c.h.b16 %v1864
        %v2240 = vunpack.c.l.b16 %v1865
        %v2241 = vunpack.c.h.b16 %v1865
        %v2242 = vunpack.c.l.b16 %v1866
        %v2243 = vunpack.c.h.b16 %v1866
        %v2244 = vunpack.c.l.b16 %v1867
        %v2245 = vunpack.c.h.b16 %v1867
        %v2246 = vunpack.c.l.b16 %v1868
        %v2247 = vunpack.c.h.b16 %v1868
        %v2248 = vunpack.c.l.b16 %v1869
        %v2249 = vunpack.c.h.b16 %v1869
        %v2250 = vunpack.c.l.b16 %v1870
        %v2251 = vunpack.c.h.b16 %v1870
        %v2252 = vunpack.c.l.b16 %v1871
        %v2253 = vunpack.c.h.b16 %v1871
        %v2254 = vunpack.c.l.b16 %v1872
        %v2255 = vunpack.c.h.b16 %v1872
        %v2256 = vunpack.c.l.b16 %v1873
        %v2257 = vunpack.c.h.b16 %v1873
        %v2258 = vunpack.c.l.b16 %v1874
        %v2259 = vunpack.c.h.b16 %v1874
        %v2260 = vunpack.c.l.b16 %v1875
        %v2261 = vunpack.c.h.b16 %v1875
        %v2262 = vunpack.c.l.b16 %v1876
        %v2263 = vunpack.c.h.b16 %v1876
        %v2264 = vunpack.c.l.b16 %v1877
        %v2265 = vunpack.c.h.b16 %v1877
        %v2266 = vunpack.c.l.b16 %v1878
        %v2267 = vunpack.c.h.b16 %v1878
        %v2268 = vunpack.c.l.b16 %v1879
        %v2269 = vunpack.c.h.b16 %v1879
        %v2270 = vunpack.c.l.b16 %v1880
        %v2271 = vunpack.c.h.b16 %v1880
        %v2272 = vunpack.c.l.b16 %v1881
        %v2273 = vunpack.c.h.b16 %v1881
        %v2274 = vunpack.c.l.b16 %v1882
        %v2275 = vunpack.c.h.b16 %v1882
        %v2276 = vunpack.c.l.b16 %v1883
        %v2277 = vunpack.c.h.b16 %v1883
        %v2278 = vunpack.c.l.b16 %v1884
        %v2279 = vunpack.c.h.b16 %v1884
        %v2280 = vunpack.c.l.b16 %v1885
        %v2281 = vunpack.c.h.b16 %v1885
        %v2282 = vpack.c.b16 %v2028, %v2026
        %v2283 = vpack.c.b16 %v2029, %v2027
        %v2284 = vpack.c.b16 %v2032, %v2030
        %v2285 = vpack.c.b16 %v2033, %v2031
        %v2286 = vpack.c.b16 %v2036, %v2034
        %v2287 = vpack.c.b16 %v2037, %v2035
        %v2288 = vpack.c.b16 %v2040, %v2038
        %v2289 = vpack.c.b16 %v2041, %v2039
        %v2290 = vpack.c.b16 %v2044, %v2042
        %v2291 = vpack.c.b16 %v2045, %v2043
        %v2292 = vpack.c.b16 %v2048, %v2046
        %v2293 = vpack.c.b16 %v2049, %v2047
        %v2294 = vpack.c.b16 %v2052, %v2050
        %v2295 = vpack.c.b16 %v2053, %v2051
        %v2296 = vpack.c.b16 %v2056, %v2054
        %v2297 = vpack.c.b16 %v2057, %v2055
        %v2298 = vpack.c.b16 %v2060, %v2058
        %v2299 = vpack.c.b16 %v2061, %v2059
        %v2300 = vpack.c.b16 %v2064, %v2062
        %v2301 = vpack.c.b16 %v2065, %v2063
        %v2302 = vpack.c.b16 %v2068, %v2066
        %v2303 = vpack.c.b16 %v2069, %v2067
        %v2304 = vpack.c.b16 %v2072, %v2070
        %v2305 = vpack.c.b16 %v2073, %v2071
        %v2306 = vpack.c.b16 %v2076, %v2074
        %v2307 = vpack.c.b16 %v2077, %v2075
        %v2308 = vpack.c.b16 %v2080, %v2078
        %v2309 = vpack.c.b16 %v2081, %v2079
        %v2310 = vpack.c.b16 %v2084, %v2082
        %v2311 = vpack.c.b16 %v2085, %v2083
        %v2312 = vpack.c.b16 %v2088, %v2086
        %v2313 = vpack.c.b16 %v2089, %v2087
        %v2314 = vpack.c.b16 %v2092, %v2090
        %v2315 = vpack.c.b16 %v2093, %v2091
        %v2316 = vpack.c.b16 %v2096, %v2094
        %v2317 = vpack.c.b16 %v2097, %v2095
        %v2318 = vpack.c.b16 %v2100, %v2098
        %v2319 = vpack.c.b16 %v2101, %v2099
        %v2320 = vpack.c.b16 %v2104, %v2102
        %v2321 = vpack.c.b16 %v2105, %v2103
        %v2322 = vpack.c.b16 %v2108, %v2106
        %v2323 = vpack.c.b16 %v2109, %v2107
        %v2324 = vpack.c.b16 %v2112, %v2110
        %v2325 = vpack.c.b16 %v2113, %v2111
        %v2326 = vpack.c.b16 %v2116, %v2114
        %v2327 = vpack.c.b16 %v2117, %v2115
        %v2328 = vpack.c.b16 %v2120, %v2118
        %v2329 = vpack.c.b16 %v2121, %v2119
        %v2330 = vpack.c.b16 %v2124, %v2122
        %v2331 = vpack.c.b16 %v2125, %v2123
        %v2332 = vpack.c.b16 %v2128, %v2126
        %v2333 = vpack.c.b16 %v2129, %v2127
        %v2334 = vpack.c.b16 %v2132, %v2130
        %v2335 = vpack.c.b16 %v2133, %v2131
        %v2336 = vpack.c.b16 %v2136, %v2134
        %v2337 = vpack.c.b16 %v2137, %v2135
        %v2338 = vpack.c.b16 %v2140, %v2138
        %v2339 = vpack.c.b16 %v2141, %v2139
        %v2340 = vpack.c.b16 %v2144, %v2142
        %v2341 = vpack.c.b16 %v2145, %v2143
        %v2342 = vpack.c.b16 %v2148, %v2146
        %v2343 = vpack.c.b16 %v2149, %v2147
        %v2344 = vpack.c.b16 %v2152, %v2150
        %v2345 = vpack.c.b16 %v2153, %v2151
        %v2346 = vpack.c.b16 %v2156, %v2154
        %v2347 = vpack.c.b16 %v2157, %v2155
        %v2348 = vpack.c.b16 %v2160, %v2158
        %v2349 = vpack.c.b16 %v2161, %v2159
        %v2350 = vpack.c.b16 %v2164, %v2162
        %v2351 = vpack.c.b16 %v2165, %v2163
        %v2352 = vpack.c.b16 %v2168, %v2166
        %v2353 = vpack.c.b16 %v2169, %v2167
        %v2354 = vpack.c.b16 %v2172, %v2170
        %v2355 = vpack.c.b16 %v2173, %v2171
        %v2356 = vpack.c.b16 %v2176, %v2174
        %v2357 = vpack.c.b16 %v2177, %v2175
        %v2358 = vpack.c.b16 %v2180, %v2178
        %v2359 = vpack.c.b16 %v2181, %v2179
        %v2360 = vpack.c.b16 %v2184, %v2182
        %v2361 = vpack.c.b16 %v2185, %v2183
        %v2362 = vpack.c.b16 %v2188, %v2186
        %v2363 = vpack.c.b16 %v2189, %v2187
        %v2364 = vpack.c.b16 %v2192, %v2190
        %v2365 = vpack.c.b16 %v2193, %v2191
        %v2366 = vpack.c.b16 %v2196, %v2194
        %v2367 = vpack.c.b16 %v2197, %v2195
        %v2368 = vpack.c.b16 %v2200, %v2198
        %v2369 = vpack.c.b16 %v2201, %v2199
        %v2370 = vpack.c.b16 %v2204, %v2202
        %v2371 = vpack.c.b16 %v2205, %v2203
        %v2372 = vpack.c.b16 %v2208, %v2206
        %v2373 = vpack.c.b16 %v2209, %v2207
        %v2374 = vpack.c.b16 %v2212, %v2210
        %v2375 = vpack.c.b16 %v2213, %v2211
        %v2376 = vpack.c.b16 %v2216, %v2214
        %v2377 = vpack.c.b16 %v2217, %v2215
        %v2378 = vpack.c.b16 %v2220, %v2218
        %v2379 = vpack.c.b16 %v2221, %v2219
        %v2380 = vpack.c.b16 %v2224, %v2222
        %v2381 = vpack.c.b16 %v2225, %v2223
        %v2382 = vpack.c.b16 %v2228, %v2226
        %v2383 = vpack.c.b16 %v2229, %v2227
        %v2384 = vpack.c.b16 %v2232, %v2230
        %v2385 = vpack.c.b16 %v2233, %v2231
        %v2386 = vpack.c.b16 %v2236, %v2234
        %v2387 = vpack.c.b16 %v2237, %v2235
        %v2388 = vpack.c.b16 %v2240, %v2238
        %v2389 = vpack.c.b16 %v2241, %v2239
        %v2390 = vpack.c.b16 %v2244, %v2242
        %v2391 = vpack.c.b16 %v2245, %v2243
        %v2392 = vpack.c.b16 %v2248, %v2246
        %v2393 = vpack.c.b16 %v2249, %v2247
        %v2394 = vpack.c.b16 %v2252, %v2250
        %v2395 = vpack.c.b16 %v2253, %v2251
        %v2396 = vpack.c.b16 %v2256, %v2254
        %v2397 = vpack.c.b16 %v2257, %v2255
        %v2398 = vpack.c.b16 %v2260, %v2258
        %v2399 = vpack.c.b16 %v2261, %v2259
        %v2400 = vpack.c.b16 %v2264, %v2262
        %v2401 = vpack.c.b16 %v2265, %v2263
        %v2402 = vpack.c.b16 %v2268, %v2266
        %v2403 = vpack.c.b16 %v2269, %v2267
        %v2404 = vpack.c.b16 %v2272, %v2270
        %v2405 = vpack.c.b16 %v2273, %v2271
        %v2406 = vpack.c.b16 %v2276, %v2274
        %v2407 = vpack.c.b16 %v2277, %v2275
        %v2408 = vpack.c.b16 %v2280, %v2278
        %v2409 = vpack.c.b16 %v2281, %v2279
        %2538 = vmatprep.subr.bf16.mxu0 %v2297
        %2539 = vmatpush1.bf16.msra.mxu0 %v2296
        %2540 = vmatprep.subr.bf16.mxu0 %v2295
        %2541 = vmatpush1.bf16.msra.mxu0 %v2294
        %2542 = vmatprep.subr.bf16.mxu0 %v2293
        %2543 = vmatpush1.bf16.msra.mxu0 %v2292
        %2544 = vmatprep.subr.bf16.mxu0 %v2291
        %2545 = vmatpush1.bf16.msra.mxu0 %v2290
        %2546 = vmatprep.subr.bf16.mxu0 %v2289
        %2547 = vmatpush1.bf16.msra.mxu0 %v2288
        %2548 = vmatprep.subr.bf16.mxu0 %v2287
        %2549 = vmatpush1.bf16.msra.mxu0 %v2286
        %2550 = vmatprep.subr.bf16.mxu0 %v2285
        %2551 = vmatpush1.bf16.msra.mxu0 %v2284
        %2552 = vmatprep.subr.bf16.mxu0 %v2283
        %2553 = vmatpush1.bf16.msra.mxu0 %v2282
        %2554 = vmatprep.subr.bf16.mxu0 %v2313
        %2555 = vmatpush2.bf16.msra.mxu0 %v2312
        %2556 = vmatprep.subr.bf16.mxu0 %v2311
        %2557 = vmatpush2.bf16.msra.mxu0 %v2310
        %2558 = vmatprep.subr.bf16.mxu0 %v2309
        %2559 = vmatpush2.bf16.msra.mxu0 %v2308
        %2560 = vmatprep.subr.bf16.mxu0 %v2307
        %2561 = vmatpush2.bf16.msra.mxu0 %v2306
        %2562 = vmatprep.subr.bf16.mxu0 %v2305
        %2563 = vmatpush2.bf16.msra.mxu0 %v2304
        %2564 = vmatprep.subr.bf16.mxu0 %v2303
        %2565 = vmatpush2.bf16.msra.mxu0 %v2302
        %2566 = vmatprep.subr.bf16.mxu0 %v2301
        %2567 = vmatpush2.bf16.msra.mxu0 %v2300
        %2568 = vmatprep.subr.bf16.mxu0 %v2299
        %2569 = vmatpush2.bf16.msra.mxu0 %v2298
        %2570 = vmatprep.mubr.bf16.mxu0 %v1631
        %2571 = vmatmul.mubr.bf16.gmra.mxu0 %v1630
        %v2572 = vpop.f32.mrf.mxu0
        %v2573 = vadd.f32 %v1891, %v2572
        %v2574 = vpop.f32.mrf.mxu0
        %v2575 = vadd.f32 %v1895, %v2574
        %v2576 = vpop.f32.mrf.mxu0
        %v2577 = vadd.f32 %v1891, %v2576
        %v2578 = vpop.f32.mrf.mxu0
        %v2579 = vadd.f32 %v1895, %v2578
        %2580 = vmatprep.mubr.bf16.mxu0 %v1639
        %2581 = vmatmul.mubr.bf16.gmra.mxu0 %v1638
        %v2582 = vpop.f32.mrf.mxu0
        %v2583 = vadd.f32 %v1891, %v2582
        %v2584 = vpop.f32.mrf.mxu0
        %v2585 = vadd.f32 %v1895, %v2584
        %v2586 = vpop.f32.mrf.mxu0
        %v2587 = vadd.f32 %v1891, %v2586
        %v2588 = vpop.f32.mrf.mxu0
        %v2589 = vadd.f32 %v1895, %v2588
        %2590 = vmatprep.mubr.bf16.mxu0 %v1647
        %2591 = vmatmul.mubr.bf16.gmra.mxu0 %v1646
        %v2592 = vpop.f32.mrf.mxu0
        %v2593 = vadd.f32 %v1891, %v2592
        %v2594 = vpop.f32.mrf.mxu0
        %v2595 = vadd.f32 %v1895, %v2594
        %v2596 = vpop.f32.mrf.mxu0
        %v2597 = vadd.f32 %v1891, %v2596
        %v2598 = vpop.f32.mrf.mxu0
        %v2599 = vadd.f32 %v1895, %v2598
        %2600 = vmatprep.mubr.bf16.mxu0 %v1655
        %2601 = vmatmul.mubr.bf16.gmra.mxu0 %v1654
        %v2602 = vpop.f32.mrf.mxu0
        %v2603 = vadd.f32 %v1891, %v2602
        %v2604 = vpop.f32.mrf.mxu0
        %v2605 = vadd.f32 %v1895, %v2604
        %v2606 = vpop.f32.mrf.mxu0
        %v2607 = vadd.f32 %v1891, %v2606
        %v2608 = vpop.f32.mrf.mxu0
        %v2609 = vadd.f32 %v1895, %v2608
        %2610 = vmatprep.mubr.bf16.mxu0 %v1663
        %2611 = vmatmul.mubr.bf16.gmra.mxu0 %v1662
        %v2612 = vpop.f32.mrf.mxu0
        %v2613 = vadd.f32 %v1891, %v2612
        %v2614 = vpop.f32.mrf.mxu0
        %v2615 = vadd.f32 %v1895, %v2614
        %v2616 = vpop.f32.mrf.mxu0
        %v2617 = vadd.f32 %v1891, %v2616
        %v2618 = vpop.f32.mrf.mxu0
        %v2619 = vadd.f32 %v1895, %v2618
        %2620 = vmatprep.mubr.bf16.mxu0 %v1671
        %2621 = vmatmul.mubr.bf16.gmra.mxu0 %v1670
        %v2622 = vpop.f32.mrf.mxu0
        %v2623 = vadd.f32 %v1891, %v2622
        %v2624 = vpop.f32.mrf.mxu0
        %v2625 = vadd.f32 %v1895, %v2624
        %v2626 = vpop.f32.mrf.mxu0
        %v2627 = vadd.f32 %v1891, %v2626
        %v2628 = vpop.f32.mrf.mxu0
        %v2629 = vadd.f32 %v1895, %v2628
        %2630 = vmatprep.mubr.bf16.mxu0 %v1679
        %2631 = vmatmul.mubr.bf16.gmra.mxu0 %v1678
        %v2632 = vpop.f32.mrf.mxu0
        %v2633 = vadd.f32 %v1891, %v2632
        %v2634 = vpop.f32.mrf.mxu0
        %v2635 = vadd.f32 %v1895, %v2634
        %v2636 = vpop.f32.mrf.mxu0
        %v2637 = vadd.f32 %v1891, %v2636
        %v2638 = vpop.f32.mrf.mxu0
        %v2639 = vadd.f32 %v1895, %v2638
        %2640 = vmatprep.mubr.bf16.mxu0 %v1687
        %2641 = vmatmul.mubr.bf16.gmra.mxu0 %v1686
        %v2642 = vpop.f32.mrf.mxu0
        %v2643 = vadd.f32 %v1891, %v2642
        %v2644 = vpop.f32.mrf.mxu0
        %v2645 = vadd.f32 %v1895, %v2644
        %v2646 = vpop.f32.mrf.mxu0
        %v2647 = vadd.f32 %v1891, %v2646
        %v2648 = vpop.f32.mrf.mxu0
        %v2649 = vadd.f32 %v1895, %v2648
        %2650 = vmatprep.mubr.bf16.mxu0 %v1695
        %2651 = vmatmul.mubr.bf16.gmra.mxu0 %v1694
        %v2652 = vpop.f32.mrf.mxu0
        %v2653 = vadd.f32 %v1891, %v2652
        %v2654 = vpop.f32.mrf.mxu0
        %v2655 = vadd.f32 %v1895, %v2654
        %v2656 = vpop.f32.mrf.mxu0
        %v2657 = vadd.f32 %v1891, %v2656
        %v2658 = vpop.f32.mrf.mxu0
        %v2659 = vadd.f32 %v1895, %v2658
        %2660 = vmatprep.mubr.bf16.mxu0 %v1703
        %2661 = vmatmul.mubr.bf16.gmra.mxu0 %v1702
        %v2662 = vpop.f32.mrf.mxu0
        %v2663 = vadd.f32 %v1891, %v2662
        %v2664 = vpop.f32.mrf.mxu0
        %v2665 = vadd.f32 %v1895, %v2664
        %v2666 = vpop.f32.mrf.mxu0
        %v2667 = vadd.f32 %v1891, %v2666
        %v2668 = vpop.f32.mrf.mxu0
        %v2669 = vadd.f32 %v1895, %v2668
        %2670 = vmatprep.mubr.bf16.mxu0 %v1711
        %2671 = vmatmul.mubr.bf16.gmra.mxu0 %v1710
        %v2672 = vpop.f32.mrf.mxu0
        %v2673 = vadd.f32 %v1891, %v2672
        %v2674 = vpop.f32.mrf.mxu0
        %v2675 = vadd.f32 %v1895, %v2674
        %v2676 = vpop.f32.mrf.mxu0
        %v2677 = vadd.f32 %v1891, %v2676
        %v2678 = vpop.f32.mrf.mxu0
        %v2679 = vadd.f32 %v1895, %v2678
        %2680 = vmatprep.mubr.bf16.mxu0 %v1719
        %2681 = vmatmul.mubr.bf16.gmra.mxu0 %v1718
        %v2682 = vpop.f32.mrf.mxu0
        %v2683 = vadd.f32 %v1891, %v2682
        %v2684 = vpop.f32.mrf.mxu0
        %v2685 = vadd.f32 %v1895, %v2684
        %v2686 = vpop.f32.mrf.mxu0
        %v2687 = vadd.f32 %v1891, %v2686
        %v2688 = vpop.f32.mrf.mxu0
        %v2689 = vadd.f32 %v1895, %v2688
        %2690 = vmatprep.mubr.bf16.mxu0 %v1727
        %2691 = vmatmul.mubr.bf16.gmra.mxu0 %v1726
        %v2692 = vpop.f32.mrf.mxu0
        %v2693 = vadd.f32 %v1891, %v2692
        %v2694 = vpop.f32.mrf.mxu0
        %v2695 = vadd.f32 %v1895, %v2694
        %v2696 = vpop.f32.mrf.mxu0
        %v2697 = vadd.f32 %v1891, %v2696
        %v2698 = vpop.f32.mrf.mxu0
        %v2699 = vadd.f32 %v1895, %v2698
        %2700 = vmatprep.mubr.bf16.mxu0 %v1735
        %2701 = vmatmul.mubr.bf16.gmra.mxu0 %v1734
        %v2702 = vpop.f32.mrf.mxu0
        %v2703 = vadd.f32 %v1891, %v2702
        %v2704 = vpop.f32.mrf.mxu0
        %v2705 = vadd.f32 %v1895, %v2704
        %v2706 = vpop.f32.mrf.mxu0
        %v2707 = vadd.f32 %v1891, %v2706
        %v2708 = vpop.f32.mrf.mxu0
        %v2709 = vadd.f32 %v1895, %v2708
        %2710 = vmatprep.mubr.bf16.mxu0 %v1743
        %2711 = vmatmul.mubr.bf16.gmra.mxu0 %v1742
        %v2712 = vpop.f32.mrf.mxu0
        %v2713 = vadd.f32 %v1891, %v2712
        %v2714 = vpop.f32.mrf.mxu0
        %v2715 = vadd.f32 %v1895, %v2714
        %v2716 = vpop.f32.mrf.mxu0
        %v2717 = vadd.f32 %v1891, %v2716
        %v2718 = vpop.f32.mrf.mxu0
        %v2719 = vadd.f32 %v1895, %v2718
        %2720 = vmatprep.mubr.bf16.mxu0 %v1751
        %2721 = vmatmul.mubr.bf16.gmra.mxu0 %v1750
        %v2722 = vpop.f32.mrf.mxu0
        %v2723 = vadd.f32 %v1891, %v2722
        %v2724 = vpop.f32.mrf.mxu0
        %v2725 = vadd.f32 %v1895, %v2724
        %v2726 = vpop.f32.mrf.mxu0
        %v2727 = vadd.f32 %v1891, %v2726
        %v2728 = vpop.f32.mrf.mxu0
        %v2729 = vadd.f32 %v1895, %v2728
        %2730 = vdwg.mxu0
        %2731 = vmatprep.subr.bf16.mxu0 %v2329
        %2732 = vmatpush1.bf16.msra.mxu0 %v2328
        %2733 = vmatprep.subr.bf16.mxu0 %v2327
        %2734 = vmatpush1.bf16.msra.mxu0 %v2326
        %2735 = vmatprep.subr.bf16.mxu0 %v2325
        %2736 = vmatpush1.bf16.msra.mxu0 %v2324
        %2737 = vmatprep.subr.bf16.mxu0 %v2323
        %2738 = vmatpush1.bf16.msra.mxu0 %v2322
        %2739 = vmatprep.subr.bf16.mxu0 %v2321
        %2740 = vmatpush1.bf16.msra.mxu0 %v2320
        %2741 = vmatprep.subr.bf16.mxu0 %v2319
        %2742 = vmatpush1.bf16.msra.mxu0 %v2318
        %2743 = vmatprep.subr.bf16.mxu0 %v2317
        %2744 = vmatpush1.bf16.msra.mxu0 %v2316
        %2745 = vmatprep.subr.bf16.mxu0 %v2315
        %2746 = vmatpush1.bf16.msra.mxu0 %v2314
        %2747 = vmatprep.subr.bf16.mxu0 %v2345
        %2748 = vmatpush2.bf16.msra.mxu0 %v2344
        %2749 = vmatprep.subr.bf16.mxu0 %v2343
        %2750 = vmatpush2.bf16.msra.mxu0 %v2342
        %2751 = vmatprep.subr.bf16.mxu0 %v2341
        %2752 = vmatpush2.bf16.msra.mxu0 %v2340
        %2753 = vmatprep.subr.bf16.mxu0 %v2339
        %2754 = vmatpush2.bf16.msra.mxu0 %v2338
        %2755 = vmatprep.subr.bf16.mxu0 %v2337
        %2756 = vmatpush2.bf16.msra.mxu0 %v2336
        %2757 = vmatprep.subr.bf16.mxu0 %v2335
        %2758 = vmatpush2.bf16.msra.mxu0 %v2334
        %2759 = vmatprep.subr.bf16.mxu0 %v2333
        %2760 = vmatpush2.bf16.msra.mxu0 %v2332
        %2761 = vmatprep.subr.bf16.mxu0 %v2331
        %2762 = vmatpush2.bf16.msra.mxu0 %v2330
        %2763 = vmatprep.mubr.bf16.mxu0 %v1633
        %2764 = vmatmul.mubr.bf16.gmra.mxu0 %v1632
        %v2765 = vpop.f32.mrf.mxu0
        %v2766 = vadd.f32 %v2573, %v2765
        %v2767 = vpop.f32.mrf.mxu0
        %v2768 = vadd.f32 %v2575, %v2767
        %v2769 = vpop.f32.mrf.mxu0
        %v2770 = vadd.f32 %v2577, %v2769
        %v2771 = vpop.f32.mrf.mxu0
        %v2772 = vadd.f32 %v2579, %v2771
        %2773 = vmatprep.mubr.bf16.mxu0 %v1641
        %2774 = vmatmul.mubr.bf16.gmra.mxu0 %v1640
        %v2775 = vpop.f32.mrf.mxu0
        %v2776 = vadd.f32 %v2583, %v2775
        %v2777 = vpop.f32.mrf.mxu0
        %v2778 = vadd.f32 %v2585, %v2777
        %v2779 = vpop.f32.mrf.mxu0
        %v2780 = vadd.f32 %v2587, %v2779
        %v2781 = vpop.f32.mrf.mxu0
        %v2782 = vadd.f32 %v2589, %v2781
        %2783 = vmatprep.mubr.bf16.mxu0 %v1649
        %2784 = vmatmul.mubr.bf16.gmra.mxu0 %v1648
        %v2785 = vpop.f32.mrf.mxu0
        %v2786 = vadd.f32 %v2593, %v2785
        %v2787 = vpop.f32.mrf.mxu0
        %v2788 = vadd.f32 %v2595, %v2787
        %v2789 = vpop.f32.mrf.mxu0
        %v2790 = vadd.f32 %v2597, %v2789
        %v2791 = vpop.f32.mrf.mxu0
        %v2792 = vadd.f32 %v2599, %v2791
        %2793 = vmatprep.mubr.bf16.mxu0 %v1657
        %2794 = vmatmul.mubr.bf16.gmra.mxu0 %v1656
        %v2795 = vpop.f32.mrf.mxu0
        %v2796 = vadd.f32 %v2603, %v2795
        %v2797 = vpop.f32.mrf.mxu0
        %v2798 = vadd.f32 %v2605, %v2797
        %v2799 = vpop.f32.mrf.mxu0
        %v2800 = vadd.f32 %v2607, %v2799
        %v2801 = vpop.f32.mrf.mxu0
        %v2802 = vadd.f32 %v2609, %v2801
        %2803 = vmatprep.mubr.bf16.mxu0 %v1665
        %2804 = vmatmul.mubr.bf16.gmra.mxu0 %v1664
        %v2805 = vpop.f32.mrf.mxu0
        %v2806 = vadd.f32 %v2613, %v2805
        %v2807 = vpop.f32.mrf.mxu0
        %v2808 = vadd.f32 %v2615, %v2807
        %v2809 = vpop.f32.mrf.mxu0
        %v2810 = vadd.f32 %v2617, %v2809
        %v2811 = vpop.f32.mrf.mxu0
        %v2812 = vadd.f32 %v2619, %v2811
        %2813 = vmatprep.mubr.bf16.mxu0 %v1673
        %2814 = vmatmul.mubr.bf16.gmra.mxu0 %v1672
        %v2815 = vpop.f32.mrf.mxu0
        %v2816 = vadd.f32 %v2623, %v2815
        %v2817 = vpop.f32.mrf.mxu0
        %v2818 = vadd.f32 %v2625, %v2817
        %v2819 = vpop.f32.mrf.mxu0
        %v2820 = vadd.f32 %v2627, %v2819
        %v2821 = vpop.f32.mrf.mxu0
        %v2822 = vadd.f32 %v2629, %v2821
        %2823 = vmatprep.mubr.bf16.mxu0 %v1681
        %2824 = vmatmul.mubr.bf16.gmra.mxu0 %v1680
        %v2825 = vpop.f32.mrf.mxu0
        %v2826 = vadd.f32 %v2633, %v2825
        %v2827 = vpop.f32.mrf.mxu0
        %v2828 = vadd.f32 %v2635, %v2827
        %v2829 = vpop.f32.mrf.mxu0
        %v2830 = vadd.f32 %v2637, %v2829
        %v2831 = vpop.f32.mrf.mxu0
        %v2832 = vadd.f32 %v2639, %v2831
        %2833 = vmatprep.mubr.bf16.mxu0 %v1689
        %2834 = vmatmul.mubr.bf16.gmra.mxu0 %v1688
        %v2835 = vpop.f32.mrf.mxu0
        %v2836 = vadd.f32 %v2643, %v2835
        %v2837 = vpop.f32.mrf.mxu0
        %v2838 = vadd.f32 %v2645, %v2837
        %v2839 = vpop.f32.mrf.mxu0
        %v2840 = vadd.f32 %v2647, %v2839
        %v2841 = vpop.f32.mrf.mxu0
        %v2842 = vadd.f32 %v2649, %v2841
        %2843 = vmatprep.mubr.bf16.mxu0 %v1697
        %2844 = vmatmul.mubr.bf16.gmra.mxu0 %v1696
        %v2845 = vpop.f32.mrf.mxu0
        %v2846 = vadd.f32 %v2653, %v2845
        %v2847 = vpop.f32.mrf.mxu0
        %v2848 = vadd.f32 %v2655, %v2847
        %v2849 = vpop.f32.mrf.mxu0
        %v2850 = vadd.f32 %v2657, %v2849
        %v2851 = vpop.f32.mrf.mxu0
        %v2852 = vadd.f32 %v2659, %v2851
        %2853 = vmatprep.mubr.bf16.mxu0 %v1705
        %2854 = vmatmul.mubr.bf16.gmra.mxu0 %v1704
        %v2855 = vpop.f32.mrf.mxu0
        %v2856 = vadd.f32 %v2663, %v2855
        %v2857 = vpop.f32.mrf.mxu0
        %v2858 = vadd.f32 %v2665, %v2857
        %v2859 = vpop.f32.mrf.mxu0
        %v2860 = vadd.f32 %v2667, %v2859
        %v2861 = vpop.f32.mrf.mxu0
        %v2862 = vadd.f32 %v2669, %v2861
        %2863 = vmatprep.mubr.bf16.mxu0 %v1713
        %2864 = vmatmul.mubr.bf16.gmra.mxu0 %v1712
        %v2865 = vpop.f32.mrf.mxu0
        %v2866 = vadd.f32 %v2673, %v2865
        %v2867 = vpop.f32.mrf.mxu0
        %v2868 = vadd.f32 %v2675, %v2867
        %v2869 = vpop.f32.mrf.mxu0
        %v2870 = vadd.f32 %v2677, %v2869
        %v2871 = vpop.f32.mrf.mxu0
        %v2872 = vadd.f32 %v2679, %v2871
        %2873 = vmatprep.mubr.bf16.mxu0 %v1721
        %2874 = vmatmul.mubr.bf16.gmra.mxu0 %v1720
        %v2875 = vpop.f32.mrf.mxu0
        %v2876 = vadd.f32 %v2683, %v2875
        %v2877 = vpop.f32.mrf.mxu0
        %v2878 = vadd.f32 %v2685, %v2877
        %v2879 = vpop.f32.mrf.mxu0
        %v2880 = vadd.f32 %v2687, %v2879
        %v2881 = vpop.f32.mrf.mxu0
        %v2882 = vadd.f32 %v2689, %v2881
        %2883 = vmatprep.mubr.bf16.mxu0 %v1729
        %2884 = vmatmul.mubr.bf16.gmra.mxu0 %v1728
        %v2885 = vpop.f32.mrf.mxu0
        %v2886 = vadd.f32 %v2693, %v2885
        %v2887 = vpop.f32.mrf.mxu0
        %v2888 = vadd.f32 %v2695, %v2887
        %v2889 = vpop.f32.mrf.mxu0
        %v2890 = vadd.f32 %v2697, %v2889
        %v2891 = vpop.f32.mrf.mxu0
        %v2892 = vadd.f32 %v2699, %v2891
        %2893 = vmatprep.mubr.bf16.mxu0 %v1737
        %2894 = vmatmul.mubr.bf16.gmra.mxu0 %v1736
        %v2895 = vpop.f32.mrf.mxu0
        %v2896 = vadd.f32 %v2703, %v2895
        %v2897 = vpop.f32.mrf.mxu0
        %v2898 = vadd.f32 %v2705, %v2897
        %v2899 = vpop.f32.mrf.mxu0
        %v2900 = vadd.f32 %v2707, %v2899
        %v2901 = vpop.f32.mrf.mxu0
        %v2902 = vadd.f32 %v2709, %v2901
        %2903 = vmatprep.mubr.bf16.mxu0 %v1745
        %2904 = vmatmul.mubr.bf16.gmra.mxu0 %v1744
        %v2905 = vpop.f32.mrf.mxu0
        %v2906 = vadd.f32 %v2713, %v2905
        %v2907 = vpop.f32.mrf.mxu0
        %v2908 = vadd.f32 %v2715, %v2907
        %v2909 = vpop.f32.mrf.mxu0
        %v2910 = vadd.f32 %v2717, %v2909
        %v2911 = vpop.f32.mrf.mxu0
        %v2912 = vadd.f32 %v2719, %v2911
        %2913 = vmatprep.mubr.bf16.mxu0 %v1753
        %2914 = vmatmul.mubr.bf16.gmra.mxu0 %v1752
        %v2915 = vpop.f32.mrf.mxu0
        %v2916 = vadd.f32 %v2723, %v2915
        %v2917 = vpop.f32.mrf.mxu0
        %v2918 = vadd.f32 %v2725, %v2917
        %v2919 = vpop.f32.mrf.mxu0
        %v2920 = vadd.f32 %v2727, %v2919
        %v2921 = vpop.f32.mrf.mxu0
        %v2922 = vadd.f32 %v2729, %v2921
        %2923 = vdwg.mxu0
        %2924 = vmatprep.subr.bf16.mxu0 %v2361
        %2925 = vmatpush1.bf16.msra.mxu0 %v2360
        %2926 = vmatprep.subr.bf16.mxu0 %v2359
        %2927 = vmatpush1.bf16.msra.mxu0 %v2358
        %2928 = vmatprep.subr.bf16.mxu0 %v2357
        %2929 = vmatpush1.bf16.msra.mxu0 %v2356
        %2930 = vmatprep.subr.bf16.mxu0 %v2355
        %2931 = vmatpush1.bf16.msra.mxu0 %v2354
        %2932 = vmatprep.subr.bf16.mxu0 %v2353
        %2933 = vmatpush1.bf16.msra.mxu0 %v2352
        %2934 = vmatprep.subr.bf16.mxu0 %v2351
        %2935 = vmatpush1.bf16.msra.mxu0 %v2350
        %2936 = vmatprep.subr.bf16.mxu0 %v2349
        %2937 = vmatpush1.bf16.msra.mxu0 %v2348
        %2938 = vmatprep.subr.bf16.mxu0 %v2347
        %2939 = vmatpush1.bf16.msra.mxu0 %v2346
        %2940 = vmatprep.subr.bf16.mxu0 %v2377
        %2941 = vmatpush2.bf16.msra.mxu0 %v2376
        %2942 = vmatprep.subr.bf16.mxu0 %v2375
        %2943 = vmatpush2.bf16.msra.mxu0 %v2374
        %2944 = vmatprep.subr.bf16.mxu0 %v2373
        %2945 = vmatpush2.bf16.msra.mxu0 %v2372
        %2946 = vmatprep.subr.bf16.mxu0 %v2371
        %2947 = vmatpush2.bf16.msra.mxu0 %v2370
        %2948 = vmatprep.subr.bf16.mxu0 %v2369
        %2949 = vmatpush2.bf16.msra.mxu0 %v2368
        %2950 = vmatprep.subr.bf16.mxu0 %v2367
        %2951 = vmatpush2.bf16.msra.mxu0 %v2366
        %2952 = vmatprep.subr.bf16.mxu0 %v2365
        %2953 = vmatpush2.bf16.msra.mxu0 %v2364
        %2954 = vmatprep.subr.bf16.mxu0 %v2363
        %2955 = vmatpush2.bf16.msra.mxu0 %v2362
        %2956 = vmatprep.mubr.bf16.mxu0 %v1635
        %2957 = vmatmul.mubr.bf16.gmra.mxu0 %v1634
        %v2958 = vpop.f32.mrf.mxu0
        %v2959 = vadd.f32 %v2766, %v2958
        %v2960 = vpop.f32.mrf.mxu0
        %v2961 = vadd.f32 %v2768, %v2960
        %v2962 = vpop.f32.mrf.mxu0
        %v2963 = vadd.f32 %v2770, %v2962
        %v2964 = vpop.f32.mrf.mxu0
        %v2965 = vadd.f32 %v2772, %v2964
        %2966 = vmatprep.mubr.bf16.mxu0 %v1643
        %2967 = vmatmul.mubr.bf16.gmra.mxu0 %v1642
        %v2968 = vpop.f32.mrf.mxu0
        %v2969 = vadd.f32 %v2776, %v2968
        %v2970 = vpop.f32.mrf.mxu0
        %v2971 = vadd.f32 %v2778, %v2970
        %v2972 = vpop.f32.mrf.mxu0
        %v2973 = vadd.f32 %v2780, %v2972
        %v2974 = vpop.f32.mrf.mxu0
        %v2975 = vadd.f32 %v2782, %v2974
        %2976 = vmatprep.mubr.bf16.mxu0 %v1651
        %2977 = vmatmul.mubr.bf16.gmra.mxu0 %v1650
        %v2978 = vpop.f32.mrf.mxu0
        %v2979 = vadd.f32 %v2786, %v2978
        %v2980 = vpop.f32.mrf.mxu0
        %v2981 = vadd.f32 %v2788, %v2980
        %v2982 = vpop.f32.mrf.mxu0
        %v2983 = vadd.f32 %v2790, %v2982
        %v2984 = vpop.f32.mrf.mxu0
        %v2985 = vadd.f32 %v2792, %v2984
        %2986 = vmatprep.mubr.bf16.mxu0 %v1659
        %2987 = vmatmul.mubr.bf16.gmra.mxu0 %v1658
        %v2988 = vpop.f32.mrf.mxu0
        %v2989 = vadd.f32 %v2796, %v2988
        %v2990 = vpop.f32.mrf.mxu0
        %v2991 = vadd.f32 %v2798, %v2990
        %v2992 = vpop.f32.mrf.mxu0
        %v2993 = vadd.f32 %v2800, %v2992
        %v2994 = vpop.f32.mrf.mxu0
        %v2995 = vadd.f32 %v2802, %v2994
        %2996 = vmatprep.mubr.bf16.mxu0 %v1667
        %2997 = vmatmul.mubr.bf16.gmra.mxu0 %v1666
        %v2998 = vpop.f32.mrf.mxu0
        %v2999 = vadd.f32 %v2806, %v2998
        %v3000 = vpop.f32.mrf.mxu0
        %v3001 = vadd.f32 %v2808, %v3000
        %v3002 = vpop.f32.mrf.mxu0
        %v3003 = vadd.f32 %v2810, %v3002
        %v3004 = vpop.f32.mrf.mxu0
        %v3005 = vadd.f32 %v2812, %v3004
        %3006 = vmatprep.mubr.bf16.mxu0 %v1675
        %3007 = vmatmul.mubr.bf16.gmra.mxu0 %v1674
        %v3008 = vpop.f32.mrf.mxu0
        %v3009 = vadd.f32 %v2816, %v3008
        %v3010 = vpop.f32.mrf.mxu0
        %v3011 = vadd.f32 %v2818, %v3010
        %v3012 = vpop.f32.mrf.mxu0
        %v3013 = vadd.f32 %v2820, %v3012
        %v3014 = vpop.f32.mrf.mxu0
        %v3015 = vadd.f32 %v2822, %v3014
        %3016 = vmatprep.mubr.bf16.mxu0 %v1683
        %3017 = vmatmul.mubr.bf16.gmra.mxu0 %v1682
        %v3018 = vpop.f32.mrf.mxu0
        %v3019 = vadd.f32 %v2826, %v3018
        %v3020 = vpop.f32.mrf.mxu0
        %v3021 = vadd.f32 %v2828, %v3020
        %v3022 = vpop.f32.mrf.mxu0
        %v3023 = vadd.f32 %v2830, %v3022
        %v3024 = vpop.f32.mrf.mxu0
        %v3025 = vadd.f32 %v2832, %v3024
        %3026 = vmatprep.mubr.bf16.mxu0 %v1691
        %3027 = vmatmul.mubr.bf16.gmra.mxu0 %v1690
        %v3028 = vpop.f32.mrf.mxu0
        %v3029 = vadd.f32 %v2836, %v3028
        %v3030 = vpop.f32.mrf.mxu0
        %v3031 = vadd.f32 %v2838, %v3030
        %v3032 = vpop.f32.mrf.mxu0
        %v3033 = vadd.f32 %v2840, %v3032
        %v3034 = vpop.f32.mrf.mxu0
        %v3035 = vadd.f32 %v2842, %v3034
        %3036 = vmatprep.mubr.bf16.mxu0 %v1699
        %3037 = vmatmul.mubr.bf16.gmra.mxu0 %v1698
        %v3038 = vpop.f32.mrf.mxu0
        %v3039 = vadd.f32 %v2846, %v3038
        %v3040 = vpop.f32.mrf.mxu0
        %v3041 = vadd.f32 %v2848, %v3040
        %v3042 = vpop.f32.mrf.mxu0
        %v3043 = vadd.f32 %v2850, %v3042
        %v3044 = vpop.f32.mrf.mxu0
        %v3045 = vadd.f32 %v2852, %v3044
        %3046 = vmatprep.mubr.bf16.mxu0 %v1707
        %3047 = vmatmul.mubr.bf16.gmra.mxu0 %v1706
        %v3048 = vpop.f32.mrf.mxu0
        %v3049 = vadd.f32 %v2856, %v3048
        %v3050 = vpop.f32.mrf.mxu0
        %v3051 = vadd.f32 %v2858, %v3050
        %v3052 = vpop.f32.mrf.mxu0
        %v3053 = vadd.f32 %v2860, %v3052
        %v3054 = vpop.f32.mrf.mxu0
        %v3055 = vadd.f32 %v2862, %v3054
        %3056 = vmatprep.mubr.bf16.mxu0 %v1715
        %3057 = vmatmul.mubr.bf16.gmra.mxu0 %v1714
        %v3058 = vpop.f32.mrf.mxu0
        %v3059 = vadd.f32 %v2866, %v3058
        %v3060 = vpop.f32.mrf.mxu0
        %v3061 = vadd.f32 %v2868, %v3060
        %v3062 = vpop.f32.mrf.mxu0
        %v3063 = vadd.f32 %v2870, %v3062
        %v3064 = vpop.f32.mrf.mxu0
        %v3065 = vadd.f32 %v2872, %v3064
        %3066 = vmatprep.mubr.bf16.mxu0 %v1723
        %3067 = vmatmul.mubr.bf16.gmra.mxu0 %v1722
        %v3068 = vpop.f32.mrf.mxu0
        %v3069 = vadd.f32 %v2876, %v3068
        %v3070 = vpop.f32.mrf.mxu0
        %v3071 = vadd.f32 %v2878, %v3070
        %v3072 = vpop.f32.mrf.mxu0
        %v3073 = vadd.f32 %v2880, %v3072
        %v3074 = vpop.f32.mrf.mxu0
        %v3075 = vadd.f32 %v2882, %v3074
        %3076 = vmatprep.mubr.bf16.mxu0 %v1731
        %3077 = vmatmul.mubr.bf16.gmra.mxu0 %v1730
        %v3078 = vpop.f32.mrf.mxu0
        %v3079 = vadd.f32 %v2886, %v3078
        %v3080 = vpop.f32.mrf.mxu0
        %v3081 = vadd.f32 %v2888, %v3080
        %v3082 = vpop.f32.mrf.mxu0
        %v3083 = vadd.f32 %v2890, %v3082
        %v3084 = vpop.f32.mrf.mxu0
        %v3085 = vadd.f32 %v2892, %v3084
        %3086 = vmatprep.mubr.bf16.mxu0 %v1739
        %3087 = vmatmul.mubr.bf16.gmra.mxu0 %v1738
        %v3088 = vpop.f32.mrf.mxu0
        %v3089 = vadd.f32 %v2896, %v3088
        %v3090 = vpop.f32.mrf.mxu0
        %v3091 = vadd.f32 %v2898, %v3090
        %v3092 = vpop.f32.mrf.mxu0
        %v3093 = vadd.f32 %v2900, %v3092
        %v3094 = vpop.f32.mrf.mxu0
        %v3095 = vadd.f32 %v2902, %v3094
        %3096 = vmatprep.mubr.bf16.mxu0 %v1747
        %3097 = vmatmul.mubr.bf16.gmra.mxu0 %v1746
        %v3098 = vpop.f32.mrf.mxu0
        %v3099 = vadd.f32 %v2906, %v3098
        %v3100 = vpop.f32.mrf.mxu0
        %v3101 = vadd.f32 %v2908, %v3100
        %v3102 = vpop.f32.mrf.mxu0
        %v3103 = vadd.f32 %v2910, %v3102
        %v3104 = vpop.f32.mrf.mxu0
        %v3105 = vadd.f32 %v2912, %v3104
        %3106 = vmatprep.mubr.bf16.mxu0 %v1755
        %3107 = vmatmul.mubr.bf16.gmra.mxu0 %v1754
        %v3108 = vpop.f32.mrf.mxu0
        %v3109 = vadd.f32 %v2916, %v3108
        %v3110 = vpop.f32.mrf.mxu0
        %v3111 = vadd.f32 %v2918, %v3110
        %v3112 = vpop.f32.mrf.mxu0
        %v3113 = vadd.f32 %v2920, %v3112
        %v3114 = vpop.f32.mrf.mxu0
        %v3115 = vadd.f32 %v2922, %v3114
        %3116 = vdwg.mxu0
        %3117 = vmatprep.subr.bf16.mxu0 %v2393
        %3118 = vmatpush1.bf16.msra.mxu0 %v2392
        %3119 = vmatprep.subr.bf16.mxu0 %v2391
        %3120 = vmatpush1.bf16.msra.mxu0 %v2390
        %3121 = vmatprep.subr.bf16.mxu0 %v2389
        %3122 = vmatpush1.bf16.msra.mxu0 %v2388
        %3123 = vmatprep.subr.bf16.mxu0 %v2387
        %3124 = vmatpush1.bf16.msra.mxu0 %v2386
        %3125 = vmatprep.subr.bf16.mxu0 %v2385
        %3126 = vmatpush1.bf16.msra.mxu0 %v2384
        %3127 = vmatprep.subr.bf16.mxu0 %v2383
        %3128 = vmatpush1.bf16.msra.mxu0 %v2382
        %3129 = vmatprep.subr.bf16.mxu0 %v2381
        %3130 = vmatpush1.bf16.msra.mxu0 %v2380
        %3131 = vmatprep.subr.bf16.mxu0 %v2379
        %3132 = vmatpush1.bf16.msra.mxu0 %v2378
        %3133 = vmatprep.subr.bf16.mxu0 %v2409
        %3134 = vmatpush2.bf16.msra.mxu0 %v2408
        %3135 = vmatprep.subr.bf16.mxu0 %v2407
        %3136 = vmatpush2.bf16.msra.mxu0 %v2406
        %3137 = vmatprep.subr.bf16.mxu0 %v2405
        %3138 = vmatpush2.bf16.msra.mxu0 %v2404
        %3139 = vmatprep.subr.bf16.mxu0 %v2403
        %3140 = vmatpush2.bf16.msra.mxu0 %v2402
        %3141 = vmatprep.subr.bf16.mxu0 %v2401
        %3142 = vmatpush2.bf16.msra.mxu0 %v2400
        %3143 = vmatprep.subr.bf16.mxu0 %v2399
        %3144 = vmatpush2.bf16.msra.mxu0 %v2398
        %3145 = vmatprep.subr.bf16.mxu0 %v2397
        %3146 = vmatpush2.bf16.msra.mxu0 %v2396
        %3147 = vmatprep.subr.bf16.mxu0 %v2395
        %3148 = vmatpush2.bf16.msra.mxu0 %v2394
        %3149 = vmatprep.mubr.bf16.mxu0 %v1637
        %3150 = vmatmul.mubr.bf16.gmra.mxu0 %v1636
        %v3151 = vpop.f32.mrf.mxu0
        %v3152 = vadd.f32 %v2959, %v3151
        %v3153 = vpop.f32.mrf.mxu0
        %v3154 = vadd.f32 %v2961, %v3153
        %v3155 = vpop.f32.mrf.mxu0
        %v3156 = vadd.f32 %v2963, %v3155
        %v3157 = vpop.f32.mrf.mxu0
        %v3158 = vadd.f32 %v2965, %v3157
        %3159 = vmatprep.mubr.bf16.mxu0 %v1645
        %3160 = vmatmul.mubr.bf16.gmra.mxu0 %v1644
        %v3161 = vpop.f32.mrf.mxu0
        %v3162 = vadd.f32 %v2969, %v3161
        %v3163 = vpop.f32.mrf.mxu0
        %v3164 = vadd.f32 %v2971, %v3163
        %v3165 = vpop.f32.mrf.mxu0
        %v3166 = vadd.f32 %v2973, %v3165
        %v3167 = vpop.f32.mrf.mxu0
        %v3168 = vadd.f32 %v2975, %v3167
        %3169 = vmatprep.mubr.bf16.mxu0 %v1653
        %3170 = vmatmul.mubr.bf16.gmra.mxu0 %v1652
        %v3171 = vpop.f32.mrf.mxu0
        %v3172 = vadd.f32 %v2979, %v3171
        %v3173 = vpop.f32.mrf.mxu0
        %v3174 = vadd.f32 %v2981, %v3173
        %v3175 = vpop.f32.mrf.mxu0
        %v3176 = vadd.f32 %v2983, %v3175
        %v3177 = vpop.f32.mrf.mxu0
        %v3178 = vadd.f32 %v2985, %v3177
        %3179 = vmatprep.mubr.bf16.mxu0 %v1661
        %3180 = vmatmul.mubr.bf16.gmra.mxu0 %v1660
        %v3181 = vpop.f32.mrf.mxu0
        %v3182 = vadd.f32 %v2989, %v3181
        %v3183 = vpop.f32.mrf.mxu0
        %v3184 = vadd.f32 %v2991, %v3183
        %v3185 = vpop.f32.mrf.mxu0
        %v3186 = vadd.f32 %v2993, %v3185
        %v3187 = vpop.f32.mrf.mxu0
        %v3188 = vadd.f32 %v2995, %v3187
        %3189 = vmatprep.mubr.bf16.mxu0 %v1669
        %3190 = vmatmul.mubr.bf16.gmra.mxu0 %v1668
        %v3191 = vpop.f32.mrf.mxu0
        %v3192 = vadd.f32 %v2999, %v3191
        %v3193 = vpop.f32.mrf.mxu0
        %v3194 = vadd.f32 %v3001, %v3193
        %v3195 = vpop.f32.mrf.mxu0
        %v3196 = vadd.f32 %v3003, %v3195
        %v3197 = vpop.f32.mrf.mxu0
        %v3198 = vadd.f32 %v3005, %v3197
        %3199 = vmatprep.mubr.bf16.mxu0 %v1677
        %3200 = vmatmul.mubr.bf16.gmra.mxu0 %v1676
        %v3201 = vpop.f32.mrf.mxu0
        %v3202 = vadd.f32 %v3009, %v3201
        %v3203 = vpop.f32.mrf.mxu0
        %v3204 = vadd.f32 %v3011, %v3203
        %v3205 = vpop.f32.mrf.mxu0
        %v3206 = vadd.f32 %v3013, %v3205
        %v3207 = vpop.f32.mrf.mxu0
        %v3208 = vadd.f32 %v3015, %v3207
        %3209 = vmatprep.mubr.bf16.mxu0 %v1685
        %3210 = vmatmul.mubr.bf16.gmra.mxu0 %v1684
        %v3211 = vpop.f32.mrf.mxu0
        %v3212 = vadd.f32 %v3019, %v3211
        %v3213 = vpop.f32.mrf.mxu0
        %v3214 = vadd.f32 %v3021, %v3213
        %v3215 = vpop.f32.mrf.mxu0
        %v3216 = vadd.f32 %v3023, %v3215
        %v3217 = vpop.f32.mrf.mxu0
        %v3218 = vadd.f32 %v3025, %v3217
        %3219 = vmatprep.mubr.bf16.mxu0 %v1693
        %3220 = vmatmul.mubr.bf16.gmra.mxu0 %v1692
        %v3221 = vpop.f32.mrf.mxu0
        %v3222 = vadd.f32 %v3029, %v3221
        %v3223 = vpop.f32.mrf.mxu0
        %v3224 = vadd.f32 %v3031, %v3223
        %v3225 = vpop.f32.mrf.mxu0
        %v3226 = vadd.f32 %v3033, %v3225
        %v3227 = vpop.f32.mrf.mxu0
        %v3228 = vadd.f32 %v3035, %v3227
        %3229 = vmatprep.mubr.bf16.mxu0 %v1701
        %3230 = vmatmul.mubr.bf16.gmra.mxu0 %v1700
        %v3231 = vpop.f32.mrf.mxu0
        %v3232 = vadd.f32 %v3039, %v3231
        %v3233 = vpop.f32.mrf.mxu0
        %v3234 = vadd.f32 %v3041, %v3233
        %v3235 = vpop.f32.mrf.mxu0
        %v3236 = vadd.f32 %v3043, %v3235
        %v3237 = vpop.f32.mrf.mxu0
        %v3238 = vadd.f32 %v3045, %v3237
        %3239 = vmatprep.mubr.bf16.mxu0 %v1709
        %3240 = vmatmul.mubr.bf16.gmra.mxu0 %v1708
        %v3241 = vpop.f32.mrf.mxu0
        %v3242 = vadd.f32 %v3049, %v3241
        %v3243 = vpop.f32.mrf.mxu0
        %v3244 = vadd.f32 %v3051, %v3243
        %v3245 = vpop.f32.mrf.mxu0
        %v3246 = vadd.f32 %v3053, %v3245
        %v3247 = vpop.f32.mrf.mxu0
        %v3248 = vadd.f32 %v3055, %v3247
        %3249 = vmatprep.mubr.bf16.mxu0 %v1717
        %3250 = vmatmul.mubr.bf16.gmra.mxu0 %v1716
        %v3251 = vpop.f32.mrf.mxu0
        %v3252 = vadd.f32 %v3059, %v3251
        %v3253 = vpop.f32.mrf.mxu0
        %v3254 = vadd.f32 %v3061, %v3253
        %v3255 = vpop.f32.mrf.mxu0
        %v3256 = vadd.f32 %v3063, %v3255
        %v3257 = vpop.f32.mrf.mxu0
        %v3258 = vadd.f32 %v3065, %v3257
        %3259 = vmatprep.mubr.bf16.mxu0 %v1725
        %3260 = vmatmul.mubr.bf16.gmra.mxu0 %v1724
        %v3261 = vpop.f32.mrf.mxu0
        %v3262 = vadd.f32 %v3069, %v3261
        %v3263 = vpop.f32.mrf.mxu0
        %v3264 = vadd.f32 %v3071, %v3263
        %v3265 = vpop.f32.mrf.mxu0
        %v3266 = vadd.f32 %v3073, %v3265
        %v3267 = vpop.f32.mrf.mxu0
        %v3268 = vadd.f32 %v3075, %v3267
        %3269 = vmatprep.mubr.bf16.mxu0 %v1733
        %3270 = vmatmul.mubr.bf16.gmra.mxu0 %v1732
        %v3271 = vpop.f32.mrf.mxu0
        %v3272 = vadd.f32 %v3079, %v3271
        %v3273 = vpop.f32.mrf.mxu0
        %v3274 = vadd.f32 %v3081, %v3273
        %v3275 = vpop.f32.mrf.mxu0
        %v3276 = vadd.f32 %v3083, %v3275
        %v3277 = vpop.f32.mrf.mxu0
        %v3278 = vadd.f32 %v3085, %v3277
        %3279 = vmatprep.mubr.bf16.mxu0 %v1741
        %3280 = vmatmul.mubr.bf16.gmra.mxu0 %v1740
        %v3281 = vpop.f32.mrf.mxu0
        %v3282 = vadd.f32 %v3089, %v3281
        %v3283 = vpop.f32.mrf.mxu0
        %v3284 = vadd.f32 %v3091, %v3283
        %v3285 = vpop.f32.mrf.mxu0
        %v3286 = vadd.f32 %v3093, %v3285
        %v3287 = vpop.f32.mrf.mxu0
        %v3288 = vadd.f32 %v3095, %v3287
        %3289 = vmatprep.mubr.bf16.mxu0 %v1749
        %3290 = vmatmul.mubr.bf16.gmra.mxu0 %v1748
        %v3291 = vpop.f32.mrf.mxu0
        %v3292 = vadd.f32 %v3099, %v3291
        %v3293 = vpop.f32.mrf.mxu0
        %v3294 = vadd.f32 %v3101, %v3293
        %v3295 = vpop.f32.mrf.mxu0
        %v3296 = vadd.f32 %v3103, %v3295
        %v3297 = vpop.f32.mrf.mxu0
        %v3298 = vadd.f32 %v3105, %v3297
        %3299 = vmatprep.mubr.bf16.mxu0 %v1757
        %3300 = vmatmul.mubr.bf16.gmra.mxu0 %v1756
        %v3301 = vpop.f32.mrf.mxu0
        %v3302 = vadd.f32 %v3109, %v3301
        %v3303 = vpop.f32.mrf.mxu0
        %v3304 = vadd.f32 %v3111, %v3303
        %v3305 = vpop.f32.mrf.mxu0
        %v3306 = vadd.f32 %v3113, %v3305
        %v3307 = vpop.f32.mrf.mxu0
        %v3308 = vadd.f32 %v3115, %v3307
        %3309 = vdwg.mxu0
        %v3310 = vmax.f32 %v3152, 0.0
        %v3311 = vmax.f32 %v3154, 0.0
        %v3312 = vmax.f32 %v3156, 0.0
        %v3313 = vmax.f32 %v3158, 0.0
        %v3314 = vmax.f32 %v3162, 0.0
        %v3315 = vmax.f32 %v3164, 0.0
        %v3316 = vmax.f32 %v3166, 0.0
        %v3317 = vmax.f32 %v3168, 0.0
        %v3318 = vmax.f32 %v3172, 0.0
        %v3319 = vmax.f32 %v3174, 0.0
        %v3320 = vmax.f32 %v3176, 0.0
        %v3321 = vmax.f32 %v3178, 0.0
        %v3322 = vmax.f32 %v3182, 0.0
        %v3323 = vmax.f32 %v3184, 0.0
        %v3324 = vmax.f32 %v3186, 0.0
        %v3325 = vmax.f32 %v3188, 0.0
        %v3326 = vmax.f32 %v3192, 0.0
        %v3327 = vmax.f32 %v3194, 0.0
        %v3328 = vmax.f32 %v3196, 0.0
        %v3329 = vmax.f32 %v3198, 0.0
        %v3330 = vmax.f32 %v3202, 0.0
        %v3331 = vmax.f32 %v3204, 0.0
        %v3332 = vmax.f32 %v3206, 0.0
        %v3333 = vmax.f32 %v3208, 0.0
        %v3334 = vmax.f32 %v3212, 0.0
        %v3335 = vmax.f32 %v3214, 0.0
        %v3336 = vmax.f32 %v3216, 0.0
        %v3337 = vmax.f32 %v3218, 0.0
        %v3338 = vmax.f32 %v3222, 0.0
        %v3339 = vmax.f32 %v3224, 0.0
        %v3340 = vmax.f32 %v3226, 0.0
        %v3341 = vmax.f32 %v3228, 0.0
        %v3342 = vmax.f32 %v3232, 0.0
        %v3343 = vmax.f32 %v3234, 0.0
        %v3344 = vmax.f32 %v3236, 0.0
        %v3345 = vmax.f32 %v3238, 0.0
        %v3346 = vmax.f32 %v3242, 0.0
        %v3347 = vmax.f32 %v3244, 0.0
        %v3348 = vmax.f32 %v3246, 0.0
        %v3349 = vmax.f32 %v3248, 0.0
        %v3350 = vmax.f32 %v3252, 0.0
        %v3351 = vmax.f32 %v3254, 0.0
        %v3352 = vmax.f32 %v3256, 0.0
        %v3353 = vmax.f32 %v3258, 0.0
        %v3354 = vmax.f32 %v3262, 0.0
        %v3355 = vmax.f32 %v3264, 0.0
        %v3356 = vmax.f32 %v3266, 0.0
        %v3357 = vmax.f32 %v3268, 0.0
        %v3358 = vmax.f32 %v3272, 0.0
        %v3359 = vmax.f32 %v3274, 0.0
        %v3360 = vmax.f32 %v3276, 0.0
        %v3361 = vmax.f32 %v3278, 0.0
        %v3362 = vmax.f32 %v3282, 0.0
        %v3363 = vmax.f32 %v3284, 0.0
        %v3364 = vmax.f32 %v3286, 0.0
        %v3365 = vmax.f32 %v3288, 0.0
        %v3366 = vmax.f32 %v3292, 0.0
        %v3367 = vmax.f32 %v3294, 0.0
        %v3368 = vmax.f32 %v3296, 0.0
        %v3369 = vmax.f32 %v3298, 0.0
        %v3370 = vmax.f32 %v3302, 0.0
        %v3371 = vmax.f32 %v3304, 0.0
        %v3372 = vmax.f32 %v3306, 0.0
        %v3373 = vmax.f32 %v3308, 0.0
        %v3374 = vpack.c.bf16 %v3312, %v3310
        %v3375 = vpack.c.bf16 %v3313, %v3311
        %v3376 = vpack.c.bf16 %v3316, %v3314
        %v3377 = vpack.c.bf16 %v3317, %v3315
        %v3378 = vpack.c.bf16 %v3320, %v3318
        %v3379 = vpack.c.bf16 %v3321, %v3319
        %v3380 = vpack.c.bf16 %v3324, %v3322
        %v3381 = vpack.c.bf16 %v3325, %v3323
        %v3382 = vpack.c.bf16 %v3328, %v3326
        %v3383 = vpack.c.bf16 %v3329, %v3327
        %v3384 = vpack.c.bf16 %v3332, %v3330
        %v3385 = vpack.c.bf16 %v3333, %v3331
        %v3386 = vpack.c.bf16 %v3336, %v3334
        %v3387 = vpack.c.bf16 %v3337, %v3335
        %v3388 = vpack.c.bf16 %v3340, %v3338
        %v3389 = vpack.c.bf16 %v3341, %v3339
        %v3390 = vpack.c.bf16 %v3344, %v3342
        %v3391 = vpack.c.bf16 %v3345, %v3343
        %v3392 = vpack.c.bf16 %v3348, %v3346
        %v3393 = vpack.c.bf16 %v3349, %v3347
        %v3394 = vpack.c.bf16 %v3352, %v3350
        %v3395 = vpack.c.bf16 %v3353, %v3351
        %v3396 = vpack.c.bf16 %v3356, %v3354
        %v3397 = vpack.c.bf16 %v3357, %v3355
        %v3398 = vpack.c.bf16 %v3360, %v3358
        %v3399 = vpack.c.bf16 %v3361, %v3359
        %v3400 = vpack.c.bf16 %v3364, %v3362
        %v3401 = vpack.c.bf16 %v3365, %v3363
        %v3402 = vpack.c.bf16 %v3368, %v3366
        %v3403 = vpack.c.bf16 %v3369, %v3367
        %v3404 = vpack.c.bf16 %v3372, %v3370
        %v3405 = vpack.c.bf16 %v3373, %v3371
        %v3406 = vld [vmem:[%s5] sm:$0xf]
        %v3407 = vld [vmem:[%s5 + $0x4] sm:$0xf]
        %v3408 = vld [vmem:[%s5 + $0x8] sm:$0xf]
        %v3409 = vld [vmem:[%s5 + $0xc] sm:$0xf]
        %v3410 = vld [vmem:[%s5 + $0x10] sm:$0xf]
        %v3411 = vld [vmem:[%s5 + $0x14] sm:$0xf]
        %v3412 = vld [vmem:[%s5 + $0x18] sm:$0xf]
        %v3413 = vld [vmem:[%s5 + $0x1c] sm:$0xf]
        %v3414 = vld [vmem:[%s5 + $0x20] sm:$0xf]
        %v3415 = vld [vmem:[%s5 + $0x24] sm:$0xf]
        %v3416 = vld [vmem:[%s5 + $0x28] sm:$0xf]
        %v3417 = vld [vmem:[%s5 + $0x2c] sm:$0xf]
        %v3418 = vld [vmem:[%s5 + $0x30] sm:$0xf]
        %v3419 = vld [vmem:[%s5 + $0x34] sm:$0xf]
        %v3420 = vld [vmem:[%s5 + $0x38] sm:$0xf]
        %v3421 = vld [vmem:[%s5 + $0x3c] sm:$0xf]
        %v3422 = vld [vmem:[%s5 + $0x40] sm:$0xf]
        %v3423 = vld [vmem:[%s5 + $0x44] sm:$0xf]
        %v3424 = vld [vmem:[%s5 + $0x48] sm:$0xf]
        %v3425 = vld [vmem:[%s5 + $0x4c] sm:$0xf]
        %v3426 = vld [vmem:[%s5 + $0x50] sm:$0xf]
        %v3427 = vld [vmem:[%s5 + $0x54] sm:$0xf]
        %v3428 = vld [vmem:[%s5 + $0x58] sm:$0xf]
        %v3429 = vld [vmem:[%s5 + $0x5c] sm:$0xf]
        %v3430 = vld [vmem:[%s5 + $0x60] sm:$0xf]
        %v3431 = vld [vmem:[%s5 + $0x64] sm:$0xf]
        %v3432 = vld [vmem:[%s5 + $0x68] sm:$0xf]
        %v3433 = vld [vmem:[%s5 + $0x6c] sm:$0xf]
        %v3434 = vld [vmem:[%s5 + $0x70] sm:$0xf]
        %v3435 = vld [vmem:[%s5 + $0x74] sm:$0xf]
        %v3436 = vld [vmem:[%s5 + $0x78] sm:$0xf]
        %v3437 = vld [vmem:[%s5 + $0x7c] sm:$0xf]
        %v3438 = vld [vmem:[%s6] sm:$0x1]
        %v3440 = vlaneseq
        %v3441 = vshrl.u32 %v3440, 7
        %v3442 = vsub.s32 0, %v3441
        %v3443 = vrot.slane %v3438, %v3442
        %v3477 = vunpack.c.l.b16 %v3406
        %v3478 = vunpack.c.l.b16 %v3407
        %v3479 = vunpack.c.l.b16 %v3408
        %v3480 = vunpack.c.l.b16 %v3409
        %v3481 = vunpack.c.l.b16 %v3410
        %v3482 = vunpack.c.l.b16 %v3411
        %v3483 = vunpack.c.l.b16 %v3412
        %v3484 = vunpack.c.l.b16 %v3413
        %v3485 = vunpack.c.l.b16 %v3414
        %v3486 = vunpack.c.l.b16 %v3415
        %v3487 = vunpack.c.l.b16 %v3416
        %v3488 = vunpack.c.l.b16 %v3417
        %v3489 = vunpack.c.l.b16 %v3418
        %v3490 = vunpack.c.l.b16 %v3419
        %v3491 = vunpack.c.l.b16 %v3420
        %v3492 = vunpack.c.l.b16 %v3421
        %v3493 = vunpack.c.l.b16 %v3422
        %v3494 = vunpack.c.l.b16 %v3423
        %v3495 = vunpack.c.l.b16 %v3424
        %v3496 = vunpack.c.l.b16 %v3425
        %v3497 = vunpack.c.l.b16 %v3426
        %v3498 = vunpack.c.l.b16 %v3427
        %v3499 = vunpack.c.l.b16 %v3428
        %v3500 = vunpack.c.l.b16 %v3429
        %v3501 = vunpack.c.l.b16 %v3430
        %v3502 = vunpack.c.l.b16 %v3431
        %v3503 = vunpack.c.l.b16 %v3432
        %v3504 = vunpack.c.l.b16 %v3433
        %v3505 = vunpack.c.l.b16 %v3434
        %v3506 = vunpack.c.l.b16 %v3435
        %v3507 = vunpack.c.l.b16 %v3436
        %v3508 = vunpack.c.l.b16 %v3437
        %v3509 = vpack.c.b16 %v3478, %v3477
        %v3510 = vpack.c.b16 %v3480, %v3479
        %v3511 = vpack.c.b16 %v3482, %v3481
        %v3512 = vpack.c.b16 %v3484, %v3483
        %v3513 = vpack.c.b16 %v3486, %v3485
        %v3514 = vpack.c.b16 %v3488, %v3487
        %v3515 = vpack.c.b16 %v3490, %v3489
        %v3516 = vpack.c.b16 %v3492, %v3491
        %v3517 = vpack.c.b16 %v3494, %v3493
        %v3518 = vpack.c.b16 %v3496, %v3495
        %v3519 = vpack.c.b16 %v3498, %v3497
        %v3520 = vpack.c.b16 %v3500, %v3499
        %v3521 = vpack.c.b16 %v3502, %v3501
        %v3522 = vpack.c.b16 %v3504, %v3503
        %v3523 = vpack.c.b16 %v3506, %v3505
        %v3524 = vpack.c.b16 %v3508, %v3507
        %3541 = vmatprep.subr.bf16.mxu0 0
        %3542 = vmatpush1.bf16.msra.mxu0 %v3516
        %3543 = vmatprep.subr.bf16.mxu0 0
        %3544 = vmatpush1.bf16.msra.mxu0 %v3515
        %3545 = vmatprep.subr.bf16.mxu0 0
        %3546 = vmatpush1.bf16.msra.mxu0 %v3514
        %3547 = vmatprep.subr.bf16.mxu0 0
        %3548 = vmatpush1.bf16.msra.mxu0 %v3513
        %3549 = vmatprep.subr.bf16.mxu0 0
        %3550 = vmatpush1.bf16.msra.mxu0 %v3512
        %3551 = vmatprep.subr.bf16.mxu0 0
        %3552 = vmatpush1.bf16.msra.mxu0 %v3511
        %3553 = vmatprep.subr.bf16.mxu0 0
        %3554 = vmatpush1.bf16.msra.mxu0 %v3510
        %3555 = vmatprep.subr.bf16.mxu0 0
        %3556 = vmatpush1.bf16.msra.mxu0 %v3509
        %3557 = vmatprep.subr.bf16.mxu0 0
        %3558 = vmatpush2.bf16.msra.mxu0 %v3524
        %3559 = vmatprep.subr.bf16.mxu0 0
        %3560 = vmatpush2.bf16.msra.mxu0 %v3523
        %3561 = vmatprep.subr.bf16.mxu0 0
        %3562 = vmatpush2.bf16.msra.mxu0 %v3522
        %3563 = vmatprep.subr.bf16.mxu0 0
        %3564 = vmatpush2.bf16.msra.mxu0 %v3521
        %3565 = vmatprep.subr.bf16.mxu0 0
        %3566 = vmatpush2.bf16.msra.mxu0 %v3520
        %3567 = vmatprep.subr.bf16.mxu0 0
        %3568 = vmatpush2.bf16.msra.mxu0 %v3519
        %3569 = vmatprep.subr.bf16.mxu0 0
        %3570 = vmatpush2.bf16.msra.mxu0 %v3518
        %3571 = vmatprep.subr.bf16.mxu0 0
        %3572 = vmatpush2.bf16.msra.mxu0 %v3517
        %3573 = vmatprep.mubr.bf16.mxu0 %v3375
        %3574 = vmatmul.mubr.bf16.gmra.mxu0 %v3374
        %v3575 = vpop.f32.mrf.mxu0
        %v3576 = vadd.f32 %v3443, %v3575
        %v3577 = vpop.f32.mrf.mxu0
        %v3578 = vpop.f32.mrf.mxu0
        %v3579 = vadd.f32 %v3443, %v3578
        %v3580 = vpop.f32.mrf.mxu0
        %3581 = vmatprep.mubr.bf16.mxu0 %v3377
        %3582 = vmatmul.mubr.bf16.gmra.mxu0 %v3376
        %v3583 = vpop.f32.mrf.mxu0
        %v3584 = vadd.f32 %v3443, %v3583
        %v3585 = vpop.f32.mrf.mxu0
        %v3586 = vpop.f32.mrf.mxu0
        %v3587 = vadd.f32 %v3443, %v3586
        %v3588 = vpop.f32.mrf.mxu0
        %3589 = vmatprep.mubr.bf16.mxu0 %v3379
        %3590 = vmatmul.mubr.bf16.gmra.mxu0 %v3378
        %v3591 = vpop.f32.mrf.mxu0
        %v3592 = vadd.f32 %v3443, %v3591
        %v3593 = vpop.f32.mrf.mxu0
        %v3594 = vpop.f32.mrf.mxu0
        %v3595 = vadd.f32 %v3443, %v3594
        %v3596 = vpop.f32.mrf.mxu0
        %3597 = vmatprep.mubr.bf16.mxu0 %v3381
        %3598 = vmatmul.mubr.bf16.gmra.mxu0 %v3380
        %v3599 = vpop.f32.mrf.mxu0
        %v3600 = vadd.f32 %v3443, %v3599
        %v3601 = vpop.f32.mrf.mxu0
        %v3602 = vpop.f32.mrf.mxu0
        %v3603 = vadd.f32 %v3443, %v3602
        %v3604 = vpop.f32.mrf.mxu0
        %3605 = vmatprep.mubr.bf16.mxu0 %v3383
        %3606 = vmatmul.mubr.bf16.gmra.mxu0 %v3382
        %v3607 = vpop.f32.mrf.mxu0
        %v3608 = vadd.f32 %v3443, %v3607
        %v3609 = vpop.f32.mrf.mxu0
        %v3610 = vpop.f32.mrf.mxu0
        %v3611 = vadd.f32 %v3443, %v3610
        %v3612 = vpop.f32.mrf.mxu0
        %3613 = vmatprep.mubr.bf16.mxu0 %v3385
        %3614 = vmatmul.mubr.bf16.gmra.mxu0 %v3384
        %v3615 = vpop.f32.mrf.mxu0
        %v3616 = vadd.f32 %v3443, %v3615
        %v3617 = vpop.f32.mrf.mxu0
        %v3618 = vpop.f32.mrf.mxu0
        %v3619 = vadd.f32 %v3443, %v3618
        %v3620 = vpop.f32.mrf.mxu0
        %3621 = vmatprep.mubr.bf16.mxu0 %v3387
        %3622 = vmatmul.mubr.bf16.gmra.mxu0 %v3386
        %v3623 = vpop.f32.mrf.mxu0
        %v3624 = vadd.f32 %v3443, %v3623
        %v3625 = vpop.f32.mrf.mxu0
        %v3626 = vpop.f32.mrf.mxu0
        %v3627 = vadd.f32 %v3443, %v3626
        %v3628 = vpop.f32.mrf.mxu0
        %3629 = vmatprep.mubr.bf16.mxu0 %v3389
        %3630 = vmatmul.mubr.bf16.gmra.mxu0 %v3388
        %v3631 = vpop.f32.mrf.mxu0
        %v3632 = vadd.f32 %v3443, %v3631
        %v3633 = vpop.f32.mrf.mxu0
        %v3634 = vpop.f32.mrf.mxu0
        %v3635 = vadd.f32 %v3443, %v3634
        %v3636 = vpop.f32.mrf.mxu0
        %3637 = vmatprep.mubr.bf16.mxu0 %v3391
        %3638 = vmatmul.mubr.bf16.gmra.mxu0 %v3390
        %v3639 = vpop.f32.mrf.mxu0
        %v3640 = vadd.f32 %v3443, %v3639
        %v3641 = vpop.f32.mrf.mxu0
        %v3642 = vpop.f32.mrf.mxu0
        %v3643 = vadd.f32 %v3443, %v3642
        %v3644 = vpop.f32.mrf.mxu0
        %3645 = vmatprep.mubr.bf16.mxu0 %v3393
        %3646 = vmatmul.mubr.bf16.gmra.mxu0 %v3392
        %v3647 = vpop.f32.mrf.mxu0
        %v3648 = vadd.f32 %v3443, %v3647
        %v3649 = vpop.f32.mrf.mxu0
        %v3650 = vpop.f32.mrf.mxu0
        %v3651 = vadd.f32 %v3443, %v3650
        %v3652 = vpop.f32.mrf.mxu0
        %3653 = vmatprep.mubr.bf16.mxu0 %v3395
        %3654 = vmatmul.mubr.bf16.gmra.mxu0 %v3394
        %v3655 = vpop.f32.mrf.mxu0
        %v3656 = vadd.f32 %v3443, %v3655
        %v3657 = vpop.f32.mrf.mxu0
        %v3658 = vpop.f32.mrf.mxu0
        %v3659 = vadd.f32 %v3443, %v3658
        %v3660 = vpop.f32.mrf.mxu0
        %3661 = vmatprep.mubr.bf16.mxu0 %v3397
        %3662 = vmatmul.mubr.bf16.gmra.mxu0 %v3396
        %v3663 = vpop.f32.mrf.mxu0
        %v3664 = vadd.f32 %v3443, %v3663
        %v3665 = vpop.f32.mrf.mxu0
        %v3666 = vpop.f32.mrf.mxu0
        %v3667 = vadd.f32 %v3443, %v3666
        %v3668 = vpop.f32.mrf.mxu0
        %3669 = vmatprep.mubr.bf16.mxu0 %v3399
        %3670 = vmatmul.mubr.bf16.gmra.mxu0 %v3398
        %v3671 = vpop.f32.mrf.mxu0
        %v3672 = vadd.f32 %v3443, %v3671
        %v3673 = vpop.f32.mrf.mxu0
        %v3674 = vpop.f32.mrf.mxu0
        %v3675 = vadd.f32 %v3443, %v3674
        %v3676 = vpop.f32.mrf.mxu0
        %3677 = vmatprep.mubr.bf16.mxu0 %v3401
        %3678 = vmatmul.mubr.bf16.gmra.mxu0 %v3400
        %v3679 = vpop.f32.mrf.mxu0
        %v3680 = vadd.f32 %v3443, %v3679
        %v3681 = vpop.f32.mrf.mxu0
        %v3682 = vpop.f32.mrf.mxu0
        %v3683 = vadd.f32 %v3443, %v3682
        %v3684 = vpop.f32.mrf.mxu0
        %3685 = vmatprep.mubr.bf16.mxu0 %v3403
        %3686 = vmatmul.mubr.bf16.gmra.mxu0 %v3402
        %v3687 = vpop.f32.mrf.mxu0
        %v3688 = vadd.f32 %v3443, %v3687
        %v3689 = vpop.f32.mrf.mxu0
        %v3690 = vpop.f32.mrf.mxu0
        %v3691 = vadd.f32 %v3443, %v3690
        %v3692 = vpop.f32.mrf.mxu0
        %3693 = vmatprep.mubr.bf16.mxu0 %v3405
        %3694 = vmatmul.mubr.bf16.gmra.mxu0 %v3404
        %v3695 = vpop.f32.mrf.mxu0
        %v3696 = vadd.f32 %v3443, %v3695
        %v3697 = vpop.f32.mrf.mxu0
        %v3698 = vpop.f32.mrf.mxu0
        %v3699 = vadd.f32 %v3443, %v3698
        %v3700 = vpop.f32.mrf.mxu0
        %3701 = vdwg.mxu0
        %v3702 = vmax.f32 %v3576, 0.0
        %v3703 = vmax.f32 %v3579, 0.0
        %v3704 = vmax.f32 %v3584, 0.0
        %v3705 = vmax.f32 %v3587, 0.0
        %v3706 = vmax.f32 %v3592, 0.0
        %v3707 = vmax.f32 %v3595, 0.0
        %v3708 = vmax.f32 %v3600, 0.0
        %v3709 = vmax.f32 %v3603, 0.0
        %v3710 = vmax.f32 %v3608, 0.0
        %v3711 = vmax.f32 %v3611, 0.0
        %v3712 = vmax.f32 %v3616, 0.0
        %v3713 = vmax.f32 %v3619, 0.0
        %v3714 = vmax.f32 %v3624, 0.0
        %v3715 = vmax.f32 %v3627, 0.0
        %v3716 = vmax.f32 %v3632, 0.0
        %v3717 = vmax.f32 %v3635, 0.0
        %v3718 = vmax.f32 %v3640, 0.0
        %v3719 = vmax.f32 %v3643, 0.0
        %v3720 = vmax.f32 %v3648, 0.0
        %v3721 = vmax.f32 %v3651, 0.0
        %v3722 = vmax.f32 %v3656, 0.0
        %v3723 = vmax.f32 %v3659, 0.0
        %v3724 = vmax.f32 %v3664, 0.0
        %v3725 = vmax.f32 %v3667, 0.0
        %v3726 = vmax.f32 %v3672, 0.0
        %v3727 = vmax.f32 %v3675, 0.0
        %v3728 = vmax.f32 %v3680, 0.0
        %v3729 = vmax.f32 %v3683, 0.0
        %v3730 = vmax.f32 %v3688, 0.0
        %v3731 = vmax.f32 %v3691, 0.0
        %v3732 = vmax.f32 %v3696, 0.0
        %v3733 = vmax.f32 %v3699, 0.0
        %v3734 = vpack.c.bf16 %v3703, %v3702
        %v3735 = vpack.c.bf16 %v3705, %v3704
        %v3736 = vpack.c.bf16 %v3707, %v3706
        %v3737 = vpack.c.bf16 %v3709, %v3708
        %v3738 = vpack.c.bf16 %v3711, %v3710
        %v3739 = vpack.c.bf16 %v3713, %v3712
        %v3740 = vpack.c.bf16 %v3715, %v3714
        %v3741 = vpack.c.bf16 %v3717, %v3716
        %v3742 = vpack.c.bf16 %v3719, %v3718
        %v3743 = vpack.c.bf16 %v3721, %v3720
        %v3744 = vpack.c.bf16 %v3723, %v3722
        %v3745 = vpack.c.bf16 %v3725, %v3724
        %v3746 = vpack.c.bf16 %v3727, %v3726
        %v3747 = vpack.c.bf16 %v3729, %v3728
        %v3748 = vpack.c.bf16 %v3731, %v3730
        %v3749 = vpack.c.bf16 %v3733, %v3732
        %v3750 = vld [vmem:[%s7] sm:$0xf]
        %v3751 = vld [vmem:[%s7 + $0x4] sm:$0xf]
        %v3752 = vld [vmem:[%s7 + $0x8] sm:$0xf]
        %v3753 = vld [vmem:[%s7 + $0xc] sm:$0xf]
        %v3754 = vld [vmem:[%s7 + $0x10] sm:$0xf]
        %v3755 = vld [vmem:[%s7 + $0x14] sm:$0xf]
        %v3756 = vld [vmem:[%s7 + $0x18] sm:$0xf]
        %v3757 = vld [vmem:[%s7 + $0x1c] sm:$0xf]
        %v3758 = vld [vmem:[%s7 + $0x20] sm:$0xf]
        %v3759 = vld [vmem:[%s7 + $0x24] sm:$0xf]
        %v3760 = vld [vmem:[%s7 + $0x28] sm:$0xf]
        %v3761 = vld [vmem:[%s7 + $0x2c] sm:$0xf]
        %v3762 = vld [vmem:[%s7 + $0x30] sm:$0xf]
        %v3763 = vld [vmem:[%s7 + $0x34] sm:$0xf]
        %v3764 = vld [vmem:[%s7 + $0x38] sm:$0xf]
        %v3765 = vld [vmem:[%s7 + $0x3c] sm:$0xf]
        %v3766 = vld [vmem:[%s8] sm:$0x1]
        %v3768 = vlaneseq
        %v3769 = vshrl.u32 %v3768, 7
        %v3770 = vsub.s32 0, %v3769
        %v3771 = vrot.slane %v3766, %v3770
        %v3789 = vunpack.c.l.b16 %v3750
        %v3790 = vunpack.c.l.b16 %v3751
        %v3791 = vunpack.c.l.b16 %v3752
        %v3792 = vunpack.c.l.b16 %v3753
        %v3793 = vunpack.c.l.b16 %v3754
        %v3794 = vunpack.c.l.b16 %v3755
        %v3795 = vunpack.c.l.b16 %v3756
        %v3796 = vunpack.c.l.b16 %v3757
        %v3797 = vunpack.c.l.b16 %v3758
        %v3798 = vunpack.c.l.b16 %v3759
        %v3799 = vunpack.c.l.b16 %v3760
        %v3800 = vunpack.c.l.b16 %v3761
        %v3801 = vunpack.c.l.b16 %v3762
        %v3802 = vunpack.c.l.b16 %v3763
        %v3803 = vunpack.c.l.b16 %v3764
        %v3804 = vunpack.c.l.b16 %v3765
        %v3805 = vpack.c.b16 %v3790, %v3789
        %v3806 = vpack.c.b16 %v3792, %v3791
        %v3807 = vpack.c.b16 %v3794, %v3793
        %v3808 = vpack.c.b16 %v3796, %v3795
        %v3809 = vpack.c.b16 %v3798, %v3797
        %v3810 = vpack.c.b16 %v3800, %v3799
        %v3811 = vpack.c.b16 %v3802, %v3801
        %v3812 = vpack.c.b16 %v3804, %v3803
        %3821 = vmatprep.subr.bf16.mxu0 0
        %3822 = vmatpush1.bf16.msra.mxu0 %v3812
        %3823 = vmatprep.subr.bf16.mxu0 0
        %3824 = vmatpush1.bf16.msra.mxu0 %v3811
        %3825 = vmatprep.subr.bf16.mxu0 0
        %3826 = vmatpush1.bf16.msra.mxu0 %v3810
        %3827 = vmatprep.subr.bf16.mxu0 0
        %3828 = vmatpush1.bf16.msra.mxu0 %v3809
        %3829 = vmatprep.subr.bf16.mxu0 0
        %3830 = vmatpush1.bf16.msra.mxu0 %v3808
        %3831 = vmatprep.subr.bf16.mxu0 0
        %3832 = vmatpush1.bf16.msra.mxu0 %v3807
        %3833 = vmatprep.subr.bf16.mxu0 0
        %3834 = vmatpush1.bf16.msra.mxu0 %v3806
        %3835 = vmatprep.subr.bf16.mxu0 0
        %3836 = vmatpush1.bf16.msra.mxu0 %v3805
        %3837 = vmatprep.subr.bf16.mxu0 0
        %3838 = vmatpush2.bf16.msra.mxu0 0
        %3839 = vmatprep.subr.bf16.mxu0 0
        %3840 = vmatpush2.bf16.msra.mxu0 0
        %3841 = vmatprep.subr.bf16.mxu0 0
        %3842 = vmatpush2.bf16.msra.mxu0 0
        %3843 = vmatprep.subr.bf16.mxu0 0
        %3844 = vmatpush2.bf16.msra.mxu0 0
        %3845 = vmatprep.subr.bf16.mxu0 0
        %3846 = vmatpush2.bf16.msra.mxu0 0
        %3847 = vmatprep.subr.bf16.mxu0 0
        %3848 = vmatpush2.bf16.msra.mxu0 0
        %3849 = vmatprep.subr.bf16.mxu0 0
        %3850 = vmatpush2.bf16.msra.mxu0 0
        %3851 = vmatprep.subr.bf16.mxu0 0
        %3852 = vmatpush2.bf16.msra.mxu0 0
        %3853 = vmatprep.mubr.bf16.mxu0 0
        %3854 = vmatmul.mubr.bf16.gmra.mxu0 %v3734
        %v3855 = vpop.f32.mrf.mxu0
        %v3856 = vadd.f32 %v3771, %v3855
        %v3857 = vpop.f32.mrf.mxu0
        %v3858 = vpop.f32.mrf.mxu0
        %v3859 = vadd.f32 %v3771, %v3858
        %v3860 = vpop.f32.mrf.mxu0
        %3861 = vmatprep.mubr.bf16.mxu0 0
        %3862 = vmatmul.mubr.bf16.gmra.mxu0 %v3735
        %v3863 = vpop.f32.mrf.mxu0
        %v3864 = vadd.f32 %v3771, %v3863
        %v3865 = vpop.f32.mrf.mxu0
        %v3866 = vpop.f32.mrf.mxu0
        %v3867 = vadd.f32 %v3771, %v3866
        %v3868 = vpop.f32.mrf.mxu0
        %3869 = vmatprep.mubr.bf16.mxu0 0
        %3870 = vmatmul.mubr.bf16.gmra.mxu0 %v3736
        %v3871 = vpop.f32.mrf.mxu0
        %v3872 = vadd.f32 %v3771, %v3871
        %v3873 = vpop.f32.mrf.mxu0
        %v3874 = vpop.f32.mrf.mxu0
        %v3875 = vadd.f32 %v3771, %v3874
        %v3876 = vpop.f32.mrf.mxu0
        %3877 = vmatprep.mubr.bf16.mxu0 0
        %3878 = vmatmul.mubr.bf16.gmra.mxu0 %v3737
        %v3879 = vpop.f32.mrf.mxu0
        %v3880 = vadd.f32 %v3771, %v3879
        %v3881 = vpop.f32.mrf.mxu0
        %v3882 = vpop.f32.mrf.mxu0
        %v3883 = vadd.f32 %v3771, %v3882
        %v3884 = vpop.f32.mrf.mxu0
        %3885 = vmatprep.mubr.bf16.mxu0 0
        %3886 = vmatmul.mubr.bf16.gmra.mxu0 %v3738
        %v3887 = vpop.f32.mrf.mxu0
        %v3888 = vadd.f32 %v3771, %v3887
        %v3889 = vpop.f32.mrf.mxu0
        %v3890 = vpop.f32.mrf.mxu0
        %v3891 = vadd.f32 %v3771, %v3890
        %v3892 = vpop.f32.mrf.mxu0
        %3893 = vmatprep.mubr.bf16.mxu0 0
        %3894 = vmatmul.mubr.bf16.gmra.mxu0 %v3739
        %v3895 = vpop.f32.mrf.mxu0
        %v3896 = vadd.f32 %v3771, %v3895
        %v3897 = vpop.f32.mrf.mxu0
        %v3898 = vpop.f32.mrf.mxu0
        %v3899 = vadd.f32 %v3771, %v3898
        %v3900 = vpop.f32.mrf.mxu0
        %3901 = vmatprep.mubr.bf16.mxu0 0
        %3902 = vmatmul.mubr.bf16.gmra.mxu0 %v3740
        %v3903 = vpop.f32.mrf.mxu0
        %v3904 = vadd.f32 %v3771, %v3903
        %v3905 = vpop.f32.mrf.mxu0
        %v3906 = vpop.f32.mrf.mxu0
        %v3907 = vadd.f32 %v3771, %v3906
        %v3908 = vpop.f32.mrf.mxu0
        %3909 = vmatprep.mubr.bf16.mxu0 0
        %3910 = vmatmul.mubr.bf16.gmra.mxu0 %v3741
        %v3911 = vpop.f32.mrf.mxu0
        %v3912 = vadd.f32 %v3771, %v3911
        %v3913 = vpop.f32.mrf.mxu0
        %v3914 = vpop.f32.mrf.mxu0
        %v3915 = vadd.f32 %v3771, %v3914
        %v3916 = vpop.f32.mrf.mxu0
        %3917 = vmatprep.mubr.bf16.mxu0 0
        %3918 = vmatmul.mubr.bf16.gmra.mxu0 %v3742
        %v3919 = vpop.f32.mrf.mxu0
        %v3920 = vadd.f32 %v3771, %v3919
        %v3921 = vpop.f32.mrf.mxu0
        %v3922 = vpop.f32.mrf.mxu0
        %v3923 = vadd.f32 %v3771, %v3922
        %v3924 = vpop.f32.mrf.mxu0
        %3925 = vmatprep.mubr.bf16.mxu0 0
        %3926 = vmatmul.mubr.bf16.gmra.mxu0 %v3743
        %v3927 = vpop.f32.mrf.mxu0
        %v3928 = vadd.f32 %v3771, %v3927
        %v3929 = vpop.f32.mrf.mxu0
        %v3930 = vpop.f32.mrf.mxu0
        %v3931 = vadd.f32 %v3771, %v3930
        %v3932 = vpop.f32.mrf.mxu0
        %3933 = vmatprep.mubr.bf16.mxu0 0
        %3934 = vmatmul.mubr.bf16.gmra.mxu0 %v3744
        %v3935 = vpop.f32.mrf.mxu0
        %v3936 = vadd.f32 %v3771, %v3935
        %v3937 = vpop.f32.mrf.mxu0
        %v3938 = vpop.f32.mrf.mxu0
        %v3939 = vadd.f32 %v3771, %v3938
        %v3940 = vpop.f32.mrf.mxu0
        %3941 = vmatprep.mubr.bf16.mxu0 0
        %3942 = vmatmul.mubr.bf16.gmra.mxu0 %v3745
        %v3943 = vpop.f32.mrf.mxu0
        %v3944 = vadd.f32 %v3771, %v3943
        %v3945 = vpop.f32.mrf.mxu0
        %v3946 = vpop.f32.mrf.mxu0
        %v3947 = vadd.f32 %v3771, %v3946
        %v3948 = vpop.f32.mrf.mxu0
        %3949 = vmatprep.mubr.bf16.mxu0 0
        %3950 = vmatmul.mubr.bf16.gmra.mxu0 %v3746
        %v3951 = vpop.f32.mrf.mxu0
        %v3952 = vadd.f32 %v3771, %v3951
        %v3953 = vpop.f32.mrf.mxu0
        %v3954 = vpop.f32.mrf.mxu0
        %v3955 = vadd.f32 %v3771, %v3954
        %v3956 = vpop.f32.mrf.mxu0
        %3957 = vmatprep.mubr.bf16.mxu0 0
        %3958 = vmatmul.mubr.bf16.gmra.mxu0 %v3747
        %v3959 = vpop.f32.mrf.mxu0
        %v3960 = vadd.f32 %v3771, %v3959
        %v3961 = vpop.f32.mrf.mxu0
        %v3962 = vpop.f32.mrf.mxu0
        %v3963 = vadd.f32 %v3771, %v3962
        %v3964 = vpop.f32.mrf.mxu0
        %3965 = vmatprep.mubr.bf16.mxu0 0
        %3966 = vmatmul.mubr.bf16.gmra.mxu0 %v3748
        %v3967 = vpop.f32.mrf.mxu0
        %v3968 = vadd.f32 %v3771, %v3967
        %v3969 = vpop.f32.mrf.mxu0
        %v3970 = vpop.f32.mrf.mxu0
        %v3971 = vadd.f32 %v3771, %v3970
        %v3972 = vpop.f32.mrf.mxu0
        %3973 = vmatprep.mubr.bf16.mxu0 0
        %3974 = vmatmul.mubr.bf16.gmra.mxu0 %v3749
        %v3975 = vpop.f32.mrf.mxu0
        %v3976 = vadd.f32 %v3771, %v3975
        %v3977 = vpop.f32.mrf.mxu0
        %v3978 = vpop.f32.mrf.mxu0
        %v3979 = vadd.f32 %v3771, %v3978
        %v3980 = vpop.f32.mrf.mxu0
        %3981 = vdwg.mxu0
        %v3982 = vmul.f32 %v3856, 0.5
        %v3983 = vmul.f32 %v3859, 0.5
        %v3984 = vmul.f32 %v3864, 0.5
        %v3985 = vmul.f32 %v3867, 0.5
        %v3986 = vmul.f32 %v3872, 0.5
        %v3987 = vmul.f32 %v3875, 0.5
        %v3988 = vmul.f32 %v3880, 0.5
        %v3989 = vmul.f32 %v3883, 0.5
        %v3990 = vmul.f32 %v3888, 0.5
        %v3991 = vmul.f32 %v3891, 0.5
        %v3992 = vmul.f32 %v3896, 0.5
        %v3993 = vmul.f32 %v3899, 0.5
        %v3994 = vmul.f32 %v3904, 0.5
        %v3995 = vmul.f32 %v3907, 0.5
        %v3996 = vmul.f32 %v3912, 0.5
        %v3997 = vmul.f32 %v3915, 0.5
        %v3998 = vmul.f32 %v3920, 0.5
        %v3999 = vmul.f32 %v3923, 0.5
        %v4000 = vmul.f32 %v3928, 0.5
        %v4001 = vmul.f32 %v3931, 0.5
        %v4002 = vmul.f32 %v3936, 0.5
        %v4003 = vmul.f32 %v3939, 0.5
        %v4004 = vmul.f32 %v3944, 0.5
        %v4005 = vmul.f32 %v3947, 0.5
        %v4006 = vmul.f32 %v3952, 0.5
        %v4007 = vmul.f32 %v3955, 0.5
        %v4008 = vmul.f32 %v3960, 0.5
        %v4009 = vmul.f32 %v3963, 0.5
        %v4010 = vmul.f32 %v3968, 0.5
        %v4011 = vmul.f32 %v3971, 0.5
        %v4012 = vmul.f32 %v3976, 0.5
        %v4013 = vmul.f32 %v3979, 0.5
        %v4014 = vtanh.pop %v3982
        %v4015 = vtanh.pop %v3983
        %v4016 = vtanh.pop %v3984
        %v4017 = vtanh.pop %v3985
        %v4018 = vtanh.pop %v3986
        %v4019 = vtanh.pop %v3987
        %v4020 = vtanh.pop %v3988
        %v4021 = vtanh.pop %v3989
        %v4022 = vtanh.pop %v3990
        %v4023 = vtanh.pop %v3991
        %v4024 = vtanh.pop %v3992
        %v4025 = vtanh.pop %v3993
        %v4026 = vtanh.pop %v3994
        %v4027 = vtanh.pop %v3995
        %v4028 = vtanh.pop %v3996
        %v4029 = vtanh.pop %v3997
        %v4030 = vtanh.pop %v3998
        %v4031 = vtanh.pop %v3999
        %v4032 = vtanh.pop %v4000
        %v4033 = vtanh.pop %v4001
        %v4034 = vtanh.pop %v4002
        %v4035 = vtanh.pop %v4003
        %v4036 = vtanh.pop %v4004
        %v4037 = vtanh.pop %v4005
        %v4038 = vtanh.pop %v4006
        %v4039 = vtanh.pop %v4007
        %v4040 = vtanh.pop %v4008
        %v4041 = vtanh.pop %v4009
        %v4042 = vtanh.pop %v4010
        %v4043 = vtanh.pop %v4011
        %v4044 = vtanh.pop %v4012
        %v4045 = vtanh.pop %v4013
        %v4046 = vmul.f32 %v4014, 0.5
        %v4047 = vmul.f32 %v4015, 0.5
        %v4048 = vmul.f32 %v4016, 0.5
        %v4049 = vmul.f32 %v4017, 0.5
        %v4050 = vmul.f32 %v4018, 0.5
        %v4051 = vmul.f32 %v4019, 0.5
        %v4052 = vmul.f32 %v4020, 0.5
        %v4053 = vmul.f32 %v4021, 0.5
        %v4054 = vmul.f32 %v4022, 0.5
        %v4055 = vmul.f32 %v4023, 0.5
        %v4056 = vmul.f32 %v4024, 0.5
        %v4057 = vmul.f32 %v4025, 0.5
        %v4058 = vmul.f32 %v4026, 0.5
        %v4059 = vmul.f32 %v4027, 0.5
        %v4060 = vmul.f32 %v4028, 0.5
        %v4061 = vmul.f32 %v4029, 0.5
        %v4062 = vmul.f32 %v4030, 0.5
        %v4063 = vmul.f32 %v4031, 0.5
        %v4064 = vmul.f32 %v4032, 0.5
        %v4065 = vmul.f32 %v4033, 0.5
        %v4066 = vmul.f32 %v4034, 0.5
        %v4067 = vmul.f32 %v4035, 0.5
        %v4068 = vmul.f32 %v4036, 0.5
        %v4069 = vmul.f32 %v4037, 0.5
        %v4070 = vmul.f32 %v4038, 0.5
        %v4071 = vmul.f32 %v4039, 0.5
        %v4072 = vmul.f32 %v4040, 0.5
        %v4073 = vmul.f32 %v4041, 0.5
        %v4074 = vmul.f32 %v4042, 0.5
        %v4075 = vmul.f32 %v4043, 0.5
        %v4076 = vmul.f32 %v4044, 0.5
        %v4077 = vmul.f32 %v4045, 0.5
        %v4078 = vadd.f32 %v4046, 0.5
        %v4079 = vadd.f32 %v4047, 0.5
        %v4080 = vadd.f32 %v4048, 0.5
        %v4081 = vadd.f32 %v4049, 0.5
        %v4082 = vadd.f32 %v4050, 0.5
        %v4083 = vadd.f32 %v4051, 0.5
        %v4084 = vadd.f32 %v4052, 0.5
        %v4085 = vadd.f32 %v4053, 0.5
        %v4086 = vadd.f32 %v4054, 0.5
        %v4087 = vadd.f32 %v4055, 0.5
        %v4088 = vadd.f32 %v4056, 0.5
        %v4089 = vadd.f32 %v4057, 0.5
        %v4090 = vadd.f32 %v4058, 0.5
        %v4091 = vadd.f32 %v4059, 0.5
        %v4092 = vadd.f32 %v4060, 0.5
        %v4093 = vadd.f32 %v4061, 0.5
        %v4094 = vadd.f32 %v4062, 0.5
        %v4095 = vadd.f32 %v4063, 0.5
        %v4096 = vadd.f32 %v4064, 0.5
        %v4097 = vadd.f32 %v4065, 0.5
        %v4098 = vadd.f32 %v4066, 0.5
        %v4099 = vadd.f32 %v4067, 0.5
        %v4100 = vadd.f32 %v4068, 0.5
        %v4101 = vadd.f32 %v4069, 0.5
        %v4102 = vadd.f32 %v4070, 0.5
        %v4103 = vadd.f32 %v4071, 0.5
        %v4104 = vadd.f32 %v4072, 0.5
        %v4105 = vadd.f32 %v4073, 0.5
        %v4106 = vadd.f32 %v4074, 0.5
        %v4107 = vadd.f32 %v4075, 0.5
        %v4108 = vadd.f32 %v4076, 0.5
        %v4109 = vadd.f32 %v4077, 0.5
        %4110 = vst [vmem:[%s341] sm:$0xff] %v4078
        %4111 = vst [vmem:[%s341 + $0x8] sm:$0xff] %v4079
        %4112 = vst [vmem:[%s341 + $0x10] sm:$0xff] %v4080
        %4113 = vst [vmem:[%s341 + $0x18] sm:$0xff] %v4081
        %4114 = vst [vmem:[%s341 + $0x20] sm:$0xff] %v4082
        %4115 = vst [vmem:[%s341 + $0x28] sm:$0xff] %v4083
        %4116 = vst [vmem:[%s341 + $0x30] sm:$0xff] %v4084
        %4117 = vst [vmem:[%s341 + $0x38] sm:$0xff] %v4085
        %4118 = vst [vmem:[%s341 + $0x40] sm:$0xff] %v4086
        %4119 = vst [vmem:[%s341 + $0x48] sm:$0xff] %v4087
        %4120 = vst [vmem:[%s341 + $0x50] sm:$0xff] %v4088
        %4121 = vst [vmem:[%s341 + $0x58] sm:$0xff] %v4089
        %4122 = vst [vmem:[%s341 + $0x60] sm:$0xff] %v4090
        %4123 = vst [vmem:[%s341 + $0x68] sm:$0xff] %v4091
        %4124 = vst [vmem:[%s341 + $0x70] sm:$0xff] %v4092
        %4125 = vst [vmem:[%s341 + $0x78] sm:$0xff] %v4093
        %4126 = vst [vmem:[%s341 + $0x80] sm:$0xff] %v4094
        %4127 = vst [vmem:[%s341 + $0x88] sm:$0xff] %v4095
        %4128 = vst [vmem:[%s341 + $0x90] sm:$0xff] %v4096
        %4129 = vst [vmem:[%s341 + $0x98] sm:$0xff] %v4097
        %4130 = vst [vmem:[%s341 + $0xa0] sm:$0xff] %v4098
        %4131 = vst [vmem:[%s341 + $0xa8] sm:$0xff] %v4099
        %4132 = vst [vmem:[%s341 + $0xb0] sm:$0xff] %v4100
        %4133 = vst [vmem:[%s341 + $0xb8] sm:$0xff] %v4101
        %4134 = vst [vmem:[%s341 + $0xc0] sm:$0xff] %v4102
        %4135 = vst [vmem:[%s341 + $0xc8] sm:$0xff] %v4103
        %4136 = vst [vmem:[%s341 + $0xd0] sm:$0xff] %v4104
        %4137 = vst [vmem:[%s341 + $0xd8] sm:$0xff] %v4105
        %4138 = vst [vmem:[%s341 + $0xe0] sm:$0xff] %v4106
        %4139 = vst [vmem:[%s341 + $0xe8] sm:$0xff] %v4107
        %4140 = vst [vmem:[%s341 + $0xf0] sm:$0xff] %v4108
        %4141 = vst [vmem:[%s341 + $0xf8] sm:$0xff] %v4109
        %s4142 = sand.u32 %s226, 1
        %s4143 = scalar_lea.sflag [#allocation4], %s4142
        %s4144 = sand.u32 %s226, 1
        %s4145 = smul.addr %s4144, 256
        %s4146 = scalar_lea.vmem [#allocation5], %s4145
        // Predicated region
        $region61: #{tpu_custom_call.1} parent=55 // pred_check
          %p4147 = pneg %p236
        $region62: #{tpu_custom_call.1} parent=55 // pred_check_branch
          %4149 = sbr.rel (%p4147) target = $region64
        $region63: #{tpu_custom_call.1} parent=55 // pred_region
          %s4150 = smul.u32 32, %s24
          %s4152 = ssub.s32 4096, 4096
          %4153 = vsyncadd %s4143, %s4152
          %s4154 = smul.addr %s4150, 128
          %s4155 = scalar_lea.hbm %s9, %s4154
          %s4156 = sshll.u32 %s4146, 4
          %s4157 = int_to_ptr.vmem [resolvable:$true] %s4156
          %4162 = dma.vmem_to_hbm [thread:$0]  %s4157, 4096, %s4155, %s4143, 128, 128, 8
        $region64: #{tpu_custom_call.1} parent=55 // pred_fallthru
          _
      $region56: #{tpu_custom_call.1} parent=5 // pred_fallthru
        _
      %p4163 = scmp.le.s32.totalorder 2, %s19
      // Predicated region
      $region65: #{tpu_custom_call.1} parent=5 // pred_check
        %p4164 = pneg %p4163
      $region66: #{tpu_custom_call.1} parent=5 // pred_check_branch
        %4166 = sbr.rel (%p4164) target = $region68
      $region67: #{tpu_custom_call.1} parent=5 // pred_region
        %s4167 = ssub.s32 %s19, 2
        // Predicated region
        $region69: #{tpu_custom_call.1} parent=67 // pred_check
          %p4168 = pneg %p242
        $region70: #{tpu_custom_call.1} parent=67 // pred_check_branch
          %4170 = sbr.rel (%p4168) target = $region72
        $region71: #{tpu_custom_call.1} parent=67 // pred_region
          %s4171 = sand.u32 %s227, 1
          %s4172 = scalar_lea.sflag [#allocation4], %s4171
          %s4173 = sand.u32 %s227, 1
          %s4174 = smul.addr %s4173, 256
          %s4175 = scalar_lea.vmem [#allocation5], %s4174
          %4176 = dma.done %s4172, 4096
        $region72: #{tpu_custom_call.1} parent=67 // pred_fallthru
          _
      $region68: #{tpu_custom_call.1} parent=5 // pred_fallthru
        _
    $region6: #{tpu_custom_call.1} parent=1 // loop_footer
      %s23 = sadd.s32 1, %s19
    $region7: #{tpu_custom_call.1} parent=1 // loop_footer_branch
      %18 = sbr.rel target = $region3
    $region8: #{tpu_custom_call.1} parent=1 // loop_exit
      _
    %4177 = vsyncpa [#allocation3], 1
    %s4178 = scalar_lea.sflag [#allocation3], 1
    %4179 = vsyncpa %s4178, 1
    %4180 = vsyncpa [#allocation4], 1
    %s4181 = scalar_lea.sflag [#allocation4], 1
    %4182 = vsyncpa %s4181, 1

</llo_original>
